<compile_context>
chip_gen: v7x
topology: tpu7x:2x2x1
jax: 0.10.0
libtpu: 0.0.40
codegen_flags: <defaults>
</compile_context>

<pallas_src>
import math
import functools

import jax
import jax.numpy as jnp
from jax.experimental import pallas as pl
from jax.experimental.pallas import tpu as pltpu


def _encoder_node_kernel(keep_ref, x_ref, g_ref, be_ref, w1_ref, b1_ref,
                         cwa_ref, cwg_ref, cba_ref, cbg_ref, w2_ref, b2_ref,
                         xout_ref, yout_ref, hpad_ref, xn_ref,
                         *, num_layers, kernel_size, pad_l, pad_r):
    x = x_ref[...]                              # (Bb, T, E) f32 hidden states
    Bb, T, E = x.shape
    C = w1_ref.shape[1]
    K = kernel_size

    keep = keep_ref[...]                        # (Bb, T, 1) bf16, 1.0 where token != 0

    # ---- LayerNorm(embed_dim), eps = 1e-5 (PyTorch default), f32 math ----
    mu = jnp.mean(x, axis=-1, keepdims=True)
    xc = x - mu
    var = jnp.mean(xc * xc, axis=-1, keepdims=True)
    xn = xc * jax.lax.rsqrt(var + 1e-5) * g_ref[...] + be_ref[...]
    # F.dropout(training=False) -> identity

    # bf16 copy of the LN output: fc1 operand + residual stash.  Storing it to
    # a bf16 scratch ends the f32 live range here (halves the footprint of
    # `input_embedding` held across the whole conv stack).
    xn_bf = xn.astype(jnp.bfloat16)
    xn_ref[...] = xn_bf

    # ---- fc1: one (Bb*T, E) @ (E, C) bf16 matmul, f32 MXU accumulation ----
    h = jnp.dot(xn_bf.reshape(Bb * T, E), w1_ref[...],
                preferred_element_type=jnp.float32) + b1_ref[...]
    h = h.astype(jnp.bfloat16).reshape(Bb, T, C)

    # Hoisted keep-mask broadcast: JAX does not CSE broadcast_in_dim, so build
    # the (Bb, T, C) bf16 mask once and reuse it for every layer's masked_fill.
    keep_c = jnp.broadcast_to(keep, (Bb, T, C))

    # Zero the conv halo rows once; they stay zero across the layer loop
    # (each layer only rewrites the interior [pad_l : pad_l + T) rows).
    if pad_l > 0:
        hpad_ref[:, :pad_l, :] = jnp.zeros((Bb, pad_l, C), jnp.bfloat16)
    if pad_r > 0:
        hpad_ref[:, pad_l + T:, :] = jnp.zeros((Bb, pad_r, C), jnp.bfloat16)

    # ---- conv stack (ConvTBC + GLU) ----
    # K lane-aligned accumulating dots per GLU half (no im2col concatenate:
    # with C not a multiple of 128 the concat would place every slice at a
    # misaligned lane offset and force whole-slab relayouts every layer).
    for l in range(num_layers):
        # masked_fill(pad, 0), staged into the zero-haloed bf16 scratch
        hpad_ref[:, pad_l:pad_l + T, :] = h * keep_c
        wa = cwa_ref[l]                          # (K, C, C) bf16, "a" half
        wg = cwg_ref[l]                          # (K, C, C) bf16, gate half
        a = cba_ref[l]                           # (1, C) f32 bias -> broadcasts
        g = cbg_ref[l]
        for k in range(K):
            # out[t] uses in[t + k - pad_l] == hpad[t + k]
            win = hpad_ref[:, k:k + T, :].reshape(Bb * T, C)   # bf16, lane offset 0
            a = a + jnp.dot(win, wa[k], preferred_element_type=jnp.float32)
            g = g + jnp.dot(win, wg[k], preferred_element_type=jnp.float32)
        # F.glu(dim=channels): bf16 sigmoid (EUP) + bf16 multiply; h stays
        # bf16 so it is already the next layer's matmul operand.
        h = (a.astype(jnp.bfloat16)
             * jax.nn.sigmoid(g.astype(jnp.bfloat16))).reshape(Bb, T, C)

    # ---- fc2: one (Bb*T, C) @ (C, E) bf16 matmul, masked_fill after fc2 ----
    out = jnp.dot(h.reshape(Bb * T, C), w2_ref[...],
                  preferred_element_type=jnp.float32) + b2_ref[...]
    out = out.reshape(Bb, T, E) * keep           # bf16 mask promotes to f32
    y = (out + xn_ref[...]) * jnp.float32(math.sqrt(0.5))

    xout_ref[...] = out.astype(xout_ref.dtype)
    yout_ref[...] = y.astype(yout_ref.dtype)


def _pick_block_batch(B, max_block=8):
    """Batch rows per grid step.

    Guarantees nb = B // Bblk >= 2 whenever B >= 2 (so the per-step input DMA
    and output writebacks are software-pipelined and the `parallel` batch axis
    load-balances across v7x's two TensorCores), preferring nb == 4.  Bblk is a
    leading, untiled dim, so any divisor of B is legal; it is capped at
    `max_block` to bound per-step VMEM (grow it / add T tiling to hit an MXU M
    dim of Bblk*T >= 512 at production shapes).
    """
    if B <= 1:
        return 1
    for nsteps in (4, 2):                       # even step counts for 2-TC balance
        if B % nsteps == 0 and B // nsteps <= max_block:
            return B // nsteps
    cap = min(max_block, B // 2)                # still force >= 2 grid steps
    for d in range(max(cap, 1), 0, -1):
        if B % d == 0:
            return d
    return 1


def _vmem_limit_bytes():
    """Generation-dependent VMEM limit: ~3/4 of physical capacity, <= 96 MiB."""
    try:
        cap = int(pltpu.get_tpu_info().vmem_capacity_bytes)
    except Exception:
        cap = 64 * 1024 * 1024                  # conservative (v7x-sized) default
    return max(32 * 1024 * 1024, min(cap * 3 // 4, 96 * 1024 * 1024))


def make_params(key, *, embed_dim, conv_channels, kernel_size, num_layers,
                dropout=0.1):
    E, C, K, L = embed_dim, conv_channels, kernel_size, num_layers
    k1, k2, k3 = jax.random.split(key, 3)
    gamma = jnp.ones((1, E), jnp.float32)
    beta = jnp.zeros((1, E), jnp.float32)
    # linear(embed_dim, in_channels, dropout): std = sqrt((1-dropout)/in_features)
    w1 = math.sqrt((1.0 - dropout) / E) * jax.random.normal(k1, (E, C), jnp.float32)
    b1 = jnp.zeros((1, C), jnp.float32)
    # convtbc: std = sqrt(4*(1-dropout)/(K*in_channels)), weight (K, Cin, 2*Cout)
    stdc = math.sqrt(4.0 * (1.0 - dropout) / (K * C))
    cw = stdc * jax.random.normal(k2, (L, K, C, 2 * C), jnp.float32)
    cb = jnp.zeros((L, 1, 2 * C), jnp.float32)
    # linear(in_channels, embed_dim): std = sqrt(1/in_features)
    w2 = math.sqrt(1.0 / C) * jax.random.normal(k3, (C, E), jnp.float32)
    b2 = jnp.zeros((1, E), jnp.float32)
    return dict(gamma=gamma, beta=beta, w1=w1, b1=b1, cw=cw, cb=cb, w2=w2, b2=b2)


def encoder_node_forward(x_embed, src_tokens, params, *, kernel_size, num_layers,
                         out_dtype=jnp.float32):
    B, T, E = x_embed.shape
    C = params['w1'].shape[1]
    K = kernel_size
    L = num_layers
    if K % 2 == 1:
        pad_l = pad_r = K // 2
    else:
        pad_l, pad_r = (K - 1) // 2, K // 2

    # Pad T to a multiple of 8 so (Bb, T, ·) -> (Bb*T, ·) reshapes in the
    # kernel are pure relabels.  Padded rows carry token id 0 (masked to zero
    # before every conv, exactly like the zero halo) and are sliced off below.
    Tp = -(-T // 8) * 8
    if Tp != T:
        x_in = jnp.pad(x_embed, ((0, 0), (0, Tp - T), (0, 0)))
        tok_in = jnp.pad(src_tokens, ((0, 0), (0, Tp - T)))
    else:
        x_in, tok_in = x_embed, src_tokens

    Bblk = _pick_block_batch(B)
    nb = B // Bblk

    # keep mask (1.0 where token != 0); bf16 halves its HBM/VMEM footprint and
    # its 0/1 values are exact.  (Bblk, Tp, 1) avoids an in-kernel
    # lane->sublane relayout of the token ids.
    keep = (tok_in != 0).astype(jnp.bfloat16).reshape(B, Tp, 1)

    # bf16 matmul operands (weights cast once).  GLU split is done on the
    # weight side so the kernel never slices the accumulator at a non-aligned
    # lane boundary; weights stay (L, K, C, C) so every conv dot is a
    # lane-offset-0 (Bb*T, C) @ (C, C) contraction.
    w1 = params['w1'].astype(jnp.bfloat16)                      # (E, C)
    w2 = params['w2'].astype(jnp.bfloat16)                      # (C, E)
    cw = params['cw']                                           # (L, K, C, 2C)
    cwa = cw[..., :C].astype(jnp.bfloat16)                      # (L, K, C, C) "a"
    cwg = cw[..., C:].astype(jnp.bfloat16)                      # (L, K, C, C) gate
    cba = params['cb'][..., :C]                                 # (L, 1, C) f32
    cbg = params['cb'][..., C:]                                 # (L, 1, C) f32

    kernel = functools.partial(_encoder_node_kernel, num_layers=L,
                               kernel_size=K, pad_l=pad_l, pad_r=pad_r)

    out_itemsize = jnp.dtype(out_dtype).itemsize
    flops = int(2 * B * Tp * (E * C + L * K * C * (2 * C) + C * E))
    transcendentals = int(B * Tp * (L * C + 1))
    bytes_accessed = int(
        4 * B * Tp * E                                   # x in (f32)
        + 2 * B * Tp                                     # keep mask (bf16)
        + 2 * (E * C + C * E + L * K * C * 2 * C)        # bf16 weights
        + 4 * (2 * E + C + E + L * 2 * C)                # LN params + f32 biases
        + 2 * out_itemsize * B * Tp * E)                 # two outputs

    def build_call(weight_bufs):
        def const(arr):
            """Constant-index (resident) parameter block; single-buffered when
            pl.Buffered(1) is available (index_map never changes, so the second
            revolving buffer is pure VMEM waste)."""
            n = arr.ndim
            if weight_bufs is None:
                return pl.BlockSpec(arr.shape, lambda b, _n=n: (0,) * _n)
            return pl.BlockSpec(arr.shape, lambda b, _n=n: (0,) * _n,
                                pipeline_mode=pl.Buffered(weight_bufs))

        return pl.pallas_call(
            kernel,
            grid=(nb,),
            in_specs=[
                pl.BlockSpec((Bblk, Tp, 1), lambda b: (b, 0, 0)),   # keep mask
                pl.BlockSpec((Bblk, Tp, E), lambda b: (b, 0, 0)),   # x_embed
                const(params['gamma']), const(params['beta']),      # LN gamma/beta
                const(w1), const(params['b1']),                     # fc1
                const(cwa), const(cwg),                             # conv weights
                const(cba), const(cbg),                             # conv biases
                const(w2), const(params['b2']),                     # fc2
            ],
            out_specs=[
                pl.BlockSpec((Bblk, Tp, E), lambda b: (b, 0, 0)),
                pl.BlockSpec((Bblk, Tp, E), lambda b: (b, 0, 0)),
            ],
            out_shape=[
                jax.ShapeDtypeStruct((B, Tp, E), out_dtype),
                jax.ShapeDtypeStruct((B, Tp, E), out_dtype),
            ],
            scratch_shapes=[
                # zero-haloed bf16-staged conv input (T + K - 1 rows)
                pltpu.VMEM((Bblk, Tp + pad_l + pad_r, C), jnp.bfloat16),
                # bf16 stash of the LayerNorm output (fc1 operand + residual)
                pltpu.VMEM((Bblk, Tp, E), jnp.bfloat16),
            ],
            compiler_params=pltpu.CompilerParams(
                dimension_semantics=("parallel",),   # batch axis -> 2-TC sharding
                vmem_limit_bytes=_vmem_limit_bytes()),
            cost_estimate=pl.CostEstimate(flops=flops,
                                          transcendentals=transcendentals,
                                          bytes_accessed=bytes_accessed),
        )

    args = (keep, x_in, params['gamma'], params['beta'], w1, params['b1'],
            cwa, cwg, cba, cbg, w2, params['b2'])
    try:
        x_out, y_out = build_call(1)(*args)
    except Exception:
        # TODO(synk): pl.Buffered(1) unsupported on this JAX version; fall back
        # to default double-buffered (still resident) parameter blocks.
        x_out, y_out = build_call(None)(*args)

    if Tp != T:
        x_out = x_out[:, :T, :]
        y_out = y_out[:, :T, :]

    enc_pad_mask = (src_tokens == 0)                     # (B, T), like mask.t()
    return {'src_tokens': src_tokens,
            'encoder_out': (x_out, y_out),
            'encoder_padding_mask': enc_pad_mask}


def reference_forward(x_embed, src_tokens, p, *, kernel_size, num_layers):
    """Pure-JAX f32 reference for numerical verification."""
    hp = jax.lax.Precision.HIGHEST
    mu = jnp.mean(x_embed, -1, keepdims=True)
    xc = x_embed - mu
    var = jnp.mean(xc * xc, -1, keepdims=True)
    xn = xc / jnp.sqrt(var + 1e-5) * p['gamma'][0] + p['beta'][0]
    keep = (src_tokens != 0).astype(jnp.float32)[..., None]
    h = jnp.einsum('bte,ec->btc', xn, p['w1'], precision=hp) + p['b1'][0]
    K = kernel_size
    if K % 2 == 1:
        pad_l = pad_r = K // 2
    else:
        pad_l, pad_r = (K - 1) // 2, K // 2
    T = x_embed.shape[1]
    C = h.shape[-1]
    for l in range(num_layers):
        h = h * keep
        hpad = jnp.pad(h, ((0, 0), (pad_l, pad_r), (0, 0)))
        acc = jnp.zeros((h.shape[0], T, 2 * C), jnp.float32) + p['cb'][l]
        for k in range(K):
            acc = acc + jnp.einsum('btc,co->bto', hpad[:, k:k + T, :],
                                   p['cw'][l, k], precision=hp)
        a, g = acc[..., :C], acc[..., C:]
        h = a * jax.nn.sigmoid(g)
    out = jnp.einsum('btc,ce->bte', h, p['w2'], precision=hp) + p['b2'][0]
    out = out * keep
    y = (out + xn) * math.sqrt(0.5)
    return out, y


if __name__ == "__main__":
    B, T, E = 2, 8, 32          # batch, seq, embed_dim
    C, K, L = 16, 3, 2          # convolutions = ((16, 3),) * 2
    key = jax.random.PRNGKey(0)
    kx, kt, kp = jax.random.split(key, 3)

    x_embed = jax.random.normal(kx, (B, T, E), jnp.float32)   # encoder_last_hidden_state
    src_tokens = jax.random.randint(kt, (B, T), 1, 100, jnp.int32)
    src_tokens = src_tokens.at[:, -2:].set(0)                 # trailing padding tokens

    params = make_params(kp, embed_dim=E, conv_channels=C,
                         kernel_size=K, num_layers=L, dropout=0.1)

    result = encoder_node_forward(x_embed, src_tokens, params,
                                  kernel_size=K, num_layers=L)
    x_out, y_out = result['encoder_out']
    jax.block_until_ready((x_out, y_out))

    x_ref, y_ref = reference_forward(x_embed, src_tokens, params,
                                     kernel_size=K, num_layers=L)
    # bf16 matmul/GLU operands with f32 accumulation -> loosened tolerance
    assert jnp.allclose(x_out.astype(jnp.float32), x_ref, rtol=3e-2, atol=3e-2), "x mismatch"
    assert jnp.allclose(y_out.astype(jnp.float32), y_ref, rtol=3e-2, atol=3e-2), "y mismatch"

    print("KERNEL_OK")
</pallas_src>

<mosaic_0001>
module attributes {stable_mosaic.version = 11 : i64} {
  func.func @_encoder_node_kernel(%arg0: i32, %arg1: memref<1x8x1xbf16, #tpu.memory_space<vmem>>, %arg2: memref<1x8x32xf32, #tpu.memory_space<vmem>>, %arg3: memref<1x32xf32, #tpu.memory_space<vmem>>, %arg4: memref<1x32xf32, #tpu.memory_space<vmem>>, %arg5: memref<32x16xbf16, #tpu.memory_space<vmem>>, %arg6: memref<1x16xf32, #tpu.memory_space<vmem>>, %arg7: memref<2x3x16x16xbf16, #tpu.memory_space<vmem>>, %arg8: memref<2x3x16x16xbf16, #tpu.memory_space<vmem>>, %arg9: memref<2x1x16xf32, #tpu.memory_space<vmem>>, %arg10: memref<2x1x16xf32, #tpu.memory_space<vmem>>, %arg11: memref<16x32xbf16, #tpu.memory_space<vmem>>, %arg12: memref<1x32xf32, #tpu.memory_space<vmem>>, %arg13: memref<1x8x32xf32, #tpu.memory_space<vmem>>, %arg14: memref<1x8x32xf32, #tpu.memory_space<vmem>>, %arg15: memref<1x10x16xbf16, #tpu.memory_space<vmem>>, %arg16: memref<1x8x32xbf16, #tpu.memory_space<vmem>>) attributes {dimension_semantics = [#tpu.dimension_semantics<parallel>], iteration_bounds = array<i64: 2>, scalar_prefetch = 0 : i64, scratch_operands = 2 : i64, tpu.core_type = #tpu.core_type<tc>, window_params = [{transform_indices = @transform_0, window_bounds = array<i64: 1, 8, 1>}, {transform_indices = @transform_1, window_bounds = array<i64: 1, 8, 32>}, {pipeline_mode = #tpu.pipeline_mode<synchronous>, transform_indices = @transform_2, window_bounds = array<i64: 1, 32>}, {pipeline_mode = #tpu.pipeline_mode<synchronous>, transform_indices = @transform_3, window_bounds = array<i64: 1, 32>}, {pipeline_mode = #tpu.pipeline_mode<synchronous>, transform_indices = @transform_4, window_bounds = array<i64: 32, 16>}, {pipeline_mode = #tpu.pipeline_mode<synchronous>, transform_indices = @transform_5, window_bounds = array<i64: 1, 16>}, {pipeline_mode = #tpu.pipeline_mode<synchronous>, transform_indices = @transform_6, window_bounds = array<i64: 2, 3, 16, 16>}, {pipeline_mode = #tpu.pipeline_mode<synchronous>, transform_indices = @transform_7, window_bounds = array<i64: 2, 3, 16, 16>}, {pipeline_mode = #tpu.pipeline_mode<synchronous>, transform_indices = @transform_8, window_bounds = array<i64: 2, 1, 16>}, {pipeline_mode = #tpu.pipeline_mode<synchronous>, transform_indices = @transform_9, window_bounds = array<i64: 2, 1, 16>}, {pipeline_mode = #tpu.pipeline_mode<synchronous>, transform_indices = @transform_10, window_bounds = array<i64: 16, 32>}, {pipeline_mode = #tpu.pipeline_mode<synchronous>, transform_indices = @transform_11, window_bounds = array<i64: 1, 32>}, {transform_indices = @transform_12, window_bounds = array<i64: 1, 8, 32>}, {transform_indices = @transform_13, window_bounds = array<i64: 1, 8, 32>}]} {
    %c0 = arith.constant 0 : index
    %c0_0 = arith.constant 0 : index
    %c0_1 = arith.constant 0 : index
    %0 = vector.load %arg2[%c0, %c0_0, %c0_1] : memref<1x8x32xf32, #tpu.memory_space<vmem>>, vector<1x8x32xf32>
    %c0_2 = arith.constant 0 : index
    %c0_3 = arith.constant 0 : index
    %c0_4 = arith.constant 0 : index
    %1 = vector.load %arg1[%c0_2, %c0_3, %c0_4] : memref<1x8x1xbf16, #tpu.memory_space<vmem>>, vector<1x8x1xbf16>
    %cst = arith.constant dense<0.000000e+00> : vector<1x8xf32>
    %2 = vector.multi_reduction <add>, %0, %cst [2] : vector<1x8x32xf32> to vector<1x8xf32>
    %3 = vector.shape_cast %2 : vector<1x8xf32> to vector<1x8x1xf32>
    %cst_5 = arith.constant 3.200000e+01 : f32
    %4 = vector.broadcast %cst_5 : f32 to vector<1x8x1xf32>
    %5 = arith.divf %3, %4 : vector<1x8x1xf32>
    %6 = vector.broadcast %5 : vector<1x8x1xf32> to vector<1x8x32xf32>
    %7 = arith.subf %0, %6 : vector<1x8x32xf32>
    %8 = arith.mulf %7, %7 : vector<1x8x32xf32>
    %cst_6 = arith.constant dense<0.000000e+00> : vector<1x8xf32>
    %9 = vector.multi_reduction <add>, %8, %cst_6 [2] : vector<1x8x32xf32> to vector<1x8xf32>
    %10 = vector.shape_cast %9 : vector<1x8xf32> to vector<1x8x1xf32>
    %cst_7 = arith.constant 3.200000e+01 : f32
    %11 = vector.broadcast %cst_7 : f32 to vector<1x8x1xf32>
    %12 = arith.divf %10, %11 : vector<1x8x1xf32>
    %cst_8 = arith.constant 9.99999974E-6 : f32
    %13 = vector.broadcast %cst_8 : f32 to vector<1x8x1xf32>
    %14 = arith.addf %12, %13 : vector<1x8x1xf32>
    %15 = math.rsqrt %14 : vector<1x8x1xf32>
    %16 = vector.broadcast %15 : vector<1x8x1xf32> to vector<1x8x32xf32>
    %17 = arith.mulf %7, %16 : vector<1x8x32xf32>
    %c0_9 = arith.constant 0 : index
    %c0_10 = arith.constant 0 : index
    %18 = vector.load %arg3[%c0_9, %c0_10] : memref<1x32xf32, #tpu.memory_space<vmem>>, vector<1x32xf32>
    %19 = vector.shape_cast %18 : vector<1x32xf32> to vector<1x1x32xf32>
    %20 = vector.broadcast %19 : vector<1x1x32xf32> to vector<1x8x32xf32>
    %21 = arith.mulf %17, %20 : vector<1x8x32xf32>
    %c0_11 = arith.constant 0 : index
    %c0_12 = arith.constant 0 : index
    %22 = vector.load %arg4[%c0_11, %c0_12] : memref<1x32xf32, #tpu.memory_space<vmem>>, vector<1x32xf32>
    %23 = vector.shape_cast %22 : vector<1x32xf32> to vector<1x1x32xf32>
    %24 = vector.broadcast %23 : vector<1x1x32xf32> to vector<1x8x32xf32>
    %25 = arith.addf %21, %24 : vector<1x8x32xf32>
    %26 = arith.truncf %25 : vector<1x8x32xf32> to vector<1x8x32xbf16>
    %c0_13 = arith.constant 0 : index
    %c0_14 = arith.constant 0 : index
    %c0_15 = arith.constant 0 : index
    %27 = vector.load %arg16[%c0_13, %c0_14, %c0_15] : memref<1x8x32xbf16, #tpu.memory_space<vmem>>, vector<1x8x32xbf16>
    tpu.vector_store %arg16[%c0_13, %c0_14, %c0_15], %26 {strides = array<i32>} : memref<1x8x32xbf16, #tpu.memory_space<vmem>>, vector<1x8x32xbf16>,
    %28 = vector.shape_cast %26 : vector<1x8x32xbf16> to vector<8x32xbf16>
    %c0_16 = arith.constant 0 : index
    %c0_17 = arith.constant 0 : index
    %29 = vector.load %arg5[%c0_16, %c0_17] : memref<32x16xbf16, #tpu.memory_space<vmem>>, vector<32x16xbf16>
    %cst_18 = arith.constant dense<0.000000e+00> : vector<8x16xf32>
    %30 = tpu.matmul %28, %29, %cst_18 {dimension_numbers = #tpu.dot_dimension_numbers<[1], [0], [0], [1], [0, 0, 1, 1], [], []>} : vector<8x32xbf16>, vector<32x16xbf16>, vector<8x16xf32> -> vector<8x16xf32>
    %c0_19 = arith.constant 0 : index
    %c0_20 = arith.constant 0 : index
    %31 = vector.load %arg6[%c0_19, %c0_20] : memref<1x16xf32, #tpu.memory_space<vmem>>, vector<1x16xf32>
    %32 = vector.broadcast %31 : vector<1x16xf32> to vector<8x16xf32>
    %33 = arith.addf %30, %32 : vector<8x16xf32>
    %34 = arith.truncf %33 : vector<8x16xf32> to vector<8x16xbf16>
    %35 = vector.shape_cast %34 : vector<8x16xbf16> to vector<1x8x16xbf16>
    %36 = vector.shape_cast %1 : vector<1x8x1xbf16> to vector<1x8x1xbf16>
    %37 = vector.broadcast %36 : vector<1x8x1xbf16> to vector<1x8x16xbf16>
    %cst_21 = arith.constant 0.000000e+00 : bf16
    %38 = vector.broadcast %cst_21 : bf16 to vector<1x1x16xbf16>
    %c0_22 = arith.constant 0 : index
    %c0_23 = arith.constant 0 : index
    %c0_24 = arith.constant 0 : index
    %39 = vector.load %arg15[%c0_22, %c0_23, %c0_24] : memref<1x10x16xbf16, #tpu.memory_space<vmem>>, vector<1x1x16xbf16>
    tpu.vector_store %arg15[%c0_22, %c0_23, %c0_24], %38 {strides = array<i32>} : memref<1x10x16xbf16, #tpu.memory_space<vmem>>, vector<1x1x16xbf16>,
    %cst_25 = arith.constant 0.000000e+00 : bf16
    %40 = vector.broadcast %cst_25 : bf16 to vector<1x1x16xbf16>
    %c0_26 = arith.constant 0 : index
    %c9 = arith.constant 9 : index
    %c0_27 = arith.constant 0 : index
    %41 = vector.load %arg15[%c0_26, %c9, %c0_27] : memref<1x10x16xbf16, #tpu.memory_space<vmem>>, vector<1x1x16xbf16>
    tpu.vector_store %arg15[%c0_26, %c9, %c0_27], %40 {strides = array<i32>} : memref<1x10x16xbf16, #tpu.memory_space<vmem>>, vector<1x1x16xbf16>,
    %42 = arith.mulf %35, %37 : vector<1x8x16xbf16>
    %c0_28 = arith.constant 0 : index
    %c1 = arith.constant 1 : index
    %c0_29 = arith.constant 0 : index
    %43 = vector.load %arg15[%c0_28, %c1, %c0_29] : memref<1x10x16xbf16, #tpu.memory_space<vmem>>, vector<1x8x16xbf16>
    tpu.vector_store %arg15[%c0_28, %c1, %c0_29], %42 {strides = array<i32>} : memref<1x10x16xbf16, #tpu.memory_space<vmem>>, vector<1x8x16xbf16>,
    %c0_30 = arith.constant 0 : index
    %c0_31 = arith.constant 0 : index
    %c0_32 = arith.constant 0 : index
    %c0_33 = arith.constant 0 : index
    %44 = vector.load %arg7[%c0_30, %c0_31, %c0_32, %c0_33] : memref<2x3x16x16xbf16, #tpu.memory_space<vmem>>, vector<1x3x16x16xbf16>
    %45 = vector.shape_cast %44 : vector<1x3x16x16xbf16> to vector<3x16x16xbf16>
    %c0_34 = arith.constant 0 : index
    %c0_35 = arith.constant 0 : index
    %c0_36 = arith.constant 0 : index
    %c0_37 = arith.constant 0 : index
    %46 = vector.load %arg8[%c0_34, %c0_35, %c0_36, %c0_37] : memref<2x3x16x16xbf16, #tpu.memory_space<vmem>>, vector<1x3x16x16xbf16>
    %47 = vector.shape_cast %46 : vector<1x3x16x16xbf16> to vector<3x16x16xbf16>
    %c0_38 = arith.constant 0 : index
    %c0_39 = arith.constant 0 : index
    %c0_40 = arith.constant 0 : index
    %48 = vector.load %arg9[%c0_38, %c0_39, %c0_40] : memref<2x1x16xf32, #tpu.memory_space<vmem>>, vector<1x1x16xf32>
    %49 = vector.shape_cast %48 : vector<1x1x16xf32> to vector<1x16xf32>
    %c0_41 = arith.constant 0 : index
    %c0_42 = arith.constant 0 : index
    %c0_43 = arith.constant 0 : index
    %50 = vector.load %arg10[%c0_41, %c0_42, %c0_43] : memref<2x1x16xf32, #tpu.memory_space<vmem>>, vector<1x1x16xf32>
    %51 = vector.shape_cast %50 : vector<1x1x16xf32> to vector<1x16xf32>
    %c0_44 = arith.constant 0 : index
    %c0_45 = arith.constant 0 : index
    %c0_46 = arith.constant 0 : index
    %52 = vector.load %arg15[%c0_44, %c0_45, %c0_46] : memref<1x10x16xbf16, #tpu.memory_space<vmem>>, vector<1x8x16xbf16>
    %53 = vector.shape_cast %52 : vector<1x8x16xbf16> to vector<8x16xbf16>
    %54 = vector.extract_strided_slice %45 {offsets = [0, 0, 0], sizes = [1, 16, 16], strides = [1, 1, 1]} : vector<3x16x16xbf16> to vector<1x16x16xbf16>
    %55 = vector.shape_cast %54 : vector<1x16x16xbf16> to vector<16x16xbf16>
    %cst_47 = arith.constant dense<0.000000e+00> : vector<8x16xf32>
    %56 = tpu.matmul %53, %55, %cst_47 {dimension_numbers = #tpu.dot_dimension_numbers<[1], [0], [0], [1], [0, 0, 1, 1], [], []>} : vector<8x16xbf16>, vector<16x16xbf16>, vector<8x16xf32> -> vector<8x16xf32>
    %57 = vector.broadcast %49 : vector<1x16xf32> to vector<8x16xf32>
    %58 = arith.addf %57, %56 : vector<8x16xf32>
    %59 = vector.extract_strided_slice %47 {offsets = [0, 0, 0], sizes = [1, 16, 16], strides = [1, 1, 1]} : vector<3x16x16xbf16> to vector<1x16x16xbf16>
    %60 = vector.shape_cast %59 : vector<1x16x16xbf16> to vector<16x16xbf16>
    %cst_48 = arith.constant dense<0.000000e+00> : vector<8x16xf32>
    %61 = tpu.matmul %53, %60, %cst_48 {dimension_numbers = #tpu.dot_dimension_numbers<[1], [0], [0], [1], [0, 0, 1, 1], [], []>} : vector<8x16xbf16>, vector<16x16xbf16>, vector<8x16xf32> -> vector<8x16xf32>
    %62 = vector.broadcast %51 : vector<1x16xf32> to vector<8x16xf32>
    %63 = arith.addf %62, %61 : vector<8x16xf32>
    %c0_49 = arith.constant 0 : index
    %c1_50 = arith.constant 1 : index
    %c0_51 = arith.constant 0 : index
    %64 = vector.load %arg15[%c0_49, %c1_50, %c0_51] : memref<1x10x16xbf16, #tpu.memory_space<vmem>>, vector<1x8x16xbf16>
    %65 = vector.shape_cast %64 : vector<1x8x16xbf16> to vector<8x16xbf16>
    %66 = vector.extract_strided_slice %45 {offsets = [1, 0, 0], sizes = [1, 16, 16], strides = [1, 1, 1]} : vector<3x16x16xbf16> to vector<1x16x16xbf16>
    %67 = vector.shape_cast %66 : vector<1x16x16xbf16> to vector<16x16xbf16>
    %cst_52 = arith.constant dense<0.000000e+00> : vector<8x16xf32>
    %68 = tpu.matmul %65, %67, %cst_52 {dimension_numbers = #tpu.dot_dimension_numbers<[1], [0], [0], [1], [0, 0, 1, 1], [], []>} : vector<8x16xbf16>, vector<16x16xbf16>, vector<8x16xf32> -> vector<8x16xf32>
    %69 = arith.addf %58, %68 : vector<8x16xf32>
    %70 = vector.extract_strided_slice %47 {offsets = [1, 0, 0], sizes = [1, 16, 16], strides = [1, 1, 1]} : vector<3x16x16xbf16> to vector<1x16x16xbf16>
    %71 = vector.shape_cast %70 : vector<1x16x16xbf16> to vector<16x16xbf16>
    %cst_53 = arith.constant dense<0.000000e+00> : vector<8x16xf32>
    %72 = tpu.matmul %65, %71, %cst_53 {dimension_numbers = #tpu.dot_dimension_numbers<[1], [0], [0], [1], [0, 0, 1, 1], [], []>} : vector<8x16xbf16>, vector<16x16xbf16>, vector<8x16xf32> -> vector<8x16xf32>
    %73 = arith.addf %63, %72 : vector<8x16xf32>
    %c0_54 = arith.constant 0 : index
    %c2 = arith.constant 2 : index
    %c0_55 = arith.constant 0 : index
    %74 = vector.load %arg15[%c0_54, %c2, %c0_55] : memref<1x10x16xbf16, #tpu.memory_space<vmem>>, vector<1x8x16xbf16>
    %75 = vector.shape_cast %74 : vector<1x8x16xbf16> to vector<8x16xbf16>
    %76 = vector.extract_strided_slice %45 {offsets = [2, 0, 0], sizes = [1, 16, 16], strides = [1, 1, 1]} : vector<3x16x16xbf16> to vector<1x16x16xbf16>
    %77 = vector.shape_cast %76 : vector<1x16x16xbf16> to vector<16x16xbf16>
    %cst_56 = arith.constant dense<0.000000e+00> : vector<8x16xf32>
    %78 = tpu.matmul %75, %77, %cst_56 {dimension_numbers = #tpu.dot_dimension_numbers<[1], [0], [0], [1], [0, 0, 1, 1], [], []>} : vector<8x16xbf16>, vector<16x16xbf16>, vector<8x16xf32> -> vector<8x16xf32>
    %79 = arith.addf %69, %78 : vector<8x16xf32>
    %80 = vector.extract_strided_slice %47 {offsets = [2, 0, 0], sizes = [1, 16, 16], strides = [1, 1, 1]} : vector<3x16x16xbf16> to vector<1x16x16xbf16>
    %81 = vector.shape_cast %80 : vector<1x16x16xbf16> to vector<16x16xbf16>
    %cst_57 = arith.constant dense<0.000000e+00> : vector<8x16xf32>
    %82 = tpu.matmul %75, %81, %cst_57 {dimension_numbers = #tpu.dot_dimension_numbers<[1], [0], [0], [1], [0, 0, 1, 1], [], []>} : vector<8x16xbf16>, vector<16x16xbf16>, vector<8x16xf32> -> vector<8x16xf32>
    %83 = arith.addf %73, %82 : vector<8x16xf32>
    %84 = arith.truncf %79 : vector<8x16xf32> to vector<8x16xbf16>
    %85 = arith.truncf %83 : vector<8x16xf32> to vector<8x16xbf16>
    %86 = arith.negf %85 : vector<8x16xbf16>
    %87 = math.exp %86 : vector<8x16xbf16>
    %cst_58 = arith.constant 1.000000e+00 : bf16
    %88 = vector.broadcast %cst_58 : bf16 to vector<8x16xbf16>
    %89 = arith.addf %88, %87 : vector<8x16xbf16>
    %90 = arith.divf %88, %89 : vector<8x16xbf16>
    %91 = arith.mulf %84, %90 : vector<8x16xbf16>
    %92 = vector.shape_cast %91 : vector<8x16xbf16> to vector<1x8x16xbf16>
    %93 = arith.mulf %92, %37 : vector<1x8x16xbf16>
    %c0_59 = arith.constant 0 : index
    %c1_60 = arith.constant 1 : index
    %c0_61 = arith.constant 0 : index
    %94 = vector.load %arg15[%c0_59, %c1_60, %c0_61] : memref<1x10x16xbf16, #tpu.memory_space<vmem>>, vector<1x8x16xbf16>
    tpu.vector_store %arg15[%c0_59, %c1_60, %c0_61], %93 {strides = array<i32>} : memref<1x10x16xbf16, #tpu.memory_space<vmem>>, vector<1x8x16xbf16>,
    %c1_62 = arith.constant 1 : index
    %c0_63 = arith.constant 0 : index
    %c0_64 = arith.constant 0 : index
    %c0_65 = arith.constant 0 : index
    %95 = vector.load %arg7[%c1_62, %c0_63, %c0_64, %c0_65] : memref<2x3x16x16xbf16, #tpu.memory_space<vmem>>, vector<1x3x16x16xbf16>
    %96 = vector.shape_cast %95 : vector<1x3x16x16xbf16> to vector<3x16x16xbf16>
    %c1_66 = arith.constant 1 : index
    %c0_67 = arith.constant 0 : index
    %c0_68 = arith.constant 0 : index
    %c0_69 = arith.constant 0 : index
    %97 = vector.load %arg8[%c1_66, %c0_67, %c0_68, %c0_69] : memref<2x3x16x16xbf16, #tpu.memory_space<vmem>>, vector<1x3x16x16xbf16>
    %98 = vector.shape_cast %97 : vector<1x3x16x16xbf16> to vector<3x16x16xbf16>
    %c1_70 = arith.constant 1 : index
    %c0_71 = arith.constant 0 : index
    %c0_72 = arith.constant 0 : index
    %99 = vector.load %arg9[%c1_70, %c0_71, %c0_72] : memref<2x1x16xf32, #tpu.memory_space<vmem>>, vector<1x1x16xf32>
    %100 = vector.shape_cast %99 : vector<1x1x16xf32> to vector<1x16xf32>
    %c1_73 = arith.constant 1 : index
    %c0_74 = arith.constant 0 : index
    %c0_75 = arith.constant 0 : index
    %101 = vector.load %arg10[%c1_73, %c0_74, %c0_75] : memref<2x1x16xf32, #tpu.memory_space<vmem>>, vector<1x1x16xf32>
    %102 = vector.shape_cast %101 : vector<1x1x16xf32> to vector<1x16xf32>
    %c0_76 = arith.constant 0 : index
    %c0_77 = arith.constant 0 : index
    %c0_78 = arith.constant 0 : index
    %103 = vector.load %arg15[%c0_76, %c0_77, %c0_78] : memref<1x10x16xbf16, #tpu.memory_space<vmem>>, vector<1x8x16xbf16>
    %104 = vector.shape_cast %103 : vector<1x8x16xbf16> to vector<8x16xbf16>
    %105 = vector.extract_strided_slice %96 {offsets = [0, 0, 0], sizes = [1, 16, 16], strides = [1, 1, 1]} : vector<3x16x16xbf16> to vector<1x16x16xbf16>
    %106 = vector.shape_cast %105 : vector<1x16x16xbf16> to vector<16x16xbf16>
    %cst_79 = arith.constant dense<0.000000e+00> : vector<8x16xf32>
    %107 = tpu.matmul %104, %106, %cst_79 {dimension_numbers = #tpu.dot_dimension_numbers<[1], [0], [0], [1], [0, 0, 1, 1], [], []>} : vector<8x16xbf16>, vector<16x16xbf16>, vector<8x16xf32> -> vector<8x16xf32>
    %108 = vector.broadcast %100 : vector<1x16xf32> to vector<8x16xf32>
    %109 = arith.addf %108, %107 : vector<8x16xf32>
    %110 = vector.extract_strided_slice %98 {offsets = [0, 0, 0], sizes = [1, 16, 16], strides = [1, 1, 1]} : vector<3x16x16xbf16> to vector<1x16x16xbf16>
    %111 = vector.shape_cast %110 : vector<1x16x16xbf16> to vector<16x16xbf16>
    %cst_80 = arith.constant dense<0.000000e+00> : vector<8x16xf32>
    %112 = tpu.matmul %104, %111, %cst_80 {dimension_numbers = #tpu.dot_dimension_numbers<[1], [0], [0], [1], [0, 0, 1, 1], [], []>} : vector<8x16xbf16>, vector<16x16xbf16>, vector<8x16xf32> -> vector<8x16xf32>
    %113 = vector.broadcast %102 : vector<1x16xf32> to vector<8x16xf32>
    %114 = arith.addf %113, %112 : vector<8x16xf32>
    %c0_81 = arith.constant 0 : index
    %c1_82 = arith.constant 1 : index
    %c0_83 = arith.constant 0 : index
    %115 = vector.load %arg15[%c0_81, %c1_82, %c0_83] : memref<1x10x16xbf16, #tpu.memory_space<vmem>>, vector<1x8x16xbf16>
    %116 = vector.shape_cast %115 : vector<1x8x16xbf16> to vector<8x16xbf16>
    %117 = vector.extract_strided_slice %96 {offsets = [1, 0, 0], sizes = [1, 16, 16], strides = [1, 1, 1]} : vector<3x16x16xbf16> to vector<1x16x16xbf16>
    %118 = vector.shape_cast %117 : vector<1x16x16xbf16> to vector<16x16xbf16>
    %cst_84 = arith.constant dense<0.000000e+00> : vector<8x16xf32>
    %119 = tpu.matmul %116, %118, %cst_84 {dimension_numbers = #tpu.dot_dimension_numbers<[1], [0], [0], [1], [0, 0, 1, 1], [], []>} : vector<8x16xbf16>, vector<16x16xbf16>, vector<8x16xf32> -> vector<8x16xf32>
    %120 = arith.addf %109, %119 : vector<8x16xf32>
    %121 = vector.extract_strided_slice %98 {offsets = [1, 0, 0], sizes = [1, 16, 16], strides = [1, 1, 1]} : vector<3x16x16xbf16> to vector<1x16x16xbf16>
    %122 = vector.shape_cast %121 : vector<1x16x16xbf16> to vector<16x16xbf16>
    %cst_85 = arith.constant dense<0.000000e+00> : vector<8x16xf32>
    %123 = tpu.matmul %116, %122, %cst_85 {dimension_numbers = #tpu.dot_dimension_numbers<[1], [0], [0], [1], [0, 0, 1, 1], [], []>} : vector<8x16xbf16>, vector<16x16xbf16>, vector<8x16xf32> -> vector<8x16xf32>
    %124 = arith.addf %114, %123 : vector<8x16xf32>
    %c0_86 = arith.constant 0 : index
    %c2_87 = arith.constant 2 : index
    %c0_88 = arith.constant 0 : index
    %125 = vector.load %arg15[%c0_86, %c2_87, %c0_88] : memref<1x10x16xbf16, #tpu.memory_space<vmem>>, vector<1x8x16xbf16>
    %126 = vector.shape_cast %125 : vector<1x8x16xbf16> to vector<8x16xbf16>
    %127 = vector.extract_strided_slice %96 {offsets = [2, 0, 0], sizes = [1, 16, 16], strides = [1, 1, 1]} : vector<3x16x16xbf16> to vector<1x16x16xbf16>
    %128 = vector.shape_cast %127 : vector<1x16x16xbf16> to vector<16x16xbf16>
    %cst_89 = arith.constant dense<0.000000e+00> : vector<8x16xf32>
    %129 = tpu.matmul %126, %128, %cst_89 {dimension_numbers = #tpu.dot_dimension_numbers<[1], [0], [0], [1], [0, 0, 1, 1], [], []>} : vector<8x16xbf16>, vector<16x16xbf16>, vector<8x16xf32> -> vector<8x16xf32>
    %130 = arith.addf %120, %129 : vector<8x16xf32>
    %131 = vector.extract_strided_slice %98 {offsets = [2, 0, 0], sizes = [1, 16, 16], strides = [1, 1, 1]} : vector<3x16x16xbf16> to vector<1x16x16xbf16>
    %132 = vector.shape_cast %131 : vector<1x16x16xbf16> to vector<16x16xbf16>
    %cst_90 = arith.constant dense<0.000000e+00> : vector<8x16xf32>
    %133 = tpu.matmul %126, %132, %cst_90 {dimension_numbers = #tpu.dot_dimension_numbers<[1], [0], [0], [1], [0, 0, 1, 1], [], []>} : vector<8x16xbf16>, vector<16x16xbf16>, vector<8x16xf32> -> vector<8x16xf32>
    %134 = arith.addf %124, %133 : vector<8x16xf32>
    %135 = arith.truncf %130 : vector<8x16xf32> to vector<8x16xbf16>
    %136 = arith.truncf %134 : vector<8x16xf32> to vector<8x16xbf16>
    %137 = arith.negf %136 : vector<8x16xbf16>
    %138 = math.exp %137 : vector<8x16xbf16>
    %cst_91 = arith.constant 1.000000e+00 : bf16
    %139 = vector.broadcast %cst_91 : bf16 to vector<8x16xbf16>
    %140 = arith.addf %139, %138 : vector<8x16xbf16>
    %141 = arith.divf %139, %140 : vector<8x16xbf16>
    %142 = arith.mulf %135, %141 : vector<8x16xbf16>
    %143 = vector.shape_cast %142 : vector<8x16xbf16> to vector<1x8x16xbf16>
    %144 = vector.shape_cast %143 : vector<1x8x16xbf16> to vector<8x16xbf16>
    %c0_92 = arith.constant 0 : index
    %c0_93 = arith.constant 0 : index
    %145 = vector.load %arg11[%c0_92, %c0_93] : memref<16x32xbf16, #tpu.memory_space<vmem>>, vector<16x32xbf16>
    %cst_94 = arith.constant dense<0.000000e+00> : vector<8x32xf32>
    %146 = tpu.matmul %144, %145, %cst_94 {dimension_numbers = #tpu.dot_dimension_numbers<[1], [0], [0], [1], [0, 0, 1, 1], [], []>} : vector<8x16xbf16>, vector<16x32xbf16>, vector<8x32xf32> -> vector<8x32xf32>
    %c0_95 = arith.constant 0 : index
    %c0_96 = arith.constant 0 : index
    %147 = vector.load %arg12[%c0_95, %c0_96] : memref<1x32xf32, #tpu.memory_space<vmem>>, vector<1x32xf32>
    %148 = vector.broadcast %147 : vector<1x32xf32> to vector<8x32xf32>
    %149 = arith.addf %146, %148 : vector<8x32xf32>
    %150 = vector.shape_cast %149 : vector<8x32xf32> to vector<1x8x32xf32>
    %151 = arith.extf %1 : vector<1x8x1xbf16> to vector<1x8x1xf32>
    %152 = vector.broadcast %151 : vector<1x8x1xf32> to vector<1x8x32xf32>
    %153 = arith.mulf %150, %152 : vector<1x8x32xf32>
    %c0_97 = arith.constant 0 : index
    %c0_98 = arith.constant 0 : index
    %c0_99 = arith.constant 0 : index
    %154 = vector.load %arg16[%c0_97, %c0_98, %c0_99] : memref<1x8x32xbf16, #tpu.memory_space<vmem>>, vector<1x8x32xbf16>
    %155 = arith.extf %154 : vector<1x8x32xbf16> to vector<1x8x32xf32>
    %156 = arith.addf %153, %155 : vector<1x8x32xf32>
    %cst_100 = arith.constant 0.707106769 : f32
    %157 = vector.broadcast %cst_100 : f32 to vector<1x8x32xf32>
    %158 = arith.mulf %156, %157 : vector<1x8x32xf32>
    %c0_101 = arith.constant 0 : index
    %c0_102 = arith.constant 0 : index
    %c0_103 = arith.constant 0 : index
    %159 = vector.load %arg13[%c0_101, %c0_102, %c0_103] : memref<1x8x32xf32, #tpu.memory_space<vmem>>, vector<1x8x32xf32>
    tpu.vector_store %arg13[%c0_101, %c0_102, %c0_103], %153 {strides = array<i32>} : memref<1x8x32xf32, #tpu.memory_space<vmem>>, vector<1x8x32xf32>,
    %c0_104 = arith.constant 0 : index
    %c0_105 = arith.constant 0 : index
    %c0_106 = arith.constant 0 : index
    %160 = vector.load %arg14[%c0_104, %c0_105, %c0_106] : memref<1x8x32xf32, #tpu.memory_space<vmem>>, vector<1x8x32xf32>
    tpu.vector_store %arg14[%c0_104, %c0_105, %c0_106], %158 {strides = array<i32>} : memref<1x8x32xf32, #tpu.memory_space<vmem>>, vector<1x8x32xf32>,
    return
  }
  func.func @transform_0(%arg0: i32) -> (i32, i32, i32) {
    %c0_i32 = arith.constant 0 : i32
    %c0_i32_0 = arith.constant 0 : i32
    %c0_i32_1 = arith.constant 0 : i32
    return %arg0, %c0_i32, %c0_i32_0 : i32, i32, i32
  }
  func.func @transform_1(%arg0: i32) -> (i32, i32, i32) {
    %c0_i32 = arith.constant 0 : i32
    %c0_i32_0 = arith.constant 0 : i32
    %c0_i32_1 = arith.constant 0 : i32
    return %arg0, %c0_i32, %c0_i32_0 : i32, i32, i32
  }
  func.func @transform_2(%arg0: i32) -> (i32, i32) {
    %c0_i32 = arith.constant 0 : i32
    %c0_i32_0 = arith.constant 0 : i32
    %c0_i32_1 = arith.constant 0 : i32
    return %c0_i32, %c0_i32_0 : i32, i32
  }
  func.func @transform_3(%arg0: i32) -> (i32, i32) {
    %c0_i32 = arith.constant 0 : i32
    %c0_i32_0 = arith.constant 0 : i32
    %c0_i32_1 = arith.constant 0 : i32
    return %c0_i32, %c0_i32_0 : i32, i32
  }
  func.func @transform_4(%arg0: i32) -> (i32, i32) {
    %c0_i32 = arith.constant 0 : i32
    %c0_i32_0 = arith.constant 0 : i32
    %c0_i32_1 = arith.constant 0 : i32
    return %c0_i32, %c0_i32_0 : i32, i32
  }
  func.func @transform_5(%arg0: i32) -> (i32, i32) {
    %c0_i32 = arith.constant 0 : i32
    %c0_i32_0 = arith.constant 0 : i32
    %c0_i32_1 = arith.constant 0 : i32
    return %c0_i32, %c0_i32_0 : i32, i32
  }
  func.func @transform_6(%arg0: i32) -> (i32, i32, i32, i32) {
    %c0_i32 = arith.constant 0 : i32
    %c0_i32_0 = arith.constant 0 : i32
    %c0_i32_1 = arith.constant 0 : i32
    %c0_i32_2 = arith.constant 0 : i32
    %c0_i32_3 = arith.constant 0 : i32
    return %c0_i32, %c0_i32_0, %c0_i32_1, %c0_i32_2 : i32, i32, i32, i32
  }
  func.func @transform_7(%arg0: i32) -> (i32, i32, i32, i32) {
    %c0_i32 = arith.constant 0 : i32
    %c0_i32_0 = arith.constant 0 : i32
    %c0_i32_1 = arith.constant 0 : i32
    %c0_i32_2 = arith.constant 0 : i32
    %c0_i32_3 = arith.constant 0 : i32
    return %c0_i32, %c0_i32_0, %c0_i32_1, %c0_i32_2 : i32, i32, i32, i32
  }
  func.func @transform_8(%arg0: i32) -> (i32, i32, i32) {
    %c0_i32 = arith.constant 0 : i32
    %c0_i32_0 = arith.constant 0 : i32
    %c0_i32_1 = arith.constant 0 : i32
    %c0_i32_2 = arith.constant 0 : i32
    return %c0_i32, %c0_i32_0, %c0_i32_1 : i32, i32, i32
  }
  func.func @transform_9(%arg0: i32) -> (i32, i32, i32) {
    %c0_i32 = arith.constant 0 : i32
    %c0_i32_0 = arith.constant 0 : i32
    %c0_i32_1 = arith.constant 0 : i32
    %c0_i32_2 = arith.constant 0 : i32
    return %c0_i32, %c0_i32_0, %c0_i32_1 : i32, i32, i32
  }
  func.func @transform_10(%arg0: i32) -> (i32, i32) {
    %c0_i32 = arith.constant 0 : i32
    %c0_i32_0 = arith.constant 0 : i32
    %c0_i32_1 = arith.constant 0 : i32
    return %c0_i32, %c0_i32_0 : i32, i32
  }
  func.func @transform_11(%arg0: i32) -> (i32, i32) {
    %c0_i32 = arith.constant 0 : i32
    %c0_i32_0 = arith.constant 0 : i32
    %c0_i32_1 = arith.constant 0 : i32
    return %c0_i32, %c0_i32_0 : i32, i32
  }
  func.func @transform_12(%arg0: i32) -> (i32, i32, i32) {
    %c0_i32 = arith.constant 0 : i32
    %c0_i32_0 = arith.constant 0 : i32
    %c0_i32_1 = arith.constant 0 : i32
    return %arg0, %c0_i32, %c0_i32_0 : i32, i32, i32
  }
  func.func @transform_13(%arg0: i32) -> (i32, i32, i32) {
    %c0_i32 = arith.constant 0 : i32
    %c0_i32_0 = arith.constant 0 : i32
    %c0_i32_1 = arith.constant 0 : i32
    return %arg0, %c0_i32, %c0_i32_0 : i32, i32, i32
  }
}

module attributes {stable_mosaic.version = 11 : i64} {
  func.func @_encoder_node_kernel(%arg0: i32, %arg1: memref<1x8x1xbf16, #tpu.memory_space<vmem>>, %arg2: memref<1x8x32xf32, #tpu.memory_space<vmem>>, %arg3: memref<1x32xf32, #tpu.memory_space<vmem>>, %arg4: memref<1x32xf32, #tpu.memory_space<vmem>>, %arg5: memref<32x16xbf16, #tpu.memory_space<vmem>>, %arg6: memref<1x16xf32, #tpu.memory_space<vmem>>, %arg7: memref<2x3x16x16xbf16, #tpu.memory_space<vmem>>, %arg8: memref<2x3x16x16xbf16, #tpu.memory_space<vmem>>, %arg9: memref<2x1x16xf32, #tpu.memory_space<vmem>>, %arg10: memref<2x1x16xf32, #tpu.memory_space<vmem>>, %arg11: memref<16x32xbf16, #tpu.memory_space<vmem>>, %arg12: memref<1x32xf32, #tpu.memory_space<vmem>>, %arg13: memref<1x8x32xf32, #tpu.memory_space<vmem>>, %arg14: memref<1x8x32xf32, #tpu.memory_space<vmem>>, %arg15: memref<1x10x16xbf16, #tpu.memory_space<vmem>>, %arg16: memref<1x8x32xbf16, #tpu.memory_space<vmem>>) attributes {dimension_semantics = [#tpu.dimension_semantics<parallel>], iteration_bounds = array<i64: 2>, scalar_prefetch = 0 : i64, scratch_operands = 2 : i64, tpu.core_type = #tpu.core_type<tc>, window_params = [{transform_indices = @transform_0, window_bounds = array<i64: 1, 8, 1>}, {transform_indices = @transform_1, window_bounds = array<i64: 1, 8, 32>}, {pipeline_mode = #tpu.pipeline_mode<synchronous>, transform_indices = @transform_2, window_bounds = array<i64: 1, 32>}, {pipeline_mode = #tpu.pipeline_mode<synchronous>, transform_indices = @transform_3, window_bounds = array<i64: 1, 32>}, {pipeline_mode = #tpu.pipeline_mode<synchronous>, transform_indices = @transform_4, window_bounds = array<i64: 32, 16>}, {pipeline_mode = #tpu.pipeline_mode<synchronous>, transform_indices = @transform_5, window_bounds = array<i64: 1, 16>}, {pipeline_mode = #tpu.pipeline_mode<synchronous>, transform_indices = @transform_6, window_bounds = array<i64: 2, 3, 16, 16>}, {pipeline_mode = #tpu.pipeline_mode<synchronous>, transform_indices = @transform_7, window_bounds = array<i64: 2, 3, 16, 16>}, {pipeline_mode = #tpu.pipeline_mode<synchronous>, transform_indices = @transform_8, window_bounds = array<i64: 2, 1, 16>}, {pipeline_mode = #tpu.pipeline_mode<synchronous>, transform_indices = @transform_9, window_bounds = array<i64: 2, 1, 16>}, {pipeline_mode = #tpu.pipeline_mode<synchronous>, transform_indices = @transform_10, window_bounds = array<i64: 16, 32>}, {pipeline_mode = #tpu.pipeline_mode<synchronous>, transform_indices = @transform_11, window_bounds = array<i64: 1, 32>}, {transform_indices = @transform_12, window_bounds = array<i64: 1, 8, 32>}, {transform_indices = @transform_13, window_bounds = array<i64: 1, 8, 32>}]} {
    %c0 = arith.constant 0 : index
    %c0_0 = arith.constant 0 : index
    %c0_1 = arith.constant 0 : index
    %0 = vector.load %arg2[%c0, %c0_0, %c0_1] : memref<1x8x32xf32, #tpu.memory_space<vmem>>, vector<1x8x32xf32>
    %c0_2 = arith.constant 0 : index
    %c0_3 = arith.constant 0 : index
    %c0_4 = arith.constant 0 : index
    %1 = vector.load %arg1[%c0_2, %c0_3, %c0_4] : memref<1x8x1xbf16, #tpu.memory_space<vmem>>, vector<1x8x1xbf16>
    %cst = arith.constant dense<0.000000e+00> : vector<1x8xf32>
    %2 = vector.multi_reduction <add>, %0, %cst [2] : vector<1x8x32xf32> to vector<1x8xf32>
    %3 = vector.shape_cast %2 : vector<1x8xf32> to vector<1x8x1xf32>
    %cst_5 = arith.constant 3.200000e+01 : f32
    %4 = vector.broadcast %cst_5 : f32 to vector<1x8x1xf32>
    %5 = arith.divf %3, %4 : vector<1x8x1xf32>
    %6 = vector.broadcast %5 : vector<1x8x1xf32> to vector<1x8x32xf32>
    %7 = arith.subf %0, %6 : vector<1x8x32xf32>
    %8 = arith.mulf %7, %7 : vector<1x8x32xf32>
    %cst_6 = arith.constant dense<0.000000e+00> : vector<1x8xf32>
    %9 = vector.multi_reduction <add>, %8, %cst_6 [2] : vector<1x8x32xf32> to vector<1x8xf32>
    %10 = vector.shape_cast %9 : vector<1x8xf32> to vector<1x8x1xf32>
    %cst_7 = arith.constant 3.200000e+01 : f32
    %11 = vector.broadcast %cst_7 : f32 to vector<1x8x1xf32>
    %12 = arith.divf %10, %11 : vector<1x8x1xf32>
    %cst_8 = arith.constant 9.99999974E-6 : f32
    %13 = vector.broadcast %cst_8 : f32 to vector<1x8x1xf32>
    %14 = arith.addf %12, %13 : vector<1x8x1xf32>
    %15 = math.rsqrt %14 : vector<1x8x1xf32>
    %16 = vector.broadcast %15 : vector<1x8x1xf32> to vector<1x8x32xf32>
    %17 = arith.mulf %7, %16 : vector<1x8x32xf32>
    %c0_9 = arith.constant 0 : index
    %c0_10 = arith.constant 0 : index
    %18 = vector.load %arg3[%c0_9, %c0_10] : memref<1x32xf32, #tpu.memory_space<vmem>>, vector<1x32xf32>
    %19 = vector.shape_cast %18 : vector<1x32xf32> to vector<1x1x32xf32>
    %20 = vector.broadcast %19 : vector<1x1x32xf32> to vector<1x8x32xf32>
    %21 = arith.mulf %17, %20 : vector<1x8x32xf32>
    %c0_11 = arith.constant 0 : index
    %c0_12 = arith.constant 0 : index
    %22 = vector.load %arg4[%c0_11, %c0_12] : memref<1x32xf32, #tpu.memory_space<vmem>>, vector<1x32xf32>
    %23 = vector.shape_cast %22 : vector<1x32xf32> to vector<1x1x32xf32>
    %24 = vector.broadcast %23 : vector<1x1x32xf32> to vector<1x8x32xf32>
    %25 = arith.addf %21, %24 : vector<1x8x32xf32>
    %26 = arith.truncf %25 : vector<1x8x32xf32> to vector<1x8x32xbf16>
    %c0_13 = arith.constant 0 : index
    %c0_14 = arith.constant 0 : index
    %c0_15 = arith.constant 0 : index
    %27 = vector.load %arg16[%c0_13, %c0_14, %c0_15] : memref<1x8x32xbf16, #tpu.memory_space<vmem>>, vector<1x8x32xbf16>
    tpu.vector_store %arg16[%c0_13, %c0_14, %c0_15], %26 {strides = array<i32>} : memref<1x8x32xbf16, #tpu.memory_space<vmem>>, vector<1x8x32xbf16>,
    %28 = vector.shape_cast %26 : vector<1x8x32xbf16> to vector<8x32xbf16>
    %c0_16 = arith.constant 0 : index
    %c0_17 = arith.constant 0 : index
    %29 = vector.load %arg5[%c0_16, %c0_17] : memref<32x16xbf16, #tpu.memory_space<vmem>>, vector<32x16xbf16>
    %cst_18 = arith.constant dense<0.000000e+00> : vector<8x16xf32>
    %30 = tpu.matmul %28, %29, %cst_18 {dimension_numbers = #tpu.dot_dimension_numbers<[1], [0], [0], [1], [0, 0, 1, 1], [], []>} : vector<8x32xbf16>, vector<32x16xbf16>, vector<8x16xf32> -> vector<8x16xf32>
    %c0_19 = arith.constant 0 : index
    %c0_20 = arith.constant 0 : index
    %31 = vector.load %arg6[%c0_19, %c0_20] : memref<1x16xf32, #tpu.memory_space<vmem>>, vector<1x16xf32>
    %32 = vector.broadcast %31 : vector<1x16xf32> to vector<8x16xf32>
    %33 = arith.addf %30, %32 : vector<8x16xf32>
    %34 = arith.truncf %33 : vector<8x16xf32> to vector<8x16xbf16>
    %35 = vector.shape_cast %34 : vector<8x16xbf16> to vector<1x8x16xbf16>
    %36 = vector.shape_cast %1 : vector<1x8x1xbf16> to vector<1x8x1xbf16>
    %37 = vector.broadcast %36 : vector<1x8x1xbf16> to vector<1x8x16xbf16>
    %cst_21 = arith.constant 0.000000e+00 : bf16
    %38 = vector.broadcast %cst_21 : bf16 to vector<1x1x16xbf16>
    %c0_22 = arith.constant 0 : index
    %c0_23 = arith.constant 0 : index
    %c0_24 = arith.constant 0 : index
    %39 = vector.load %arg15[%c0_22, %c0_23, %c0_24] : memref<1x10x16xbf16, #tpu.memory_space<vmem>>, vector<1x1x16xbf16>
    tpu.vector_store %arg15[%c0_22, %c0_23, %c0_24], %38 {strides = array<i32>} : memref<1x10x16xbf16, #tpu.memory_space<vmem>>, vector<1x1x16xbf16>,
    %cst_25 = arith.constant 0.000000e+00 : bf16
    %40 = vector.broadcast %cst_25 : bf16 to vector<1x1x16xbf16>
    %c0_26 = arith.constant 0 : index
    %c9 = arith.constant 9 : index
    %c0_27 = arith.constant 0 : index
    %41 = vector.load %arg15[%c0_26, %c9, %c0_27] : memref<1x10x16xbf16, #tpu.memory_space<vmem>>, vector<1x1x16xbf16>
    tpu.vector_store %arg15[%c0_26, %c9, %c0_27], %40 {strides = array<i32>} : memref<1x10x16xbf16, #tpu.memory_space<vmem>>, vector<1x1x16xbf16>,
    %42 = arith.mulf %35, %37 : vector<1x8x16xbf16>
    %c0_28 = arith.constant 0 : index
    %c1 = arith.constant 1 : index
    %c0_29 = arith.constant 0 : index
    %43 = vector.load %arg15[%c0_28, %c1, %c0_29] : memref<1x10x16xbf16, #tpu.memory_space<vmem>>, vector<1x8x16xbf16>
    tpu.vector_store %arg15[%c0_28, %c1, %c0_29], %42 {strides = array<i32>} : memref<1x10x16xbf16, #tpu.memory_space<vmem>>, vector<1x8x16xbf16>,
    %c0_30 = arith.constant 0 : index
    %c0_31 = arith.constant 0 : index
    %c0_32 = arith.constant 0 : index
    %c0_33 = arith.constant 0 : index
    %44 = vector.load %arg7[%c0_30, %c0_31, %c0_32, %c0_33] : memref<2x3x16x16xbf16, #tpu.memory_space<vmem>>, vector<1x3x16x16xbf16>
    %45 = vector.shape_cast %44 : vector<1x3x16x16xbf16> to vector<3x16x16xbf16>
    %c0_34 = arith.constant 0 : index
    %c0_35 = arith.constant 0 : index
    %c0_36 = arith.constant 0 : index
    %c0_37 = arith.constant 0 : index
    %46 = vector.load %arg8[%c0_34, %c0_35, %c0_36, %c0_37] : memref<2x3x16x16xbf16, #tpu.memory_space<vmem>>, vector<1x3x16x16xbf16>
    %47 = vector.shape_cast %46 : vector<1x3x16x16xbf16> to vector<3x16x16xbf16>
    %c0_38 = arith.constant 0 : index
    %c0_39 = arith.constant 0 : index
    %c0_40 = arith.constant 0 : index
    %48 = vector.load %arg9[%c0_38, %c0_39, %c0_40] : memref<2x1x16xf32, #tpu.memory_space<vmem>>, vector<1x1x16xf32>
    %49 = vector.shape_cast %48 : vector<1x1x16xf32> to vector<1x16xf32>
    %c0_41 = arith.constant 0 : index
    %c0_42 = arith.constant 0 : index
    %c0_43 = arith.constant 0 : index
    %50 = vector.load %arg10[%c0_41, %c0_42, %c0_43] : memref<2x1x16xf32, #tpu.memory_space<vmem>>, vector<1x1x16xf32>
    %51 = vector.shape_cast %50 : vector<1x1x16xf32> to vector<1x16xf32>
    %c0_44 = arith.constant 0 : index
    %c0_45 = arith.constant 0 : index
    %c0_46 = arith.constant 0 : index
    %52 = vector.load %arg15[%c0_44, %c0_45, %c0_46] : memref<1x10x16xbf16, #tpu.memory_space<vmem>>, vector<1x8x16xbf16>
    %53 = vector.shape_cast %52 : vector<1x8x16xbf16> to vector<8x16xbf16>
    %54 = vector.extract_strided_slice %45 {offsets = [0, 0, 0], sizes = [1, 16, 16], strides = [1, 1, 1]} : vector<3x16x16xbf16> to vector<1x16x16xbf16>
    %55 = vector.shape_cast %54 : vector<1x16x16xbf16> to vector<16x16xbf16>
    %cst_47 = arith.constant dense<0.000000e+00> : vector<8x16xf32>
    %56 = tpu.matmul %53, %55, %cst_47 {dimension_numbers = #tpu.dot_dimension_numbers<[1], [0], [0], [1], [0, 0, 1, 1], [], []>} : vector<8x16xbf16>, vector<16x16xbf16>, vector<8x16xf32> -> vector<8x16xf32>
    %57 = vector.broadcast %49 : vector<1x16xf32> to vector<8x16xf32>
    %58 = arith.addf %57, %56 : vector<8x16xf32>
    %59 = vector.extract_strided_slice %47 {offsets = [0, 0, 0], sizes = [1, 16, 16], strides = [1, 1, 1]} : vector<3x16x16xbf16> to vector<1x16x16xbf16>
    %60 = vector.shape_cast %59 : vector<1x16x16xbf16> to vector<16x16xbf16>
    %cst_48 = arith.constant dense<0.000000e+00> : vector<8x16xf32>
    %61 = tpu.matmul %53, %60, %cst_48 {dimension_numbers = #tpu.dot_dimension_numbers<[1], [0], [0], [1], [0, 0, 1, 1], [], []>} : vector<8x16xbf16>, vector<16x16xbf16>, vector<8x16xf32> -> vector<8x16xf32>
    %62 = vector.broadcast %51 : vector<1x16xf32> to vector<8x16xf32>
    %63 = arith.addf %62, %61 : vector<8x16xf32>
    %c0_49 = arith.constant 0 : index
    %c1_50 = arith.constant 1 : index
    %c0_51 = arith.constant 0 : index
    %64 = vector.load %arg15[%c0_49, %c1_50, %c0_51] : memref<1x10x16xbf16, #tpu.memory_space<vmem>>, vector<1x8x16xbf16>
    %65 = vector.shape_cast %64 : vector<1x8x16xbf16> to vector<8x16xbf16>
    %66 = vector.extract_strided_slice %45 {offsets = [1, 0, 0], sizes = [1, 16, 16], strides = [1, 1, 1]} : vector<3x16x16xbf16> to vector<1x16x16xbf16>
    %67 = vector.shape_cast %66 : vector<1x16x16xbf16> to vector<16x16xbf16>
    %cst_52 = arith.constant dense<0.000000e+00> : vector<8x16xf32>
    %68 = tpu.matmul %65, %67, %cst_52 {dimension_numbers = #tpu.dot_dimension_numbers<[1], [0], [0], [1], [0, 0, 1, 1], [], []>} : vector<8x16xbf16>, vector<16x16xbf16>, vector<8x16xf32> -> vector<8x16xf32>
    %69 = arith.addf %58, %68 : vector<8x16xf32>
    %70 = vector.extract_strided_slice %47 {offsets = [1, 0, 0], sizes = [1, 16, 16], strides = [1, 1, 1]} : vector<3x16x16xbf16> to vector<1x16x16xbf16>
    %71 = vector.shape_cast %70 : vector<1x16x16xbf16> to vector<16x16xbf16>
    %cst_53 = arith.constant dense<0.000000e+00> : vector<8x16xf32>
    %72 = tpu.matmul %65, %71, %cst_53 {dimension_numbers = #tpu.dot_dimension_numbers<[1], [0], [0], [1], [0, 0, 1, 1], [], []>} : vector<8x16xbf16>, vector<16x16xbf16>, vector<8x16xf32> -> vector<8x16xf32>
    %73 = arith.addf %63, %72 : vector<8x16xf32>
    %c0_54 = arith.constant 0 : index
    %c2 = arith.constant 2 : index
    %c0_55 = arith.constant 0 : index
    %74 = vector.load %arg15[%c0_54, %c2, %c0_55] : memref<1x10x16xbf16, #tpu.memory_space<vmem>>, vector<1x8x16xbf16>
    %75 = vector.shape_cast %74 : vector<1x8x16xbf16> to vector<8x16xbf16>
    %76 = vector.extract_strided_slice %45 {offsets = [2, 0, 0], sizes = [1, 16, 16], strides = [1, 1, 1]} : vector<3x16x16xbf16> to vector<1x16x16xbf16>
    %77 = vector.shape_cast %76 : vector<1x16x16xbf16> to vector<16x16xbf16>
    %cst_56 = arith.constant dense<0.000000e+00> : vector<8x16xf32>
    %78 = tpu.matmul %75, %77, %cst_56 {dimension_numbers = #tpu.dot_dimension_numbers<[1], [0], [0], [1], [0, 0, 1, 1], [], []>} : vector<8x16xbf16>, vector<16x16xbf16>, vector<8x16xf32> -> vector<8x16xf32>
    %79 = arith.addf %69, %78 : vector<8x16xf32>
    %80 = vector.extract_strided_slice %47 {offsets = [2, 0, 0], sizes = [1, 16, 16], strides = [1, 1, 1]} : vector<3x16x16xbf16> to vector<1x16x16xbf16>
    %81 = vector.shape_cast %80 : vector<1x16x16xbf16> to vector<16x16xbf16>
    %cst_57 = arith.constant dense<0.000000e+00> : vector<8x16xf32>
    %82 = tpu.matmul %75, %81, %cst_57 {dimension_numbers = #tpu.dot_dimension_numbers<[1], [0], [0], [1], [0, 0, 1, 1], [], []>} : vector<8x16xbf16>, vector<16x16xbf16>, vector<8x16xf32> -> vector<8x16xf32>
    %83 = arith.addf %73, %82 : vector<8x16xf32>
    %84 = arith.truncf %79 : vector<8x16xf32> to vector<8x16xbf16>
    %85 = arith.truncf %83 : vector<8x16xf32> to vector<8x16xbf16>
    %86 = arith.negf %85 : vector<8x16xbf16>
    %87 = math.exp %86 : vector<8x16xbf16>
    %cst_58 = arith.constant 1.000000e+00 : bf16
    %88 = vector.broadcast %cst_58 : bf16 to vector<8x16xbf16>
    %89 = arith.addf %88, %87 : vector<8x16xbf16>
    %90 = arith.divf %88, %89 : vector<8x16xbf16>
    %91 = arith.mulf %84, %90 : vector<8x16xbf16>
    %92 = vector.shape_cast %91 : vector<8x16xbf16> to vector<1x8x16xbf16>
    %93 = arith.mulf %92, %37 : vector<1x8x16xbf16>
    %c0_59 = arith.constant 0 : index
    %c1_60 = arith.constant 1 : index
    %c0_61 = arith.constant 0 : index
    %94 = vector.load %arg15[%c0_59, %c1_60, %c0_61] : memref<1x10x16xbf16, #tpu.memory_space<vmem>>, vector<1x8x16xbf16>
    tpu.vector_store %arg15[%c0_59, %c1_60, %c0_61], %93 {strides = array<i32>} : memref<1x10x16xbf16, #tpu.memory_space<vmem>>, vector<1x8x16xbf16>,
    %c1_62 = arith.constant 1 : index
    %c0_63 = arith.constant 0 : index
    %c0_64 = arith.constant 0 : index
    %c0_65 = arith.constant 0 : index
    %95 = vector.load %arg7[%c1_62, %c0_63, %c0_64, %c0_65] : memref<2x3x16x16xbf16, #tpu.memory_space<vmem>>, vector<1x3x16x16xbf16>
    %96 = vector.shape_cast %95 : vector<1x3x16x16xbf16> to vector<3x16x16xbf16>
    %c1_66 = arith.constant 1 : index
    %c0_67 = arith.constant 0 : index
    %c0_68 = arith.constant 0 : index
    %c0_69 = arith.constant 0 : index
    %97 = vector.load %arg8[%c1_66, %c0_67, %c0_68, %c0_69] : memref<2x3x16x16xbf16, #tpu.memory_space<vmem>>, vector<1x3x16x16xbf16>
    %98 = vector.shape_cast %97 : vector<1x3x16x16xbf16> to vector<3x16x16xbf16>
    %c1_70 = arith.constant 1 : index
    %c0_71 = arith.constant 0 : index
    %c0_72 = arith.constant 0 : index
    %99 = vector.load %arg9[%c1_70, %c0_71, %c0_72] : memref<2x1x16xf32, #tpu.memory_space<vmem>>, vector<1x1x16xf32>
    %100 = vector.shape_cast %99 : vector<1x1x16xf32> to vector<1x16xf32>
    %c1_73 = arith.constant 1 : index
    %c0_74 = arith.constant 0 : index
    %c0_75 = arith.constant 0 : index
    %101 = vector.load %arg10[%c1_73, %c0_74, %c0_75] : memref<2x1x16xf32, #tpu.memory_space<vmem>>, vector<1x1x16xf32>
    %102 = vector.shape_cast %101 : vector<1x1x16xf32> to vector<1x16xf32>
    %c0_76 = arith.constant 0 : index
    %c0_77 = arith.constant 0 : index
    %c0_78 = arith.constant 0 : index
    %103 = vector.load %arg15[%c0_76, %c0_77, %c0_78] : memref<1x10x16xbf16, #tpu.memory_space<vmem>>, vector<1x8x16xbf16>
    %104 = vector.shape_cast %103 : vector<1x8x16xbf16> to vector<8x16xbf16>
    %105 = vector.extract_strided_slice %96 {offsets = [0, 0, 0], sizes = [1, 16, 16], strides = [1, 1, 1]} : vector<3x16x16xbf16> to vector<1x16x16xbf16>
    %106 = vector.shape_cast %105 : vector<1x16x16xbf16> to vector<16x16xbf16>
    %cst_79 = arith.constant dense<0.000000e+00> : vector<8x16xf32>
    %107 = tpu.matmul %104, %106, %cst_79 {dimension_numbers = #tpu.dot_dimension_numbers<[1], [0], [0], [1], [0, 0, 1, 1], [], []>} : vector<8x16xbf16>, vector<16x16xbf16>, vector<8x16xf32> -> vector<8x16xf32>
    %108 = vector.broadcast %100 : vector<1x16xf32> to vector<8x16xf32>
    %109 = arith.addf %108, %107 : vector<8x16xf32>
    %110 = vector.extract_strided_slice %98 {offsets = [0, 0, 0], sizes = [1, 16, 16], strides = [1, 1, 1]} : vector<3x16x16xbf16> to vector<1x16x16xbf16>
    %111 = vector.shape_cast %110 : vector<1x16x16xbf16> to vector<16x16xbf16>
    %cst_80 = arith.constant dense<0.000000e+00> : vector<8x16xf32>
    %112 = tpu.matmul %104, %111, %cst_80 {dimension_numbers = #tpu.dot_dimension_numbers<[1], [0], [0], [1], [0, 0, 1, 1], [], []>} : vector<8x16xbf16>, vector<16x16xbf16>, vector<8x16xf32> -> vector<8x16xf32>
    %113 = vector.broadcast %102 : vector<1x16xf32> to vector<8x16xf32>
    %114 = arith.addf %113, %112 : vector<8x16xf32>
    %c0_81 = arith.constant 0 : index
    %c1_82 = arith.constant 1 : index
    %c0_83 = arith.constant 0 : index
    %115 = vector.load %arg15[%c0_81, %c1_82, %c0_83] : memref<1x10x16xbf16, #tpu.memory_space<vmem>>, vector<1x8x16xbf16>
    %116 = vector.shape_cast %115 : vector<1x8x16xbf16> to vector<8x16xbf16>
    %117 = vector.extract_strided_slice %96 {offsets = [1, 0, 0], sizes = [1, 16, 16], strides = [1, 1, 1]} : vector<3x16x16xbf16> to vector<1x16x16xbf16>
    %118 = vector.shape_cast %117 : vector<1x16x16xbf16> to vector<16x16xbf16>
    %cst_84 = arith.constant dense<0.000000e+00> : vector<8x16xf32>
    %119 = tpu.matmul %116, %118, %cst_84 {dimension_numbers = #tpu.dot_dimension_numbers<[1], [0], [0], [1], [0, 0, 1, 1], [], []>} : vector<8x16xbf16>, vector<16x16xbf16>, vector<8x16xf32> -> vector<8x16xf32>
    %120 = arith.addf %109, %119 : vector<8x16xf32>
    %121 = vector.extract_strided_slice %98 {offsets = [1, 0, 0], sizes = [1, 16, 16], strides = [1, 1, 1]} : vector<3x16x16xbf16> to vector<1x16x16xbf16>
    %122 = vector.shape_cast %121 : vector<1x16x16xbf16> to vector<16x16xbf16>
    %cst_85 = arith.constant dense<0.000000e+00> : vector<8x16xf32>
    %123 = tpu.matmul %116, %122, %cst_85 {dimension_numbers = #tpu.dot_dimension_numbers<[1], [0], [0], [1], [0, 0, 1, 1], [], []>} : vector<8x16xbf16>, vector<16x16xbf16>, vector<8x16xf32> -> vector<8x16xf32>
    %124 = arith.addf %114, %123 : vector<8x16xf32>
    %c0_86 = arith.constant 0 : index
    %c2_87 = arith.constant 2 : index
    %c0_88 = arith.constant 0 : index
    %125 = vector.load %arg15[%c0_86, %c2_87, %c0_88] : memref<1x10x16xbf16, #tpu.memory_space<vmem>>, vector<1x8x16xbf16>
    %126 = vector.shape_cast %125 : vector<1x8x16xbf16> to vector<8x16xbf16>
    %127 = vector.extract_strided_slice %96 {offsets = [2, 0, 0], sizes = [1, 16, 16], strides = [1, 1, 1]} : vector<3x16x16xbf16> to vector<1x16x16xbf16>
    %128 = vector.shape_cast %127 : vector<1x16x16xbf16> to vector<16x16xbf16>
    %cst_89 = arith.constant dense<0.000000e+00> : vector<8x16xf32>
    %129 = tpu.matmul %126, %128, %cst_89 {dimension_numbers = #tpu.dot_dimension_numbers<[1], [0], [0], [1], [0, 0, 1, 1], [], []>} : vector<8x16xbf16>, vector<16x16xbf16>, vector<8x16xf32> -> vector<8x16xf32>
    %130 = arith.addf %120, %129 : vector<8x16xf32>
    %131 = vector.extract_strided_slice %98 {offsets = [2, 0, 0], sizes = [1, 16, 16], strides = [1, 1, 1]} : vector<3x16x16xbf16> to vector<1x16x16xbf16>
    %132 = vector.shape_cast %131 : vector<1x16x16xbf16> to vector<16x16xbf16>
    %cst_90 = arith.constant dense<0.000000e+00> : vector<8x16xf32>
    %133 = tpu.matmul %126, %132, %cst_90 {dimension_numbers = #tpu.dot_dimension_numbers<[1], [0], [0], [1], [0, 0, 1, 1], [], []>} : vector<8x16xbf16>, vector<16x16xbf16>, vector<8x16xf32> -> vector<8x16xf32>
    %134 = arith.addf %124, %133 : vector<8x16xf32>
    %135 = arith.truncf %130 : vector<8x16xf32> to vector<8x16xbf16>
    %136 = arith.truncf %134 : vector<8x16xf32> to vector<8x16xbf16>
    %137 = arith.negf %136 : vector<8x16xbf16>
    %138 = math.exp %137 : vector<8x16xbf16>
    %cst_91 = arith.constant 1.000000e+00 : bf16
    %139 = vector.broadcast %cst_91 : bf16 to vector<8x16xbf16>
    %140 = arith.addf %139, %138 : vector<8x16xbf16>
    %141 = arith.divf %139, %140 : vector<8x16xbf16>
    %142 = arith.mulf %135, %141 : vector<8x16xbf16>
    %143 = vector.shape_cast %142 : vector<8x16xbf16> to vector<1x8x16xbf16>
    %144 = vector.shape_cast %143 : vector<1x8x16xbf16> to vector<8x16xbf16>
    %c0_92 = arith.constant 0 : index
    %c0_93 = arith.constant 0 : index
    %145 = vector.load %arg11[%c0_92, %c0_93] : memref<16x32xbf16, #tpu.memory_space<vmem>>, vector<16x32xbf16>
    %cst_94 = arith.constant dense<0.000000e+00> : vector<8x32xf32>
    %146 = tpu.matmul %144, %145, %cst_94 {dimension_numbers = #tpu.dot_dimension_numbers<[1], [0], [0], [1], [0, 0, 1, 1], [], []>} : vector<8x16xbf16>, vector<16x32xbf16>, vector<8x32xf32> -> vector<8x32xf32>
    %c0_95 = arith.constant 0 : index
    %c0_96 = arith.constant 0 : index
    %147 = vector.load %arg12[%c0_95, %c0_96] : memref<1x32xf32, #tpu.memory_space<vmem>>, vector<1x32xf32>
    %148 = vector.broadcast %147 : vector<1x32xf32> to vector<8x32xf32>
    %149 = arith.addf %146, %148 : vector<8x32xf32>
    %150 = vector.shape_cast %149 : vector<8x32xf32> to vector<1x8x32xf32>
    %151 = arith.extf %1 : vector<1x8x1xbf16> to vector<1x8x1xf32>
    %152 = vector.broadcast %151 : vector<1x8x1xf32> to vector<1x8x32xf32>
    %153 = arith.mulf %150, %152 : vector<1x8x32xf32>
    %c0_97 = arith.constant 0 : index
    %c0_98 = arith.constant 0 : index
    %c0_99 = arith.constant 0 : index
    %154 = vector.load %arg16[%c0_97, %c0_98, %c0_99] : memref<1x8x32xbf16, #tpu.memory_space<vmem>>, vector<1x8x32xbf16>
    %155 = arith.extf %154 : vector<1x8x32xbf16> to vector<1x8x32xf32>
    %156 = arith.addf %153, %155 : vector<1x8x32xf32>
    %cst_100 = arith.constant 0.707106769 : f32
    %157 = vector.broadcast %cst_100 : f32 to vector<1x8x32xf32>
    %158 = arith.mulf %156, %157 : vector<1x8x32xf32>
    %c0_101 = arith.constant 0 : index
    %c0_102 = arith.constant 0 : index
    %c0_103 = arith.constant 0 : index
    %159 = vector.load %arg13[%c0_101, %c0_102, %c0_103] : memref<1x8x32xf32, #tpu.memory_space<vmem>>, vector<1x8x32xf32>
    tpu.vector_store %arg13[%c0_101, %c0_102, %c0_103], %153 {strides = array<i32>} : memref<1x8x32xf32, #tpu.memory_space<vmem>>, vector<1x8x32xf32>,
    %c0_104 = arith.constant 0 : index
    %c0_105 = arith.constant 0 : index
    %c0_106 = arith.constant 0 : index
    %160 = vector.load %arg14[%c0_104, %c0_105, %c0_106] : memref<1x8x32xf32, #tpu.memory_space<vmem>>, vector<1x8x32xf32>
    tpu.vector_store %arg14[%c0_104, %c0_105, %c0_106], %158 {strides = array<i32>} : memref<1x8x32xf32, #tpu.memory_space<vmem>>, vector<1x8x32xf32>,
    return
  }
  func.func @transform_0(%arg0: i32) -> (i32, i32, i32) {
    %c0_i32 = arith.constant 0 : i32
    %c0_i32_0 = arith.constant 0 : i32
    %c0_i32_1 = arith.constant 0 : i32
    return %arg0, %c0_i32, %c0_i32_0 : i32, i32, i32
  }
  func.func @transform_1(%arg0: i32) -> (i32, i32, i32) {
    %c0_i32 = arith.constant 0 : i32
    %c0_i32_0 = arith.constant 0 : i32
    %c0_i32_1 = arith.constant 0 : i32
    return %arg0, %c0_i32, %c0_i32_0 : i32, i32, i32
  }
  func.func @transform_2(%arg0: i32) -> (i32, i32) {
    %c0_i32 = arith.constant 0 : i32
    %c0_i32_0 = arith.constant 0 : i32
    %c0_i32_1 = arith.constant 0 : i32
    return %c0_i32, %c0_i32_0 : i32, i32
  }
  func.func @transform_3(%arg0: i32) -> (i32, i32) {
    %c0_i32 = arith.constant 0 : i32
    %c0_i32_0 = arith.constant 0 : i32
    %c0_i32_1 = arith.constant 0 : i32
    return %c0_i32, %c0_i32_0 : i32, i32
  }
  func.func @transform_4(%arg0: i32) -> (i32, i32) {
    %c0_i32 = arith.constant 0 : i32
    %c0_i32_0 = arith.constant 0 : i32
    %c0_i32_1 = arith.constant 0 : i32
    return %c0_i32, %c0_i32_0 : i32, i32
  }
  func.func @transform_5(%arg0: i32) -> (i32, i32) {
    %c0_i32 = arith.constant 0 : i32
    %c0_i32_0 = arith.constant 0 : i32
    %c0_i32_1 = arith.constant 0 : i32
    return %c0_i32, %c0_i32_0 : i32, i32
  }
  func.func @transform_6(%arg0: i32) -> (i32, i32, i32, i32) {
    %c0_i32 = arith.constant 0 : i32
    %c0_i32_0 = arith.constant 0 : i32
    %c0_i32_1 = arith.constant 0 : i32
    %c0_i32_2 = arith.constant 0 : i32
    %c0_i32_3 = arith.constant 0 : i32
    return %c0_i32, %c0_i32_0, %c0_i32_1, %c0_i32_2 : i32, i32, i32, i32
  }
  func.func @transform_7(%arg0: i32) -> (i32, i32, i32, i32) {
    %c0_i32 = arith.constant 0 : i32
    %c0_i32_0 = arith.constant 0 : i32
    %c0_i32_1 = arith.constant 0 : i32
    %c0_i32_2 = arith.constant 0 : i32
    %c0_i32_3 = arith.constant 0 : i32
    return %c0_i32, %c0_i32_0, %c0_i32_1, %c0_i32_2 : i32, i32, i32, i32
  }
  func.func @transform_8(%arg0: i32) -> (i32, i32, i32) {
    %c0_i32 = arith.constant 0 : i32
    %c0_i32_0 = arith.constant 0 : i32
    %c0_i32_1 = arith.constant 0 : i32
    %c0_i32_2 = arith.constant 0 : i32
    return %c0_i32, %c0_i32_0, %c0_i32_1 : i32, i32, i32
  }
  func.func @transform_9(%arg0: i32) -> (i32, i32, i32) {
    %c0_i32 = arith.constant 0 : i32
    %c0_i32_0 = arith.constant 0 : i32
    %c0_i32_1 = arith.constant 0 : i32
    %c0_i32_2 = arith.constant 0 : i32
    return %c0_i32, %c0_i32_0, %c0_i32_1 : i32, i32, i32
  }
  func.func @transform_10(%arg0: i32) -> (i32, i32) {
    %c0_i32 = arith.constant 0 : i32
    %c0_i32_0 = arith.constant 0 : i32
    %c0_i32_1 = arith.constant 0 : i32
    return %c0_i32, %c0_i32_0 : i32, i32
  }
  func.func @transform_11(%arg0: i32) -> (i32, i32) {
    %c0_i32 = arith.constant 0 : i32
    %c0_i32_0 = arith.constant 0 : i32
    %c0_i32_1 = arith.constant 0 : i32
    return %c0_i32, %c0_i32_0 : i32, i32
  }
  func.func @transform_12(%arg0: i32) -> (i32, i32, i32) {
    %c0_i32 = arith.constant 0 : i32
    %c0_i32_0 = arith.constant 0 : i32
    %c0_i32_1 = arith.constant 0 : i32
    return %arg0, %c0_i32, %c0_i32_0 : i32, i32, i32
  }
  func.func @transform_13(%arg0: i32) -> (i32, i32, i32) {
    %c0_i32 = arith.constant 0 : i32
    %c0_i32_0 = arith.constant 0 : i32
    %c0_i32_1 = arith.constant 0 : i32
    return %arg0, %c0_i32, %c0_i32_0 : i32, i32, i32
  }
}

</mosaic_0001>

<llo_original>
// kernel: tpu_custom_call.1
$region0: #{tpu_custom_call.1}
  #allocation0 [shape = 'u32[]', space=smem, size = 0x4, offset = 0x4, fixed_abs, tag = 'smem constant byte address 0x4 - core index']
  #allocation1 [shape = 'u32[144,128]{1,0:T(1,128)}', space=vmem, size = 0x12000, scoped, tag = 'internal scratch']
  #allocation2 [shape = 'bf16[1,10,16]{2,1,0:T(8,128)(2,1)}', space=vmem, size = 0x1000, scoped, tag = 'scratch operand']
  #allocation3 [shape = 'bf16[1,8,32]{2,1,0:T(8,128)(2,1)}', space=vmem, size = 0x800, scoped, tag = 'scratch operand']
  %s0 = inlined_call_operand.vmem [shape: bf16[2,8,1], index: 0, kind: input, shape index: {}]
  %s1 = inlined_call_operand.hbm [shape: f32[2,8,32], index: 1, kind: input, shape index: {}]
  %s2 = inlined_call_operand.vmem [shape: f32[1,32], index: 2, kind: input, shape index: {}]
  %s3 = inlined_call_operand.hbm [shape: f32[1,32], index: 3, kind: input, shape index: {}]
  %s4 = inlined_call_operand.vmem [shape: bf16[32,16], index: 4, kind: input, shape index: {}]
  %s5 = inlined_call_operand.hbm [shape: f32[1,16], index: 5, kind: input, shape index: {}]
  %s6 = inlined_call_operand.vmem [shape: bf16[2,3,16,16], index: 6, kind: input, shape index: {}]
  %s7 = inlined_call_operand.hbm [shape: bf16[2,3,16,16], index: 7, kind: input, shape index: {}]
  %s8 = inlined_call_operand.vmem [shape: f32[2,1,16], index: 8, kind: input, shape index: {}]
  %s9 = inlined_call_operand.vmem [shape: f32[2,1,16], index: 9, kind: input, shape index: {}]
  %s10 = inlined_call_operand.vmem [shape: bf16[16,32], index: 10, kind: input, shape index: {}]
  %s11 = inlined_call_operand.vmem [shape: f32[1,32], index: 11, kind: input, shape index: {}]
  %s12 = inlined_call_operand.hbm [shape: f32[2,8,32], index: 12, kind: output, shape index: {0}]
  %s13 = inlined_call_operand.hbm [shape: f32[2,8,32], index: 13, kind: output, shape index: {1}]
  %14 = xla_tuple %s12, %s13
  %s15 = sld [smem:[#allocation0]]
  $region105: #{tpu_custom_call.1} parent=0
    _
  %s17 = ssub.s32 1, %s15
  %s18 = scalar_select 0, %s17, %s15
  $region1: #{tpu_custom_call.1} parent=0
    #allocation4 [shape = 'u8[8192]{0}', space=vmem, size = 0x2000, scoped, tag = 'input window, operand 1']
    #allocation5 [shape = 's32[2]{0}', space=sflag, size = 0x8, scoped, tag = 'scoped memory for tpu_custom_call.1']
    #allocation6 [shape = 's32[2]{0}', space=sflag, size = 0x8, scoped, tag = 'scoped memory for tpu_custom_call.1']
    #allocation7 [shape = 'u8[512]{0}', space=vmem, size = 0x400, scoped, tag = 'input window, operand 3, single buffered']
    #allocation8 [shape = 's32[1]{0}', space=sflag, size = 0x4, scoped, tag = 'scoped memory for tpu_custom_call.1']
    #allocation9 [shape = 'u8[512]{0}', space=vmem, size = 0x400, scoped, tag = 'input window, operand 5, single buffered']
    #allocation10 [shape = 'u8[24576]{0}', space=vmem, size = 0x6000, scoped, tag = 'input window, operand 7, single buffered']
    #allocation11 [shape = 's32[1]{0}', space=sflag, size = 0x4, scoped, tag = 'scoped memory for tpu_custom_call.1']
    #allocation12 [shape = 'u8[8192]{0}', space=vmem, size = 0x2000, scoped, tag = 'output window, operand 0']
    #allocation13 [shape = 'u8[8192]{0}', space=vmem, size = 0x2000, scoped, tag = 'output window, operand 1']
    #allocation14 [shape = 's32[2]{0}', space=sflag, size = 0x8, scoped, tag = 'scoped memory for tpu_custom_call.1']
    %19 = vsyncpa [#allocation5], 0
    %s20 = scalar_lea.sflag [#allocation5], 1
    %21 = vsyncpa %s20, 0
    %22 = vsyncpa [#allocation8], 0
    %23 = vsyncpa [#allocation11], 0
    %24 = vsyncpa [#allocation6], 0
    %s25 = scalar_lea.sflag [#allocation6], 1
    %26 = vsyncpa %s25, 0
    %27 = vsyncpa [#allocation14], 0
    %s28 = scalar_lea.sflag [#allocation14], 1
    %29 = vsyncpa %s28, 0
    loop: start=0, step=1, limit=4
    $region2: #{tpu_custom_call.1} parent=1 // loop_pre_header
      _
    $region3: #{tpu_custom_call.1} parent=1 // loop_header
      %s31 = sphi 0, %s35
      %p32 = scmp.ge.s32.totalorder %s31, 4
      %s41 = sphi 0, %s43
      %s44 = sphi 0, %s41
      %s45 = sphi 0, %s44
      %s61 = sphi 0, %s45
      %s67 = sphi 0, %s69
      %s70 = sphi 0, %s67
      %s71 = sphi 0, %s70
      %s87 = sphi 0, %s71
      %s91 = sphi 0, %s91
      %s93 = sphi 0, %s91
      %s94 = sphi 0, %s93
      %s108 = sphi 0, %s94
      %s112 = sphi 0, %s112
      %s114 = sphi 0, %s112
      %s115 = sphi 0, %s114
      %s129 = sphi 0, %s115
      %s133 = sphi 0, %s133
      %s135 = sphi 0, %s133
      %s136 = sphi 0, %s135
      %s150 = sphi 0, %s136
      %s154 = sphi 0, %s154
      %s156 = sphi 0, %s154
      %s157 = sphi 0, %s156
      %s171 = sphi 0, %s157
      %s175 = sphi 0, %s175
      %s177 = sphi 0, %s175
      %s178 = sphi 0, %s177
      %s192 = sphi 0, %s178
      %s196 = sphi 0, %s196
      %s198 = sphi 0, %s196
      %s199 = sphi 0, %s198
      %s213 = sphi 0, %s199
      %s217 = sphi 0, %s217
      %s219 = sphi 0, %s217
      %s220 = sphi 0, %s219
      %s234 = sphi 0, %s220
      %s238 = sphi 0, %s238
      %s240 = sphi 0, %s238
      %s241 = sphi 0, %s240
      %s255 = sphi 0, %s241
      %s259 = sphi 0, %s259
      %s261 = sphi 0, %s259
      %s262 = sphi 0, %s261
      %s276 = sphi 0, %s262
      %s280 = sphi 0, %s280
      %s282 = sphi 0, %s280
      %s283 = sphi 0, %s282
      %s297 = sphi 0, %s283
      %s303 = sphi 0, %s305
      %s306 = sphi 0, %s303
      %s307 = sphi 0, %s306
      %s323 = sphi 0, %s307
      %s329 = sphi 0, %s331
      %s332 = sphi 0, %s329
      %s333 = sphi 0, %s332
      %s349 = sphi 0, %s333
    $region4: #{tpu_custom_call.1} parent=1 // loop_header_branch
      %34 = sbr.rel (%p32) target = $region8
    $region5: #{tpu_custom_call.1} parent=1 // loop_body
      %s36 = ssub.s32 %s31, 1
      %s37 = ssub.s32 %s31, 2
      %s38 = sadd.s32 %s31, 1
      %s39 = ssub.s32 %s31, %s38
      %p40 = scmp.eq.s32.totalorder %s39, 0
      %s42 = sadd.s32 %s41, 1
      %s43 = scalar_select %p40, %s41, %s42
      %p46 = pneg %p40
      %p47 = scmp.eq.s32.totalorder %s31, 1
      %p48 = por %p46, %p47
      %p49 = scmp.ne.s32.totalorder %s41, %s44
      %p50 = scmp.eq.s32.totalorder %s31, 0
      %p51 = por %p49, %p50
      %p52 = scmp.ne.s32.totalorder %s41, %s44
      %p53 = scmp.eq.s32.totalorder %s36, 1
      %p54 = por %p52, %p53
      %p55 = scmp.ne.s32.totalorder %s44, %s45
      %p56 = scmp.eq.s32.totalorder %s36, 0
      %p57 = por %p55, %p56
      %p58 = scmp.ne.s32.totalorder %s44, %s45
      %p59 = scmp.eq.s32.totalorder %s37, 1
      %p60 = por %p58, %p59
      %p62 = scmp.ne.s32.totalorder %s45, %s61
      %p63 = scmp.eq.s32.totalorder %s37, 0
      %p64 = por %p62, %p63
      %s65 = ssub.s32 %s31, %s38
      %p66 = scmp.eq.s32.totalorder %s65, 0
      %s68 = sadd.s32 %s67, 1
      %s69 = scalar_select %p66, %s67, %s68
      %p72 = pneg %p66
      %p73 = scmp.eq.s32.totalorder %s31, 1
      %p74 = por %p72, %p73
      %p75 = scmp.ne.s32.totalorder %s67, %s70
      %p76 = scmp.eq.s32.totalorder %s31, 0
      %p77 = por %p75, %p76
      %p78 = scmp.ne.s32.totalorder %s67, %s70
      %p79 = scmp.eq.s32.totalorder %s36, 1
      %p80 = por %p78, %p79
      %p81 = scmp.ne.s32.totalorder %s70, %s71
      %p82 = scmp.eq.s32.totalorder %s36, 0
      %p83 = por %p81, %p82
      %p84 = scmp.ne.s32.totalorder %s70, %s71
      %p85 = scmp.eq.s32.totalorder %s37, 1
      %p86 = por %p84, %p85
      %p88 = scmp.ne.s32.totalorder %s71, %s87
      %p89 = scmp.eq.s32.totalorder %s37, 0
      %p90 = por %p88, %p89
      %s92 = sadd.s32 %s91, 1
      %p95 = scmp.eq.s32.totalorder %s31, 1
      %p96 = scmp.ne.s32.totalorder %s91, %s93
      %p97 = scmp.eq.s32.totalorder %s31, 0
      %p98 = por %p96, %p97
      %p99 = scmp.ne.s32.totalorder %s91, %s93
      %p100 = scmp.eq.s32.totalorder %s36, 1
      %p101 = por %p99, %p100
      %p102 = scmp.ne.s32.totalorder %s93, %s94
      %p103 = scmp.eq.s32.totalorder %s36, 0
      %p104 = por %p102, %p103
      %p105 = scmp.ne.s32.totalorder %s93, %s94
      %p106 = scmp.eq.s32.totalorder %s37, 1
      %p107 = por %p105, %p106
      %p109 = scmp.ne.s32.totalorder %s94, %s108
      %p110 = scmp.eq.s32.totalorder %s37, 0
      %p111 = por %p109, %p110
      %s113 = sadd.s32 %s112, 1
      %p116 = scmp.eq.s32.totalorder %s31, 1
      %p117 = scmp.ne.s32.totalorder %s112, %s114
      %p118 = scmp.eq.s32.totalorder %s31, 0
      %p119 = por %p117, %p118
      %p120 = scmp.ne.s32.totalorder %s112, %s114
      %p121 = scmp.eq.s32.totalorder %s36, 1
      %p122 = por %p120, %p121
      %p123 = scmp.ne.s32.totalorder %s114, %s115
      %p124 = scmp.eq.s32.totalorder %s36, 0
      %p125 = por %p123, %p124
      %p126 = scmp.ne.s32.totalorder %s114, %s115
      %p127 = scmp.eq.s32.totalorder %s37, 1
      %p128 = por %p126, %p127
      %p130 = scmp.ne.s32.totalorder %s115, %s129
      %p131 = scmp.eq.s32.totalorder %s37, 0
      %p132 = por %p130, %p131
      %s134 = sadd.s32 %s133, 1
      %p137 = scmp.eq.s32.totalorder %s31, 1
      %p138 = scmp.ne.s32.totalorder %s133, %s135
      %p139 = scmp.eq.s32.totalorder %s31, 0
      %p140 = por %p138, %p139
      %p141 = scmp.ne.s32.totalorder %s133, %s135
      %p142 = scmp.eq.s32.totalorder %s36, 1
      %p143 = por %p141, %p142
      %p144 = scmp.ne.s32.totalorder %s135, %s136
      %p145 = scmp.eq.s32.totalorder %s36, 0
      %p146 = por %p144, %p145
      %p147 = scmp.ne.s32.totalorder %s135, %s136
      %p148 = scmp.eq.s32.totalorder %s37, 1
      %p149 = por %p147, %p148
      %p151 = scmp.ne.s32.totalorder %s136, %s150
      %p152 = scmp.eq.s32.totalorder %s37, 0
      %p153 = por %p151, %p152
      %s155 = sadd.s32 %s154, 1
      %p158 = scmp.eq.s32.totalorder %s31, 1
      %p159 = scmp.ne.s32.totalorder %s154, %s156
      %p160 = scmp.eq.s32.totalorder %s31, 0
      %p161 = por %p159, %p160
      %p162 = scmp.ne.s32.totalorder %s154, %s156
      %p163 = scmp.eq.s32.totalorder %s36, 1
      %p164 = por %p162, %p163
      %p165 = scmp.ne.s32.totalorder %s156, %s157
      %p166 = scmp.eq.s32.totalorder %s36, 0
      %p167 = por %p165, %p166
      %p168 = scmp.ne.s32.totalorder %s156, %s157
      %p169 = scmp.eq.s32.totalorder %s37, 1
      %p170 = por %p168, %p169
      %p172 = scmp.ne.s32.totalorder %s157, %s171
      %p173 = scmp.eq.s32.totalorder %s37, 0
      %p174 = por %p172, %p173
      %s176 = sadd.s32 %s175, 1
      %p179 = scmp.eq.s32.totalorder %s31, 1
      %p180 = scmp.ne.s32.totalorder %s175, %s177
      %p181 = scmp.eq.s32.totalorder %s31, 0
      %p182 = por %p180, %p181
      %p183 = scmp.ne.s32.totalorder %s175, %s177
      %p184 = scmp.eq.s32.totalorder %s36, 1
      %p185 = por %p183, %p184
      %p186 = scmp.ne.s32.totalorder %s177, %s178
      %p187 = scmp.eq.s32.totalorder %s36, 0
      %p188 = por %p186, %p187
      %p189 = scmp.ne.s32.totalorder %s177, %s178
      %p190 = scmp.eq.s32.totalorder %s37, 1
      %p191 = por %p189, %p190
      %p193 = scmp.ne.s32.totalorder %s178, %s192
      %p194 = scmp.eq.s32.totalorder %s37, 0
      %p195 = por %p193, %p194
      %s197 = sadd.s32 %s196, 1
      %p200 = scmp.eq.s32.totalorder %s31, 1
      %p201 = scmp.ne.s32.totalorder %s196, %s198
      %p202 = scmp.eq.s32.totalorder %s31, 0
      %p203 = por %p201, %p202
      %p204 = scmp.ne.s32.totalorder %s196, %s198
      %p205 = scmp.eq.s32.totalorder %s36, 1
      %p206 = por %p204, %p205
      %p207 = scmp.ne.s32.totalorder %s198, %s199
      %p208 = scmp.eq.s32.totalorder %s36, 0
      %p209 = por %p207, %p208
      %p210 = scmp.ne.s32.totalorder %s198, %s199
      %p211 = scmp.eq.s32.totalorder %s37, 1
      %p212 = por %p210, %p211
      %p214 = scmp.ne.s32.totalorder %s199, %s213
      %p215 = scmp.eq.s32.totalorder %s37, 0
      %p216 = por %p214, %p215
      %s218 = sadd.s32 %s217, 1
      %p221 = scmp.eq.s32.totalorder %s31, 1
      %p222 = scmp.ne.s32.totalorder %s217, %s219
      %p223 = scmp.eq.s32.totalorder %s31, 0
      %p224 = por %p222, %p223
      %p225 = scmp.ne.s32.totalorder %s217, %s219
      %p226 = scmp.eq.s32.totalorder %s36, 1
      %p227 = por %p225, %p226
      %p228 = scmp.ne.s32.totalorder %s219, %s220
      %p229 = scmp.eq.s32.totalorder %s36, 0
      %p230 = por %p228, %p229
      %p231 = scmp.ne.s32.totalorder %s219, %s220
      %p232 = scmp.eq.s32.totalorder %s37, 1
      %p233 = por %p231, %p232
      %p235 = scmp.ne.s32.totalorder %s220, %s234
      %p236 = scmp.eq.s32.totalorder %s37, 0
      %p237 = por %p235, %p236
      %s239 = sadd.s32 %s238, 1
      %p242 = scmp.eq.s32.totalorder %s31, 1
      %p243 = scmp.ne.s32.totalorder %s238, %s240
      %p244 = scmp.eq.s32.totalorder %s31, 0
      %p245 = por %p243, %p244
      %p246 = scmp.ne.s32.totalorder %s238, %s240
      %p247 = scmp.eq.s32.totalorder %s36, 1
      %p248 = por %p246, %p247
      %p249 = scmp.ne.s32.totalorder %s240, %s241
      %p250 = scmp.eq.s32.totalorder %s36, 0
      %p251 = por %p249, %p250
      %p252 = scmp.ne.s32.totalorder %s240, %s241
      %p253 = scmp.eq.s32.totalorder %s37, 1
      %p254 = por %p252, %p253
      %p256 = scmp.ne.s32.totalorder %s241, %s255
      %p257 = scmp.eq.s32.totalorder %s37, 0
      %p258 = por %p256, %p257
      %s260 = sadd.s32 %s259, 1
      %p263 = scmp.eq.s32.totalorder %s31, 1
      %p264 = scmp.ne.s32.totalorder %s259, %s261
      %p265 = scmp.eq.s32.totalorder %s31, 0
      %p266 = por %p264, %p265
      %p267 = scmp.ne.s32.totalorder %s259, %s261
      %p268 = scmp.eq.s32.totalorder %s36, 1
      %p269 = por %p267, %p268
      %p270 = scmp.ne.s32.totalorder %s261, %s262
      %p271 = scmp.eq.s32.totalorder %s36, 0
      %p272 = por %p270, %p271
      %p273 = scmp.ne.s32.totalorder %s261, %s262
      %p274 = scmp.eq.s32.totalorder %s37, 1
      %p275 = por %p273, %p274
      %p277 = scmp.ne.s32.totalorder %s262, %s276
      %p278 = scmp.eq.s32.totalorder %s37, 0
      %p279 = por %p277, %p278
      %s281 = sadd.s32 %s280, 1
      %p284 = scmp.eq.s32.totalorder %s31, 1
      %p285 = scmp.ne.s32.totalorder %s280, %s282
      %p286 = scmp.eq.s32.totalorder %s31, 0
      %p287 = por %p285, %p286
      %p288 = scmp.ne.s32.totalorder %s280, %s282
      %p289 = scmp.eq.s32.totalorder %s36, 1
      %p290 = por %p288, %p289
      %p291 = scmp.ne.s32.totalorder %s282, %s283
      %p292 = scmp.eq.s32.totalorder %s36, 0
      %p293 = por %p291, %p292
      %p294 = scmp.ne.s32.totalorder %s282, %s283
      %p295 = scmp.eq.s32.totalorder %s37, 1
      %p296 = por %p294, %p295
      %p298 = scmp.ne.s32.totalorder %s283, %s297
      %p299 = scmp.eq.s32.totalorder %s37, 0
      %p300 = por %p298, %p299
      %s301 = ssub.s32 %s31, %s38
      %p302 = scmp.eq.s32.totalorder %s301, 0
      %s304 = sadd.s32 %s303, 1
      %s305 = scalar_select %p302, %s303, %s304
      %p308 = pneg %p302
      %p309 = scmp.eq.s32.totalorder %s31, 1
      %p310 = por %p308, %p309
      %p311 = scmp.ne.s32.totalorder %s303, %s306
      %p312 = scmp.eq.s32.totalorder %s31, 0
      %p313 = por %p311, %p312
      %p314 = scmp.ne.s32.totalorder %s303, %s306
      %p315 = scmp.eq.s32.totalorder %s36, 1
      %p316 = por %p314, %p315
      %p317 = scmp.ne.s32.totalorder %s306, %s307
      %p318 = scmp.eq.s32.totalorder %s36, 0
      %p319 = por %p317, %p318
      %p320 = scmp.ne.s32.totalorder %s306, %s307
      %p321 = scmp.eq.s32.totalorder %s37, 1
      %p322 = por %p320, %p321
      %p324 = scmp.ne.s32.totalorder %s307, %s323
      %p325 = scmp.eq.s32.totalorder %s37, 0
      %p326 = por %p324, %p325
      %s327 = ssub.s32 %s31, %s38
      %p328 = scmp.eq.s32.totalorder %s327, 0
      %s330 = sadd.s32 %s329, 1
      %s331 = scalar_select %p328, %s329, %s330
      %p334 = pneg %p328
      %p335 = scmp.eq.s32.totalorder %s31, 1
      %p336 = por %p334, %p335
      %p337 = scmp.ne.s32.totalorder %s329, %s332
      %p338 = scmp.eq.s32.totalorder %s31, 0
      %p339 = por %p337, %p338
      %p340 = scmp.ne.s32.totalorder %s329, %s332
      %p341 = scmp.eq.s32.totalorder %s36, 1
      %p342 = por %p340, %p341
      %p343 = scmp.ne.s32.totalorder %s332, %s333
      %p344 = scmp.eq.s32.totalorder %s36, 0
      %p345 = por %p343, %p344
      %p346 = scmp.ne.s32.totalorder %s332, %s333
      %p347 = scmp.eq.s32.totalorder %s37, 1
      %p348 = por %p346, %p347
      %p350 = scmp.ne.s32.totalorder %s333, %s349
      %p351 = scmp.eq.s32.totalorder %s37, 0
      %p352 = por %p350, %p351
      %p353 = scmp.le.s32.totalorder 1, %s31
      %p354 = scmp.lt.s32.totalorder %s31, 3
      %p355 = pnand %p353, %p354
      %p356 = pneg %p355
      // Predicated region
      $region9: #{tpu_custom_call.1} parent=5 // pred_check
        _
      $region10: #{tpu_custom_call.1} parent=5 // pred_check_branch
        %358 = sbr.rel (%p355) target = $region12
      $region11: #{tpu_custom_call.1} parent=5 // pred_region
        %s359 = ssub.s32 %s31, 1
        // Predicated region
        $region13: #{tpu_custom_call.1} parent=11 // pred_check
          %p360 = pneg %p104
        $region14: #{tpu_custom_call.1} parent=11 // pred_check_branch
          %362 = sbr.rel (%p360) target = $region16
        $region15: #{tpu_custom_call.1} parent=11 // pred_region
          _
        $region16: #{tpu_custom_call.1} parent=11 // pred_fallthru
          _
        // Predicated region
        $region17: #{tpu_custom_call.1} parent=11 // pred_check
          %p363 = pneg %p125
        $region18: #{tpu_custom_call.1} parent=11 // pred_check_branch
          %365 = sbr.rel (%p363) target = $region20
        $region19: #{tpu_custom_call.1} parent=11 // pred_region
          %s367 = ssub.s32 16, 16
          %368 = vsyncadd [#allocation8], %s367
          %s370 = sshll.u32 [#allocation7], 4
          %s371 = int_to_ptr.vmem [resolvable:$true] %s370
          %373 = dma.hbm_to_vmem [thread:$0]  %s3, 16, %s371, [#allocation8]
        $region20: #{tpu_custom_call.1} parent=11 // pred_fallthru
          _
        // Predicated region
        $region21: #{tpu_custom_call.1} parent=11 // pred_check
          %p374 = pneg %p146
        $region22: #{tpu_custom_call.1} parent=11 // pred_check_branch
          %376 = sbr.rel (%p374) target = $region24
        $region23: #{tpu_custom_call.1} parent=11 // pred_region
          _
        $region24: #{tpu_custom_call.1} parent=11 // pred_fallthru
          _
        // Predicated region
        $region25: #{tpu_custom_call.1} parent=11 // pred_check
          %p377 = pneg %p167
        $region26: #{tpu_custom_call.1} parent=11 // pred_check_branch
          %379 = sbr.rel (%p377) target = $region28
        $region27: #{tpu_custom_call.1} parent=11 // pred_region
          %s381 = ssub.s32 16, 16
          %382 = vsyncadd [#allocation8], %s381
          %s384 = sshll.u32 [#allocation9], 4
          %s385 = int_to_ptr.vmem [resolvable:$true] %s384
          %387 = dma.hbm_to_vmem [thread:$0]  %s5, 16, %s385, [#allocation8]
        $region28: #{tpu_custom_call.1} parent=11 // pred_fallthru
          _
        // Predicated region
        $region29: #{tpu_custom_call.1} parent=11 // pred_check
          %p388 = pneg %p188
        $region30: #{tpu_custom_call.1} parent=11 // pred_check_branch
          %390 = sbr.rel (%p388) target = $region32
        $region31: #{tpu_custom_call.1} parent=11 // pred_region
          _
        $region32: #{tpu_custom_call.1} parent=11 // pred_fallthru
          _
        // Predicated region
        $region33: #{tpu_custom_call.1} parent=11 // pred_check
          %p391 = pneg %p209
        $region34: #{tpu_custom_call.1} parent=11 // pred_check_branch
          %393 = sbr.rel (%p391) target = $region36
        $region35: #{tpu_custom_call.1} parent=11 // pred_region
          %s395 = ssub.s32 768, 768
          %396 = vsyncadd [#allocation11], %s395
          %s397 = sshll.u32 [#allocation10], 4
          %s398 = int_to_ptr.vmem [resolvable:$true] %s397
          %403 = dma.hbm_to_vmem [thread:$0]  %s7, 768, %s398, [#allocation11], 64, 64, 4
        $region36: #{tpu_custom_call.1} parent=11 // pred_fallthru
          _
        // Predicated region
        $region37: #{tpu_custom_call.1} parent=11 // pred_check
          %p404 = pneg %p230
        $region38: #{tpu_custom_call.1} parent=11 // pred_check_branch
          %406 = sbr.rel (%p404) target = $region40
        $region39: #{tpu_custom_call.1} parent=11 // pred_region
          _
        $region40: #{tpu_custom_call.1} parent=11 // pred_fallthru
          _
        // Predicated region
        $region41: #{tpu_custom_call.1} parent=11 // pred_check
          %p407 = pneg %p251
        $region42: #{tpu_custom_call.1} parent=11 // pred_check_branch
          %409 = sbr.rel (%p407) target = $region44
        $region43: #{tpu_custom_call.1} parent=11 // pred_region
          _
        $region44: #{tpu_custom_call.1} parent=11 // pred_fallthru
          _
        // Predicated region
        $region45: #{tpu_custom_call.1} parent=11 // pred_check
          %p410 = pneg %p272
        $region46: #{tpu_custom_call.1} parent=11 // pred_check_branch
          %412 = sbr.rel (%p410) target = $region48
        $region47: #{tpu_custom_call.1} parent=11 // pred_region
          _
        $region48: #{tpu_custom_call.1} parent=11 // pred_fallthru
          _
        // Predicated region
        $region49: #{tpu_custom_call.1} parent=11 // pred_check
          %p413 = pneg %p293
        $region50: #{tpu_custom_call.1} parent=11 // pred_check_branch
          %415 = sbr.rel (%p413) target = $region52
        $region51: #{tpu_custom_call.1} parent=11 // pred_region
          _
        $region52: #{tpu_custom_call.1} parent=11 // pred_fallthru
          _
      $region12: #{tpu_custom_call.1} parent=5 // pred_fallthru
        _
      %p416 = scmp.lt.s32.totalorder %s31, 2
      // Predicated region
      $region53: #{tpu_custom_call.1} parent=5 // pred_check
        %p417 = pneg %p416
      $region54: #{tpu_custom_call.1} parent=5 // pred_check_branch
        %419 = sbr.rel (%p417) target = $region56
      $region55: #{tpu_custom_call.1} parent=5 // pred_region
        // Predicated region
        $region57: #{tpu_custom_call.1} parent=55 // pred_check
          %p420 = pneg %p51
        $region58: #{tpu_custom_call.1} parent=55 // pred_check_branch
          %422 = sbr.rel (%p420) target = $region60
        $region59: #{tpu_custom_call.1} parent=55 // pred_region
          %p423 = scmp.lt.s32.totalorder %s31, 1
          %s424 = scalar_select %p423, %s31, 1
          %s425 = smul.addr %s424, 4
          %s426 = scalar_lea.vmem %s0, %s425
        $region60: #{tpu_custom_call.1} parent=55 // pred_fallthru
          _
        // Predicated region
        $region61: #{tpu_custom_call.1} parent=55 // pred_check
          %p427 = pneg %p77
        $region62: #{tpu_custom_call.1} parent=55 // pred_check_branch
          %429 = sbr.rel (%p427) target = $region64
        $region63: #{tpu_custom_call.1} parent=55 // pred_region
          %s430 = sand.u32 %s67, 1
          %s431 = scalar_lea.sflag [#allocation5], %s430
          %s432 = sand.u32 %s67, 1
          %s433 = smul.addr %s432, 8
          %s434 = scalar_lea.vmem [#allocation4], %s433
          %s436 = ssub.s32 128, 128
          %437 = vsyncadd %s431, %s436
          %s438 = smul.addr %s31, 128
          %s439 = scalar_lea.hbm %s1, %s438
          %s441 = sshll.u32 %s434, 4
          %s442 = int_to_ptr.vmem [resolvable:$true] %s441
          %444 = dma.hbm_to_vmem [thread:$0]  %s439, 128, %s442, %s431
        $region64: #{tpu_custom_call.1} parent=55 // pred_fallthru
          _
      $region56: #{tpu_custom_call.1} parent=5 // pred_fallthru
        _
      %p445 = scmp.le.s32.totalorder 1, %s31
      %p446 = scmp.lt.s32.totalorder %s31, 3
      %p447 = pnand %p445, %p446
      %p448 = pneg %p447
      // Predicated region
      $region65: #{tpu_custom_call.1} parent=5 // pred_check
        _
      $region66: #{tpu_custom_call.1} parent=5 // pred_check_branch
        %450 = sbr.rel (%p447) target = $region68
      $region67: #{tpu_custom_call.1} parent=5 // pred_region
        %s451 = ssub.s32 %s31, 1
        %s452 = sand.u32 %s70, 1
        %s453 = scalar_lea.sflag [#allocation5], %s452
        %s454 = sand.u32 %s70, 1
        %s455 = smul.addr %s454, 8
        %s456 = scalar_lea.vmem [#allocation4], %s455
        // Predicated region
        $region69: #{tpu_custom_call.1} parent=67 // pred_check
          %p457 = pneg %p83
        $region70: #{tpu_custom_call.1} parent=67 // pred_check_branch
          %459 = sbr.rel (%p457) target = $region72
        $region71: #{tpu_custom_call.1} parent=67 // pred_region
          %460 = dma.done %s453, 128
        $region72: #{tpu_custom_call.1} parent=67 // pred_fallthru
          _
        // Predicated region
        $region73: #{tpu_custom_call.1} parent=67 // pred_check
          %p461 = pneg %p125
        $region74: #{tpu_custom_call.1} parent=67 // pred_check_branch
          %463 = sbr.rel (%p461) target = $region76
        $region75: #{tpu_custom_call.1} parent=67 // pred_region
          %464 = dma.done [#allocation8], 16
        $region76: #{tpu_custom_call.1} parent=67 // pred_fallthru
          _
        // Predicated region
        $region77: #{tpu_custom_call.1} parent=67 // pred_check
          %p465 = pneg %p167
        $region78: #{tpu_custom_call.1} parent=67 // pred_check_branch
          %467 = sbr.rel (%p465) target = $region80
        $region79: #{tpu_custom_call.1} parent=67 // pred_region
          %468 = dma.done [#allocation8], 16
        $region80: #{tpu_custom_call.1} parent=67 // pred_fallthru
          _
        // Predicated region
        $region81: #{tpu_custom_call.1} parent=67 // pred_check
          %p469 = pneg %p209
        $region82: #{tpu_custom_call.1} parent=67 // pred_check_branch
          %471 = sbr.rel (%p469) target = $region84
        $region83: #{tpu_custom_call.1} parent=67 // pred_region
          %472 = dma.done [#allocation11], 768
        $region84: #{tpu_custom_call.1} parent=67 // pred_fallthru
          _
        %p473 = scmp.lt.s32.totalorder %s36, 1
        %s474 = scalar_select %p473, %s36, 1
        %s475 = smul.addr %s474, 4
        %s476 = scalar_lea.vmem %s0, %s475
        %p477 = pneg %p57
        %p478 = pneg %p54
        %s479 = sand.u32 %s70, 1
        %s480 = scalar_lea.sflag [#allocation5], %s479
        %s481 = sand.u32 %s70, 1
        %s482 = smul.addr %s481, 8
        %s483 = scalar_lea.vmem [#allocation4], %s482
        %p484 = pneg %p83
        %p485 = pneg %p80
        %p486 = pneg %p104
        %p487 = pneg %p101
        %p488 = pneg %p125
        %p489 = pneg %p122
        %p490 = pneg %p146
        %p491 = pneg %p143
        %p492 = pneg %p167
        %p493 = pneg %p164
        %p494 = pneg %p188
        %p495 = pneg %p185
        %p496 = pneg %p209
        %p497 = pneg %p206
        %p498 = pneg %p230
        %p499 = pneg %p227
        %p500 = pneg %p251
        %p501 = pneg %p248
        %p502 = pneg %p272
        %p503 = pneg %p269
        %p504 = pneg %p293
        %p505 = pneg %p290
        %p506 = pneg %p319
        %p507 = pneg %p316
        %s508 = sand.u32 %s306, 1
        %s509 = scalar_lea.sflag [#allocation6], %s508
        %s510 = sand.u32 %s306, 1
        %s511 = smul.addr %s510, 8
        %s512 = scalar_lea.vmem [#allocation12], %s511
        %p513 = pneg %p345
        %p514 = pneg %p342
        %s515 = sand.u32 %s332, 1
        %s516 = scalar_lea.sflag [#allocation14], %s515
        %s517 = sand.u32 %s332, 1
        %s518 = smul.addr %s517, 8
        %s519 = scalar_lea.vmem [#allocation13], %s518
        %p520 = scmp.lt.s32.totalorder %s36, 1
        %s521 = scalar_select %p520, %s36, 1
        %s522 = smul.addr %s521, 4
        %s523 = scalar_lea.vmem %s0, %s522
        %v526 = vld [vmem:[%s456] sm:$0xff]
        %v527 = vld [vmem:[%s523] sm:$0xf]
        %vm528 = vcmask 261120
        %v529 = vsel %vm528, %v526, 0.0
        %530 = vadd.xlane.f32.xlu0 %v529
        %v531 = vpop.xlane.xlu0 %530
        %v532 = vrcp.pop 32.0
        %v533 = vmul.f32 %v531, %v532
        %v534 = vsub.f32 %v526, %v533
        %v535 = vmul.f32 %v534, %v534
        %v536 = vsel %vm528, %v535, 0.0
        %537 = vadd.xlane.f32.xlu0 %v536
        %v538 = vpop.xlane.xlu0 %537
        %v539 = vmul.f32 %v538, %v532
        %v540 = vadd.f32 %v539, 1e-05
        %v541 = vrsqrt.pop %v540
        %v542 = vmul.f32 %v534, %v541
        %v543 = vld [vmem:[%s2] sm:$0x1]
        %v545 = vlaneseq
        %v546 = vshrl.u32 %v545, 7
        %v547 = vsub.s32 0, %v546
        %v548 = vrot.slane %v543, %v547
        %v550 = vmul.f32 %v542, %v548
        %v551 = vld [vmem:[#allocation7] sm:$0x1]
        %v553 = vlaneseq
        %v554 = vshrl.u32 %v553, 7
        %v555 = vsub.s32 0, %v554
        %v556 = vrot.slane %v551, %v555
        %v558 = vadd.f32 %v550, %v556
        %v559 = vpack.c.bf16 %v558, %v558
        %vm560 = vcmask 257024
        %561 = vst.msk [vmem:[#allocation3] sm:$0xf] %vm560, %v559
        %v562 = vld [vmem:[%s4] sm:$0xf]
        %v563 = vld [vmem:[%s4 + $0x4] sm:$0xf]
        %v564 = vld [vmem:[%s4 + $0x8] sm:$0xf]
        %v565 = vld [vmem:[%s4 + $0xc] sm:$0xf]
        %v566 = vld [vmem:[#allocation9] sm:$0x1]
        %v568 = vlaneseq
        %v569 = vshrl.u32 %v568, 7
        %v570 = vsub.s32 0, %v569
        %v571 = vrot.slane %v566, %v570
        %v577 = vunpack.c.l.b16 %v562
        %v578 = vunpack.c.l.b16 %v563
        %v579 = vunpack.c.l.b16 %v564
        %v580 = vunpack.c.l.b16 %v565
        %v581 = vpack.c.b16 %v578, %v577
        %v582 = vpack.c.b16 %v580, %v579
        %v586 = vsel %vm528, %v559, 0
        %588 = vmatprep.subr.bf16.mxu0 0
        %589 = vmatpush1.bf16.msra.mxu0 %v581
        %590 = vmatprep.subr.bf16.mxu0 0
        %591 = vmatpush1.bf16.msra.mxu0 %v582
        %592 = vmatprep.subr.bf16.mxu0 0
        %593 = vmatpush1.bf16.msra.mxu0 0
        %594 = vmatprep.subr.bf16.mxu0 0
        %595 = vmatpush1.bf16.msra.mxu0 0
        %596 = vmatprep.subr.bf16.mxu0 0
        %597 = vmatpush1.bf16.msra.mxu0 0
        %598 = vmatprep.subr.bf16.mxu0 0
        %599 = vmatpush1.bf16.msra.mxu0 0
        %600 = vmatprep.subr.bf16.mxu0 0
        %601 = vmatpush1.bf16.msra.mxu0 0
        %602 = vmatprep.subr.bf16.mxu0 0
        %603 = vmatpush1.bf16.msra.mxu0 0
        %604 = vmatprep.subr.bf16.mxu0 0
        %605 = vmatpush1.bf16.msra.mxu0 0
        %606 = vmatprep.subr.bf16.mxu0 0
        %607 = vmatpush1.bf16.msra.mxu0 0
        %608 = vmatprep.subr.bf16.mxu0 0
        %609 = vmatpush1.bf16.msra.mxu0 0
        %610 = vmatprep.subr.bf16.mxu0 0
        %611 = vmatpush1.bf16.msra.mxu0 0
        %612 = vmatprep.subr.bf16.mxu0 0
        %613 = vmatpush1.bf16.msra.mxu0 0
        %614 = vmatprep.subr.bf16.mxu0 0
        %615 = vmatpush1.bf16.msra.mxu0 0
        %616 = vmatprep.subr.bf16.mxu0 0
        %617 = vmatpush1.bf16.msra.mxu0 0
        %618 = vmatprep.subr.bf16.mxu0 0
        %619 = vmatpush1.bf16.msra.mxu0 0
        %620 = vmatprep.mubr.bf16.mxu0 0
        %621 = vmatmul.mubr.bf16.gmra.mrb[0].mxu0 %v586
        %v622 = vpop.f32.mrb[0].mxu0
        %v623 = vadd.f32 %v571, %v622
        %v624 = vpop.f32.mrb[0].mxu0
        %v625 = vpop.f32.mrb[0].mxu0
        %v626 = vpop.f32.mrb[0].mxu0
        %627 = vdwg.mxu0
        %v628 = vpack.c.bf16 %v623, %v623
        %630 = vset.pattern.permute.xlu0 0
        %631 = vperm.xlu0 %630, %v527
        %v632 = vpop.permute.xlu0 %631
        %v635 = vunpack.c.l.s4 839922192
        %v636 = vunpack.c.0.s8 %v635
        %v637 = vlaneseq
        %v638 = vshrl.u32 %v637, 7
        %v639 = vsub.s32 %v636, %v638
        %v640 = vrot.slane %v632, %v639
        %vm641 = vcmask 122880
        %vm642 = vsmask.f32 256
        %vm643 = vmand %vm641, %vm642
        %v644 = vld [vmem:[#allocation2] sm:$0x1]
        %v645 = vsel %vm643, 0, %v644
        %646 = vst [vmem:[#allocation2] sm:$0x1] %v645
        %vm647 = vsmask.f32 7938
        %vm648 = vmand %vm641, %vm647
        %v649 = vld [vmem:[#allocation2 + $0x4] sm:$0x1]
        %v650 = vsel %vm648, 0, %v649
        %651 = vst [vmem:[#allocation2 + $0x4] sm:$0x1] %v650
        %v652 = vmul.bf16 %v628, %v640
        %v654 = vunpack.c.l.b16 %v652
        %v655 = vpack.c.b16 %v654, %v654
        %v657 = vshrl.u32 %v655, 16
        %v659 = vrot.slane %v657, 7
        %v660 = vshll.u32 %v655, 16
        %v662 = vor.u32 %v659, %v660
        %v663 = vrot.slane %v659, 4
        %vm666 = vcmask 125952
        %vm667 = vmand %vm666, %vm647
        %v668 = vld [vmem:[#allocation2] sm:$0xf]
        %v669 = vsel %vm667, %v662, %v668
        %670 = vst [vmem:[#allocation2] sm:$0xf] %v669
        %v671 = vld [vmem:[#allocation2 + $0x4] sm:$0x1]
        %v672 = vsel %vm643, %v663, %v671
        %673 = vst [vmem:[#allocation2 + $0x4] sm:$0x1] %v672
        %v674 = vld [vmem:[%s6] sm:$0xf]
        %v675 = vld [vmem:[%s6 + $0x4] sm:$0xf]
        %v676 = vld [vmem:[%s6 + $0x8] sm:$0xf]
        %v677 = vld [vmem:[%s6 + $0xc] sm:$0xf]
        %v678 = vld [vmem:[%s6 + $0x10] sm:$0xf]
        %v679 = vld [vmem:[%s6 + $0x14] sm:$0xf]
        %v680 = vld [vmem:[#allocation10] sm:$0xf]
        %v681 = vld [vmem:[#allocation10 + $0x4] sm:$0xf]
        %v682 = vld [vmem:[#allocation10 + $0x8] sm:$0xf]
        %v683 = vld [vmem:[#allocation10 + $0xc] sm:$0xf]
        %v684 = vld [vmem:[#allocation10 + $0x10] sm:$0xf]
        %v685 = vld [vmem:[#allocation10 + $0x14] sm:$0xf]
        %v686 = vld [vmem:[%s8] sm:$0x1]
        %v687 = vld [vmem:[%s9] sm:$0x1]
        %v688 = vld [vmem:[#allocation2] sm:$0xf]
        %v691 = vunpack.c.l.b16 %v674
        %v692 = vunpack.c.l.b16 %v675
        %v693 = vpack.c.b16 %v692, %v691
        %vm695 = vcmask 130048
        %v697 = vsel %vm695, %v688, 0
        %699 = vmatprep.subr.bf16.mxu0 0
        %700 = vmatpush1.bf16.msra.mxu0 %v693
        %701 = vmatprep.subr.bf16.mxu0 0
        %702 = vmatpush1.bf16.msra.mxu0 0
        %703 = vmatprep.subr.bf16.mxu0 0
        %704 = vmatpush1.bf16.msra.mxu0 0
        %705 = vmatprep.subr.bf16.mxu0 0
        %706 = vmatpush1.bf16.msra.mxu0 0
        %707 = vmatprep.subr.bf16.mxu0 0
        %708 = vmatpush1.bf16.msra.mxu0 0
        %709 = vmatprep.subr.bf16.mxu0 0
        %710 = vmatpush1.bf16.msra.mxu0 0
        %711 = vmatprep.subr.bf16.mxu0 0
        %712 = vmatpush1.bf16.msra.mxu0 0
        %713 = vmatprep.subr.bf16.mxu0 0
        %714 = vmatpush1.bf16.msra.mxu0 0
        %715 = vmatprep.subr.bf16.mxu0 0
        %716 = vmatpush1.bf16.msra.mxu0 0
        %717 = vmatprep.subr.bf16.mxu0 0
        %718 = vmatpush1.bf16.msra.mxu0 0
        %719 = vmatprep.subr.bf16.mxu0 0
        %720 = vmatpush1.bf16.msra.mxu0 0
        %721 = vmatprep.subr.bf16.mxu0 0
        %722 = vmatpush1.bf16.msra.mxu0 0
        %723 = vmatprep.subr.bf16.mxu0 0
        %724 = vmatpush1.bf16.msra.mxu0 0
        %725 = vmatprep.subr.bf16.mxu0 0
        %726 = vmatpush1.bf16.msra.mxu0 0
        %727 = vmatprep.subr.bf16.mxu0 0
        %728 = vmatpush1.bf16.msra.mxu0 0
        %729 = vmatprep.subr.bf16.mxu0 0
        %730 = vmatpush1.bf16.msra.mxu0 0
        %731 = vmatprep.mubr.bf16.mxu0 0
        %732 = vmatmul.mubr.bf16.gmra.mrb[0].mxu0 %v697
        %v733 = vpop.f32.mrb[0].mxu0
        %v734 = vadd.f32 0.0, %v733
        %v735 = vpop.f32.mrb[0].mxu0
        %v736 = vpop.f32.mrb[0].mxu0
        %v737 = vpop.f32.mrb[0].mxu0
        %738 = vdwg.mxu0
        %v740 = vlaneseq
        %v741 = vshrl.u32 %v740, 7
        %v742 = vsub.s32 0, %v741
        %v743 = vrot.slane %v686, %v742
        %v745 = vadd.f32 %v743, %v734
        %v748 = vunpack.c.l.b16 %v680
        %v749 = vunpack.c.l.b16 %v681
        %v750 = vpack.c.b16 %v749, %v748
        %752 = vmatprep.subr.bf16.mxu0 0
        %753 = vmatpush1.bf16.msra.mxu0 %v750
        %754 = vmatprep.subr.bf16.mxu0 0
        %755 = vmatpush1.bf16.msra.mxu0 0
        %756 = vmatprep.subr.bf16.mxu0 0
        %757 = vmatpush1.bf16.msra.mxu0 0
        %758 = vmatprep.subr.bf16.mxu0 0
        %759 = vmatpush1.bf16.msra.mxu0 0
        %760 = vmatprep.subr.bf16.mxu0 0
        %761 = vmatpush1.bf16.msra.mxu0 0
        %762 = vmatprep.subr.bf16.mxu0 0
        %763 = vmatpush1.bf16.msra.mxu0 0
        %764 = vmatprep.subr.bf16.mxu0 0
        %765 = vmatpush1.bf16.msra.mxu0 0
        %766 = vmatprep.subr.bf16.mxu0 0
        %767 = vmatpush1.bf16.msra.mxu0 0
        %768 = vmatprep.subr.bf16.mxu0 0
        %769 = vmatpush1.bf16.msra.mxu0 0
        %770 = vmatprep.subr.bf16.mxu0 0
        %771 = vmatpush1.bf16.msra.mxu0 0
        %772 = vmatprep.subr.bf16.mxu0 0
        %773 = vmatpush1.bf16.msra.mxu0 0
        %774 = vmatprep.subr.bf16.mxu0 0
        %775 = vmatpush1.bf16.msra.mxu0 0
        %776 = vmatprep.subr.bf16.mxu0 0
        %777 = vmatpush1.bf16.msra.mxu0 0
        %778 = vmatprep.subr.bf16.mxu0 0
        %779 = vmatpush1.bf16.msra.mxu0 0
        %780 = vmatprep.subr.bf16.mxu0 0
        %781 = vmatpush1.bf16.msra.mxu0 0
        %782 = vmatprep.subr.bf16.mxu0 0
        %783 = vmatpush1.bf16.msra.mxu0 0
        %784 = vmatprep.mubr.bf16.mxu0 0
        %785 = vmatmul.mubr.bf16.gmra.mrb[0].mxu0 %v697
        %v786 = vpop.f32.mrb[0].mxu0
        %v787 = vadd.f32 0.0, %v786
        %v788 = vpop.f32.mrb[0].mxu0
        %v789 = vpop.f32.mrb[0].mxu0
        %v790 = vpop.f32.mrb[0].mxu0
        %791 = vdwg.mxu0
        %v793 = vlaneseq
        %v794 = vshrl.u32 %v793, 7
        %v795 = vsub.s32 0, %v794
        %v796 = vrot.slane %v687, %v795
        %v798 = vadd.f32 %v796, %v787
        %v799 = vld [vmem:[#allocation2] sm:$0xf]
        %v800 = vld [vmem:[#allocation2 + $0x4] sm:$0x1]
        %v803 = vunpack.c.l.b16 %v799
        %v804 = vunpack.c.l.b16 %v800
        %v805 = vpack.c.b16 %v804, %v803
        %v807 = vshrl.u32 %v805, 16
        %v809 = vshll.u32 %v805, 16
        %v811 = vrot.slane %v809, 1
        %v812 = vor.u32 %v807, %v811
        %v815 = vunpack.c.l.b16 %v676
        %v816 = vunpack.c.l.b16 %v677
        %v817 = vpack.c.b16 %v816, %v815
        %v820 = vsel %vm695, %v812, 0
        %822 = vmatprep.subr.bf16.mxu0 0
        %823 = vmatpush1.bf16.msra.mxu0 %v817
        %824 = vmatprep.subr.bf16.mxu0 0
        %825 = vmatpush1.bf16.msra.mxu0 0
        %826 = vmatprep.subr.bf16.mxu0 0
        %827 = vmatpush1.bf16.msra.mxu0 0
        %828 = vmatprep.subr.bf16.mxu0 0
        %829 = vmatpush1.bf16.msra.mxu0 0
        %830 = vmatprep.subr.bf16.mxu0 0
        %831 = vmatpush1.bf16.msra.mxu0 0
        %832 = vmatprep.subr.bf16.mxu0 0
        %833 = vmatpush1.bf16.msra.mxu0 0
        %834 = vmatprep.subr.bf16.mxu0 0
        %835 = vmatpush1.bf16.msra.mxu0 0
        %836 = vmatprep.subr.bf16.mxu0 0
        %837 = vmatpush1.bf16.msra.mxu0 0
        %838 = vmatprep.subr.bf16.mxu0 0
        %839 = vmatpush1.bf16.msra.mxu0 0
        %840 = vmatprep.subr.bf16.mxu0 0
        %841 = vmatpush1.bf16.msra.mxu0 0
        %842 = vmatprep.subr.bf16.mxu0 0
        %843 = vmatpush1.bf16.msra.mxu0 0
        %844 = vmatprep.subr.bf16.mxu0 0
        %845 = vmatpush1.bf16.msra.mxu0 0
        %846 = vmatprep.subr.bf16.mxu0 0
        %847 = vmatpush1.bf16.msra.mxu0 0
        %848 = vmatprep.subr.bf16.mxu0 0
        %849 = vmatpush1.bf16.msra.mxu0 0
        %850 = vmatprep.subr.bf16.mxu0 0
        %851 = vmatpush1.bf16.msra.mxu0 0
        %852 = vmatprep.subr.bf16.mxu0 0
        %853 = vmatpush1.bf16.msra.mxu0 0
        %854 = vmatprep.mubr.bf16.mxu0 0
        %855 = vmatmul.mubr.bf16.gmra.mrb[0].mxu0 %v820
        %v856 = vpop.f32.mrb[0].mxu0
        %v857 = vadd.f32 0.0, %v856
        %v858 = vpop.f32.mrb[0].mxu0
        %v859 = vpop.f32.mrb[0].mxu0
        %v860 = vpop.f32.mrb[0].mxu0
        %861 = vdwg.mxu0
        %v862 = vadd.f32 %v745, %v857
        %v865 = vunpack.c.l.b16 %v682
        %v866 = vunpack.c.l.b16 %v683
        %v867 = vpack.c.b16 %v866, %v865
        %869 = vmatprep.subr.bf16.mxu0 0
        %870 = vmatpush1.bf16.msra.mxu0 %v867
        %871 = vmatprep.subr.bf16.mxu0 0
        %872 = vmatpush1.bf16.msra.mxu0 0
        %873 = vmatprep.subr.bf16.mxu0 0
        %874 = vmatpush1.bf16.msra.mxu0 0
        %875 = vmatprep.subr.bf16.mxu0 0
        %876 = vmatpush1.bf16.msra.mxu0 0
        %877 = vmatprep.subr.bf16.mxu0 0
        %878 = vmatpush1.bf16.msra.mxu0 0
        %879 = vmatprep.subr.bf16.mxu0 0
        %880 = vmatpush1.bf16.msra.mxu0 0
        %881 = vmatprep.subr.bf16.mxu0 0
        %882 = vmatpush1.bf16.msra.mxu0 0
        %883 = vmatprep.subr.bf16.mxu0 0
        %884 = vmatpush1.bf16.msra.mxu0 0
        %885 = vmatprep.subr.bf16.mxu0 0
        %886 = vmatpush1.bf16.msra.mxu0 0
        %887 = vmatprep.subr.bf16.mxu0 0
        %888 = vmatpush1.bf16.msra.mxu0 0
        %889 = vmatprep.subr.bf16.mxu0 0
        %890 = vmatpush1.bf16.msra.mxu0 0
        %891 = vmatprep.subr.bf16.mxu0 0
        %892 = vmatpush1.bf16.msra.mxu0 0
        %893 = vmatprep.subr.bf16.mxu0 0
        %894 = vmatpush1.bf16.msra.mxu0 0
        %895 = vmatprep.subr.bf16.mxu0 0
        %896 = vmatpush1.bf16.msra.mxu0 0
        %897 = vmatprep.subr.bf16.mxu0 0
        %898 = vmatpush1.bf16.msra.mxu0 0
        %899 = vmatprep.subr.bf16.mxu0 0
        %900 = vmatpush1.bf16.msra.mxu0 0
        %901 = vmatprep.mubr.bf16.mxu0 0
        %902 = vmatmul.mubr.bf16.gmra.mrb[0].mxu0 %v820
        %v903 = vpop.f32.mrb[0].mxu0
        %v904 = vadd.f32 0.0, %v903
        %v905 = vpop.f32.mrb[0].mxu0
        %v906 = vpop.f32.mrb[0].mxu0
        %v907 = vpop.f32.mrb[0].mxu0
        %908 = vdwg.mxu0
        %v909 = vadd.f32 %v798, %v904
        %v910 = vld [vmem:[#allocation2] sm:$0xe]
        %v912 = vunpack.c.l.b16 %v910
        %v913 = vpack.c.b16 %v804, %v912
        %v914 = vrot.slane %v913, 1
        %v917 = vunpack.c.l.b16 %v678
        %v918 = vunpack.c.l.b16 %v679
        %v919 = vpack.c.b16 %v918, %v917
        %v922 = vsel %vm695, %v914, 0
        %924 = vmatprep.subr.bf16.mxu0 0
        %925 = vmatpush1.bf16.msra.mxu0 %v919
        %926 = vmatprep.subr.bf16.mxu0 0
        %927 = vmatpush1.bf16.msra.mxu0 0
        %928 = vmatprep.subr.bf16.mxu0 0
        %929 = vmatpush1.bf16.msra.mxu0 0
        %930 = vmatprep.subr.bf16.mxu0 0
        %931 = vmatpush1.bf16.msra.mxu0 0
        %932 = vmatprep.subr.bf16.mxu0 0
        %933 = vmatpush1.bf16.msra.mxu0 0
        %934 = vmatprep.subr.bf16.mxu0 0
        %935 = vmatpush1.bf16.msra.mxu0 0
        %936 = vmatprep.subr.bf16.mxu0 0
        %937 = vmatpush1.bf16.msra.mxu0 0
        %938 = vmatprep.subr.bf16.mxu0 0
        %939 = vmatpush1.bf16.msra.mxu0 0
        %940 = vmatprep.subr.bf16.mxu0 0
        %941 = vmatpush1.bf16.msra.mxu0 0
        %942 = vmatprep.subr.bf16.mxu0 0
        %943 = vmatpush1.bf16.msra.mxu0 0
        %944 = vmatprep.subr.bf16.mxu0 0
        %945 = vmatpush1.bf16.msra.mxu0 0
        %946 = vmatprep.subr.bf16.mxu0 0
        %947 = vmatpush1.bf16.msra.mxu0 0
        %948 = vmatprep.subr.bf16.mxu0 0
        %949 = vmatpush1.bf16.msra.mxu0 0
        %950 = vmatprep.subr.bf16.mxu0 0
        %951 = vmatpush1.bf16.msra.mxu0 0
        %952 = vmatprep.subr.bf16.mxu0 0
        %953 = vmatpush1.bf16.msra.mxu0 0
        %954 = vmatprep.subr.bf16.mxu0 0
        %955 = vmatpush1.bf16.msra.mxu0 0
        %956 = vmatprep.mubr.bf16.mxu0 0
        %957 = vmatmul.mubr.bf16.gmra.mrb[0].mxu0 %v922
        %v958 = vpop.f32.mrb[0].mxu0
        %v959 = vadd.f32 0.0, %v958
        %v960 = vpop.f32.mrb[0].mxu0
        %v961 = vpop.f32.mrb[0].mxu0
        %v962 = vpop.f32.mrb[0].mxu0
        %963 = vdwg.mxu0
        %v964 = vadd.f32 %v862, %v959
        %v967 = vunpack.c.l.b16 %v684
        %v968 = vunpack.c.l.b16 %v685
        %v969 = vpack.c.b16 %v968, %v967
        %971 = vmatprep.subr.bf16.mxu0 0
        %972 = vmatpush1.bf16.msra.mxu0 %v969
        %973 = vmatprep.subr.bf16.mxu0 0
        %974 = vmatpush1.bf16.msra.mxu0 0
        %975 = vmatprep.subr.bf16.mxu0 0
        %976 = vmatpush1.bf16.msra.mxu0 0
        %977 = vmatprep.subr.bf16.mxu0 0
        %978 = vmatpush1.bf16.msra.mxu0 0
        %979 = vmatprep.subr.bf16.mxu0 0
        %980 = vmatpush1.bf16.msra.mxu0 0
        %981 = vmatprep.subr.bf16.mxu0 0
        %982 = vmatpush1.bf16.msra.mxu0 0
        %983 = vmatprep.subr.bf16.mxu0 0
        %984 = vmatpush1.bf16.msra.mxu0 0
        %985 = vmatprep.subr.bf16.mxu0 0
        %986 = vmatpush1.bf16.msra.mxu0 0
        %987 = vmatprep.subr.bf16.mxu0 0
        %988 = vmatpush1.bf16.msra.mxu0 0
        %989 = vmatprep.subr.bf16.mxu0 0
        %990 = vmatpush1.bf16.msra.mxu0 0
        %991 = vmatprep.subr.bf16.mxu0 0
        %992 = vmatpush1.bf16.msra.mxu0 0
        %993 = vmatprep.subr.bf16.mxu0 0
        %994 = vmatpush1.bf16.msra.mxu0 0
        %995 = vmatprep.subr.bf16.mxu0 0
        %996 = vmatpush1.bf16.msra.mxu0 0
        %997 = vmatprep.subr.bf16.mxu0 0
        %998 = vmatpush1.bf16.msra.mxu0 0
        %999 = vmatprep.subr.bf16.mxu0 0
        %1000 = vmatpush1.bf16.msra.mxu0 0
        %1001 = vmatprep.subr.bf16.mxu0 0
        %1002 = vmatpush1.bf16.msra.mxu0 0
        %1003 = vmatprep.mubr.bf16.mxu0 0
        %1004 = vmatmul.mubr.bf16.gmra.mrb[0].mxu0 %v922
        %v1005 = vpop.f32.mrb[0].mxu0
        %v1006 = vadd.f32 0.0, %v1005
        %v1007 = vpop.f32.mrb[0].mxu0
        %v1008 = vpop.f32.mrb[0].mxu0
        %v1009 = vpop.f32.mrb[0].mxu0
        %1010 = vdwg.mxu0
        %v1011 = vadd.f32 %v909, %v1006
        %v1012 = vpack.c.bf16 %v964, %v964
        %v1013 = vpack.c.bf16 %v1011, %v1011
        %v1014 = vxor.u32 %v1013, 2147516416
        %v1016 = vmul.bf16 %v1014, 1069105081
        %v1017 = vpow.bf16.pop %v1016
        %v1018 = vadd.bf16 %v1017, 1065369472
        %v1019 = vrcp.bf16.pop %v1018
        %v1020 = vmul.bf16 1065369472, %v1019
        %v1021 = vmul.bf16 %v1012, %v1020
        %v1022 = vmul.bf16 %v1021, %v640
        %v1024 = vunpack.c.l.b16 %v1022
        %v1025 = vpack.c.b16 %v1024, %v1024
        %v1027 = vshrl.u32 %v1025, 16
        %v1029 = vrot.slane %v1027, 7
        %v1030 = vshll.u32 %v1025, 16
        %v1032 = vor.u32 %v1029, %v1030
        %v1033 = vrot.slane %v1029, 4
        %v1036 = vsel %vm667, %v1032, %v799
        %1037 = vst [vmem:[#allocation2] sm:$0xf] %v1036
        %v1038 = vld [vmem:[#allocation2 + $0x4] sm:$0x1]
        %v1039 = vsel %vm643, %v1033, %v1038
        %1040 = vst [vmem:[#allocation2 + $0x4] sm:$0x1] %v1039
        %s1041 = scalar_lea.vmem %s6, 24
        %v1042 = vld [vmem:[%s1041] sm:$0xf]
        %v1043 = vld [vmem:[%s1041 + $0x4] sm:$0xf]
        %v1044 = vld [vmem:[%s1041 + $0x8] sm:$0xf]
        %v1045 = vld [vmem:[%s1041 + $0xc] sm:$0xf]
        %v1046 = vld [vmem:[%s1041 + $0x10] sm:$0xf]
        %v1047 = vld [vmem:[%s1041 + $0x14] sm:$0xf]
        %s1048 = scalar_lea.vmem [#allocation10], 24
        %v1049 = vld [vmem:[%s1048] sm:$0xf]
        %v1050 = vld [vmem:[%s1048 + $0x4] sm:$0xf]
        %v1051 = vld [vmem:[%s1048 + $0x8] sm:$0xf]
        %v1052 = vld [vmem:[%s1048 + $0xc] sm:$0xf]
        %v1053 = vld [vmem:[%s1048 + $0x10] sm:$0xf]
        %v1054 = vld [vmem:[%s1048 + $0x14] sm:$0xf]
        %s1055 = scalar_lea.vmem %s8, 1
        %v1056 = vld [vmem:[%s1055] sm:$0x1]
        %s1057 = scalar_lea.vmem %s9, 1
        %v1058 = vld [vmem:[%s1057] sm:$0x1]
        %v1059 = vld [vmem:[#allocation2] sm:$0xf]
        %v1062 = vunpack.c.l.b16 %v1042
        %v1063 = vunpack.c.l.b16 %v1043
        %v1064 = vpack.c.b16 %v1063, %v1062
        %v1067 = vsel %vm695, %v1059, 0
        %1069 = vmatprep.subr.bf16.mxu0 0
        %1070 = vmatpush1.bf16.msra.mxu0 %v1064
        %1071 = vmatprep.subr.bf16.mxu0 0
        %1072 = vmatpush1.bf16.msra.mxu0 0
        %1073 = vmatprep.subr.bf16.mxu0 0
        %1074 = vmatpush1.bf16.msra.mxu0 0
        %1075 = vmatprep.subr.bf16.mxu0 0
        %1076 = vmatpush1.bf16.msra.mxu0 0
        %1077 = vmatprep.subr.bf16.mxu0 0
        %1078 = vmatpush1.bf16.msra.mxu0 0
        %1079 = vmatprep.subr.bf16.mxu0 0
        %1080 = vmatpush1.bf16.msra.mxu0 0
        %1081 = vmatprep.subr.bf16.mxu0 0
        %1082 = vmatpush1.bf16.msra.mxu0 0
        %1083 = vmatprep.subr.bf16.mxu0 0
        %1084 = vmatpush1.bf16.msra.mxu0 0
        %1085 = vmatprep.subr.bf16.mxu0 0
        %1086 = vmatpush1.bf16.msra.mxu0 0
        %1087 = vmatprep.subr.bf16.mxu0 0
        %1088 = vmatpush1.bf16.msra.mxu0 0
        %1089 = vmatprep.subr.bf16.mxu0 0
        %1090 = vmatpush1.bf16.msra.mxu0 0
        %1091 = vmatprep.subr.bf16.mxu0 0
        %1092 = vmatpush1.bf16.msra.mxu0 0
        %1093 = vmatprep.subr.bf16.mxu0 0
        %1094 = vmatpush1.bf16.msra.mxu0 0
        %1095 = vmatprep.subr.bf16.mxu0 0
        %1096 = vmatpush1.bf16.msra.mxu0 0
        %1097 = vmatprep.subr.bf16.mxu0 0
        %1098 = vmatpush1.bf16.msra.mxu0 0
        %1099 = vmatprep.subr.bf16.mxu0 0
        %1100 = vmatpush1.bf16.msra.mxu0 0
        %1101 = vmatprep.mubr.bf16.mxu0 0
        %1102 = vmatmul.mubr.bf16.gmra.mrb[0].mxu0 %v1067
        %v1103 = vpop.f32.mrb[0].mxu0
        %v1104 = vadd.f32 0.0, %v1103
        %v1105 = vpop.f32.mrb[0].mxu0
        %v1106 = vpop.f32.mrb[0].mxu0
        %v1107 = vpop.f32.mrb[0].mxu0
        %1108 = vdwg.mxu0
        %v1110 = vlaneseq
        %v1111 = vshrl.u32 %v1110, 7
        %v1112 = vsub.s32 0, %v1111
        %v1113 = vrot.slane %v1056, %v1112
        %v1115 = vadd.f32 %v1113, %v1104
        %v1118 = vunpack.c.l.b16 %v1049
        %v1119 = vunpack.c.l.b16 %v1050
        %v1120 = vpack.c.b16 %v1119, %v1118
        %1122 = vmatprep.subr.bf16.mxu0 0
        %1123 = vmatpush1.bf16.msra.mxu0 %v1120
        %1124 = vmatprep.subr.bf16.mxu0 0
        %1125 = vmatpush1.bf16.msra.mxu0 0
        %1126 = vmatprep.subr.bf16.mxu0 0
        %1127 = vmatpush1.bf16.msra.mxu0 0
        %1128 = vmatprep.subr.bf16.mxu0 0
        %1129 = vmatpush1.bf16.msra.mxu0 0
        %1130 = vmatprep.subr.bf16.mxu0 0
        %1131 = vmatpush1.bf16.msra.mxu0 0
        %1132 = vmatprep.subr.bf16.mxu0 0
        %1133 = vmatpush1.bf16.msra.mxu0 0
        %1134 = vmatprep.subr.bf16.mxu0 0
        %1135 = vmatpush1.bf16.msra.mxu0 0
        %1136 = vmatprep.subr.bf16.mxu0 0
        %1137 = vmatpush1.bf16.msra.mxu0 0
        %1138 = vmatprep.subr.bf16.mxu0 0
        %1139 = vmatpush1.bf16.msra.mxu0 0
        %1140 = vmatprep.subr.bf16.mxu0 0
        %1141 = vmatpush1.bf16.msra.mxu0 0
        %1142 = vmatprep.subr.bf16.mxu0 0
        %1143 = vmatpush1.bf16.msra.mxu0 0
        %1144 = vmatprep.subr.bf16.mxu0 0
        %1145 = vmatpush1.bf16.msra.mxu0 0
        %1146 = vmatprep.subr.bf16.mxu0 0
        %1147 = vmatpush1.bf16.msra.mxu0 0
        %1148 = vmatprep.subr.bf16.mxu0 0
        %1149 = vmatpush1.bf16.msra.mxu0 0
        %1150 = vmatprep.subr.bf16.mxu0 0
        %1151 = vmatpush1.bf16.msra.mxu0 0
        %1152 = vmatprep.subr.bf16.mxu0 0
        %1153 = vmatpush1.bf16.msra.mxu0 0
        %1154 = vmatprep.mubr.bf16.mxu0 0
        %1155 = vmatmul.mubr.bf16.gmra.mrb[0].mxu0 %v1067
        %v1156 = vpop.f32.mrb[0].mxu0
        %v1157 = vadd.f32 0.0, %v1156
        %v1158 = vpop.f32.mrb[0].mxu0
        %v1159 = vpop.f32.mrb[0].mxu0
        %v1160 = vpop.f32.mrb[0].mxu0
        %1161 = vdwg.mxu0
        %v1163 = vlaneseq
        %v1164 = vshrl.u32 %v1163, 7
        %v1165 = vsub.s32 0, %v1164
        %v1166 = vrot.slane %v1058, %v1165
        %v1168 = vadd.f32 %v1166, %v1157
        %v1169 = vld [vmem:[#allocation2] sm:$0xf]
        %v1170 = vld [vmem:[#allocation2 + $0x4] sm:$0x1]
        %v1173 = vunpack.c.l.b16 %v1169
        %v1174 = vunpack.c.l.b16 %v1170
        %v1175 = vpack.c.b16 %v1174, %v1173
        %v1177 = vshrl.u32 %v1175, 16
        %v1179 = vshll.u32 %v1175, 16
        %v1181 = vrot.slane %v1179, 1
        %v1182 = vor.u32 %v1177, %v1181
        %v1185 = vunpack.c.l.b16 %v1044
        %v1186 = vunpack.c.l.b16 %v1045
        %v1187 = vpack.c.b16 %v1186, %v1185
        %v1190 = vsel %vm695, %v1182, 0
        %1192 = vmatprep.subr.bf16.mxu0 0
        %1193 = vmatpush1.bf16.msra.mxu0 %v1187
        %1194 = vmatprep.subr.bf16.mxu0 0
        %1195 = vmatpush1.bf16.msra.mxu0 0
        %1196 = vmatprep.subr.bf16.mxu0 0
        %1197 = vmatpush1.bf16.msra.mxu0 0
        %1198 = vmatprep.subr.bf16.mxu0 0
        %1199 = vmatpush1.bf16.msra.mxu0 0
        %1200 = vmatprep.subr.bf16.mxu0 0
        %1201 = vmatpush1.bf16.msra.mxu0 0
        %1202 = vmatprep.subr.bf16.mxu0 0
        %1203 = vmatpush1.bf16.msra.mxu0 0
        %1204 = vmatprep.subr.bf16.mxu0 0
        %1205 = vmatpush1.bf16.msra.mxu0 0
        %1206 = vmatprep.subr.bf16.mxu0 0
        %1207 = vmatpush1.bf16.msra.mxu0 0
        %1208 = vmatprep.subr.bf16.mxu0 0
        %1209 = vmatpush1.bf16.msra.mxu0 0
        %1210 = vmatprep.subr.bf16.mxu0 0
        %1211 = vmatpush1.bf16.msra.mxu0 0
        %1212 = vmatprep.subr.bf16.mxu0 0
        %1213 = vmatpush1.bf16.msra.mxu0 0
        %1214 = vmatprep.subr.bf16.mxu0 0
        %1215 = vmatpush1.bf16.msra.mxu0 0
        %1216 = vmatprep.subr.bf16.mxu0 0
        %1217 = vmatpush1.bf16.msra.mxu0 0
        %1218 = vmatprep.subr.bf16.mxu0 0
        %1219 = vmatpush1.bf16.msra.mxu0 0
        %1220 = vmatprep.subr.bf16.mxu0 0
        %1221 = vmatpush1.bf16.msra.mxu0 0
        %1222 = vmatprep.subr.bf16.mxu0 0
        %1223 = vmatpush1.bf16.msra.mxu0 0
        %1224 = vmatprep.mubr.bf16.mxu0 0
        %1225 = vmatmul.mubr.bf16.gmra.mrb[0].mxu0 %v1190
        %v1226 = vpop.f32.mrb[0].mxu0
        %v1227 = vadd.f32 0.0, %v1226
        %v1228 = vpop.f32.mrb[0].mxu0
        %v1229 = vpop.f32.mrb[0].mxu0
        %v1230 = vpop.f32.mrb[0].mxu0
        %1231 = vdwg.mxu0
        %v1232 = vadd.f32 %v1115, %v1227
        %v1235 = vunpack.c.l.b16 %v1051
        %v1236 = vunpack.c.l.b16 %v1052
        %v1237 = vpack.c.b16 %v1236, %v1235
        %1239 = vmatprep.subr.bf16.mxu0 0
        %1240 = vmatpush1.bf16.msra.mxu0 %v1237
        %1241 = vmatprep.subr.bf16.mxu0 0
        %1242 = vmatpush1.bf16.msra.mxu0 0
        %1243 = vmatprep.subr.bf16.mxu0 0
        %1244 = vmatpush1.bf16.msra.mxu0 0
        %1245 = vmatprep.subr.bf16.mxu0 0
        %1246 = vmatpush1.bf16.msra.mxu0 0
        %1247 = vmatprep.subr.bf16.mxu0 0
        %1248 = vmatpush1.bf16.msra.mxu0 0
        %1249 = vmatprep.subr.bf16.mxu0 0
        %1250 = vmatpush1.bf16.msra.mxu0 0
        %1251 = vmatprep.subr.bf16.mxu0 0
        %1252 = vmatpush1.bf16.msra.mxu0 0
        %1253 = vmatprep.subr.bf16.mxu0 0
        %1254 = vmatpush1.bf16.msra.mxu0 0
        %1255 = vmatprep.subr.bf16.mxu0 0
        %1256 = vmatpush1.bf16.msra.mxu0 0
        %1257 = vmatprep.subr.bf16.mxu0 0
        %1258 = vmatpush1.bf16.msra.mxu0 0
        %1259 = vmatprep.subr.bf16.mxu0 0
        %1260 = vmatpush1.bf16.msra.mxu0 0
        %1261 = vmatprep.subr.bf16.mxu0 0
        %1262 = vmatpush1.bf16.msra.mxu0 0
        %1263 = vmatprep.subr.bf16.mxu0 0
        %1264 = vmatpush1.bf16.msra.mxu0 0
        %1265 = vmatprep.subr.bf16.mxu0 0
        %1266 = vmatpush1.bf16.msra.mxu0 0
        %1267 = vmatprep.subr.bf16.mxu0 0
        %1268 = vmatpush1.bf16.msra.mxu0 0
        %1269 = vmatprep.subr.bf16.mxu0 0
        %1270 = vmatpush1.bf16.msra.mxu0 0
        %1271 = vmatprep.mubr.bf16.mxu0 0
        %1272 = vmatmul.mubr.bf16.gmra.mrb[0].mxu0 %v1190
        %v1273 = vpop.f32.mrb[0].mxu0
        %v1274 = vadd.f32 0.0, %v1273
        %v1275 = vpop.f32.mrb[0].mxu0
        %v1276 = vpop.f32.mrb[0].mxu0
        %v1277 = vpop.f32.mrb[0].mxu0
        %1278 = vdwg.mxu0
        %v1279 = vadd.f32 %v1168, %v1274
        %v1280 = vld [vmem:[#allocation2] sm:$0xe]
        %v1282 = vunpack.c.l.b16 %v1280
        %v1283 = vpack.c.b16 %v1174, %v1282
        %v1284 = vrot.slane %v1283, 1
        %v1287 = vunpack.c.l.b16 %v1046
        %v1288 = vunpack.c.l.b16 %v1047
        %v1289 = vpack.c.b16 %v1288, %v1287
        %v1292 = vsel %vm695, %v1284, 0
        %1294 = vmatprep.subr.bf16.mxu0 0
        %1295 = vmatpush1.bf16.msra.mxu0 %v1289
        %1296 = vmatprep.subr.bf16.mxu0 0
        %1297 = vmatpush1.bf16.msra.mxu0 0
        %1298 = vmatprep.subr.bf16.mxu0 0
        %1299 = vmatpush1.bf16.msra.mxu0 0
        %1300 = vmatprep.subr.bf16.mxu0 0
        %1301 = vmatpush1.bf16.msra.mxu0 0
        %1302 = vmatprep.subr.bf16.mxu0 0
        %1303 = vmatpush1.bf16.msra.mxu0 0
        %1304 = vmatprep.subr.bf16.mxu0 0
        %1305 = vmatpush1.bf16.msra.mxu0 0
        %1306 = vmatprep.subr.bf16.mxu0 0
        %1307 = vmatpush1.bf16.msra.mxu0 0
        %1308 = vmatprep.subr.bf16.mxu0 0
        %1309 = vmatpush1.bf16.msra.mxu0 0
        %1310 = vmatprep.subr.bf16.mxu0 0
        %1311 = vmatpush1.bf16.msra.mxu0 0
        %1312 = vmatprep.subr.bf16.mxu0 0
        %1313 = vmatpush1.bf16.msra.mxu0 0
        %1314 = vmatprep.subr.bf16.mxu0 0
        %1315 = vmatpush1.bf16.msra.mxu0 0
        %1316 = vmatprep.subr.bf16.mxu0 0
        %1317 = vmatpush1.bf16.msra.mxu0 0
        %1318 = vmatprep.subr.bf16.mxu0 0
        %1319 = vmatpush1.bf16.msra.mxu0 0
        %1320 = vmatprep.subr.bf16.mxu0 0
        %1321 = vmatpush1.bf16.msra.mxu0 0
        %1322 = vmatprep.subr.bf16.mxu0 0
        %1323 = vmatpush1.bf16.msra.mxu0 0
        %1324 = vmatprep.subr.bf16.mxu0 0
        %1325 = vmatpush1.bf16.msra.mxu0 0
        %1326 = vmatprep.mubr.bf16.mxu0 0
        %1327 = vmatmul.mubr.bf16.gmra.mrb[0].mxu0 %v1292
        %v1328 = vpop.f32.mrb[0].mxu0
        %v1329 = vadd.f32 0.0, %v1328
        %v1330 = vpop.f32.mrb[0].mxu0
        %v1331 = vpop.f32.mrb[0].mxu0
        %v1332 = vpop.f32.mrb[0].mxu0
        %1333 = vdwg.mxu0
        %v1334 = vadd.f32 %v1232, %v1329
        %v1337 = vunpack.c.l.b16 %v1053
        %v1338 = vunpack.c.l.b16 %v1054
        %v1339 = vpack.c.b16 %v1338, %v1337
        %1341 = vmatprep.subr.bf16.mxu0 0
        %1342 = vmatpush1.bf16.msra.mxu0 %v1339
        %1343 = vmatprep.subr.bf16.mxu0 0
        %1344 = vmatpush1.bf16.msra.mxu0 0
        %1345 = vmatprep.subr.bf16.mxu0 0
        %1346 = vmatpush1.bf16.msra.mxu0 0
        %1347 = vmatprep.subr.bf16.mxu0 0
        %1348 = vmatpush1.bf16.msra.mxu0 0
        %1349 = vmatprep.subr.bf16.mxu0 0
        %1350 = vmatpush1.bf16.msra.mxu0 0
        %1351 = vmatprep.subr.bf16.mxu0 0
        %1352 = vmatpush1.bf16.msra.mxu0 0
        %1353 = vmatprep.subr.bf16.mxu0 0
        %1354 = vmatpush1.bf16.msra.mxu0 0
        %1355 = vmatprep.subr.bf16.mxu0 0
        %1356 = vmatpush1.bf16.msra.mxu0 0
        %1357 = vmatprep.subr.bf16.mxu0 0
        %1358 = vmatpush1.bf16.msra.mxu0 0
        %1359 = vmatprep.subr.bf16.mxu0 0
        %1360 = vmatpush1.bf16.msra.mxu0 0
        %1361 = vmatprep.subr.bf16.mxu0 0
        %1362 = vmatpush1.bf16.msra.mxu0 0
        %1363 = vmatprep.subr.bf16.mxu0 0
        %1364 = vmatpush1.bf16.msra.mxu0 0
        %1365 = vmatprep.subr.bf16.mxu0 0
        %1366 = vmatpush1.bf16.msra.mxu0 0
        %1367 = vmatprep.subr.bf16.mxu0 0
        %1368 = vmatpush1.bf16.msra.mxu0 0
        %1369 = vmatprep.subr.bf16.mxu0 0
        %1370 = vmatpush1.bf16.msra.mxu0 0
        %1371 = vmatprep.subr.bf16.mxu0 0
        %1372 = vmatpush1.bf16.msra.mxu0 0
        %1373 = vmatprep.mubr.bf16.mxu0 0
        %1374 = vmatmul.mubr.bf16.gmra.mrb[0].mxu0 %v1292
        %v1375 = vpop.f32.mrb[0].mxu0
        %v1376 = vadd.f32 0.0, %v1375
        %v1377 = vpop.f32.mrb[0].mxu0
        %v1378 = vpop.f32.mrb[0].mxu0
        %v1379 = vpop.f32.mrb[0].mxu0
        %1380 = vdwg.mxu0
        %v1381 = vadd.f32 %v1279, %v1376
        %v1382 = vpack.c.bf16 %v1334, %v1334
        %v1383 = vpack.c.bf16 %v1381, %v1381
        %v1384 = vxor.u32 %v1383, 2147516416
        %v1386 = vmul.bf16 %v1384, 1069105081
        %v1387 = vpow.bf16.pop %v1386
        %v1388 = vadd.bf16 %v1387, 1065369472
        %v1389 = vrcp.bf16.pop %v1388
        %v1390 = vmul.bf16 1065369472, %v1389
        %v1391 = vmul.bf16 %v1382, %v1390
        %v1392 = vld [vmem:[%s10] sm:$0xf]
        %v1393 = vld [vmem:[%s10 + $0x4] sm:$0xf]
        %v1394 = vld [vmem:[%s11] sm:$0x1]
        %v1396 = vlaneseq
        %v1397 = vshrl.u32 %v1396, 7
        %v1398 = vsub.s32 0, %v1397
        %v1399 = vrot.slane %v1394, %v1398
        %v1403 = vunpack.c.l.b16 %v1392
        %v1404 = vunpack.c.l.b16 %v1393
        %v1405 = vpack.c.b16 %v1404, %v1403
        %v1408 = vsel %vm695, %v1391, 0
        %1410 = vmatprep.subr.bf16.mxu0 0
        %1411 = vmatpush1.bf16.msra.mxu0 %v1405
        %1412 = vmatprep.subr.bf16.mxu0 0
        %1413 = vmatpush1.bf16.msra.mxu0 0
        %1414 = vmatprep.subr.bf16.mxu0 0
        %1415 = vmatpush1.bf16.msra.mxu0 0
        %1416 = vmatprep.subr.bf16.mxu0 0
        %1417 = vmatpush1.bf16.msra.mxu0 0
        %1418 = vmatprep.subr.bf16.mxu0 0
        %1419 = vmatpush1.bf16.msra.mxu0 0
        %1420 = vmatprep.subr.bf16.mxu0 0
        %1421 = vmatpush1.bf16.msra.mxu0 0
        %1422 = vmatprep.subr.bf16.mxu0 0
        %1423 = vmatpush1.bf16.msra.mxu0 0
        %1424 = vmatprep.subr.bf16.mxu0 0
        %1425 = vmatpush1.bf16.msra.mxu0 0
        %1426 = vmatprep.subr.bf16.mxu0 0
        %1427 = vmatpush1.bf16.msra.mxu0 0
        %1428 = vmatprep.subr.bf16.mxu0 0
        %1429 = vmatpush1.bf16.msra.mxu0 0
        %1430 = vmatprep.subr.bf16.mxu0 0
        %1431 = vmatpush1.bf16.msra.mxu0 0
        %1432 = vmatprep.subr.bf16.mxu0 0
        %1433 = vmatpush1.bf16.msra.mxu0 0
        %1434 = vmatprep.subr.bf16.mxu0 0
        %1435 = vmatpush1.bf16.msra.mxu0 0
        %1436 = vmatprep.subr.bf16.mxu0 0
        %1437 = vmatpush1.bf16.msra.mxu0 0
        %1438 = vmatprep.subr.bf16.mxu0 0
        %1439 = vmatpush1.bf16.msra.mxu0 0
        %1440 = vmatprep.subr.bf16.mxu0 0
        %1441 = vmatpush1.bf16.msra.mxu0 0
        %1442 = vmatprep.mubr.bf16.mxu0 0
        %1443 = vmatmul.mubr.bf16.gmra.mrb[0].mxu0 %v1408
        %v1444 = vpop.f32.mrb[0].mxu0
        %v1445 = vadd.f32 %v1399, %v1444
        %v1446 = vpop.f32.mrb[0].mxu0
        %v1447 = vpop.f32.mrb[0].mxu0
        %v1448 = vpop.f32.mrb[0].mxu0
        %1449 = vdwg.mxu0
        %v1450 = vunpack.c.l.bf16 %v527
        %1452 = vset.pattern.permute.xlu0 0
        %1453 = vperm.xlu0 %1452, %v1450
        %v1454 = vpop.permute.xlu0 %1453
        %v1456 = vmul.f32 %v1445, %v1454
        %v1457 = vld [vmem:[#allocation3] sm:$0xf]
        %v1458 = vunpack.c.l.bf16 %v1457
        %v1459 = vadd.f32 %v1456, %v1458
        %v1460 = vmul.f32 %v1459, 0.70710677
        %1461 = vst.msk [vmem:[%s512] sm:$0xff] %vm528, %v1456
        %1462 = vst.msk [vmem:[%s519] sm:$0xff] %vm528, %v1460
        %s1463 = sand.u32 %s306, 1
        %s1464 = scalar_lea.sflag [#allocation6], %s1463
        %s1465 = sand.u32 %s306, 1
        %s1466 = smul.addr %s1465, 8
        %s1467 = scalar_lea.vmem [#allocation12], %s1466
        %s1468 = sand.u32 %s332, 1
        %s1469 = scalar_lea.sflag [#allocation14], %s1468
        %s1470 = sand.u32 %s332, 1
        %s1471 = smul.addr %s1470, 8
        %s1472 = scalar_lea.vmem [#allocation13], %s1471
        // Predicated region
        $region85: #{tpu_custom_call.1} parent=67 // pred_check
          %p1473 = pneg %p316
        $region86: #{tpu_custom_call.1} parent=67 // pred_check_branch
          %1475 = sbr.rel (%p1473) target = $region88
        $region87: #{tpu_custom_call.1} parent=67 // pred_region
          %s1477 = ssub.s32 128, 128
          %1478 = vsyncadd %s1464, %s1477
          %s1479 = smul.addr %s36, 128
          %s1480 = scalar_lea.hbm %s12, %s1479
          %s1482 = sshll.u32 %s1467, 4
          %s1483 = int_to_ptr.vmem [resolvable:$true] %s1482
          %1485 = dma.vmem_to_hbm [thread:$0]  %s1483, 128, %s1480, %s1464
        $region88: #{tpu_custom_call.1} parent=67 // pred_fallthru
          _
        // Predicated region
        $region89: #{tpu_custom_call.1} parent=67 // pred_check
          %p1486 = pneg %p342
        $region90: #{tpu_custom_call.1} parent=67 // pred_check_branch
          %1488 = sbr.rel (%p1486) target = $region92
        $region91: #{tpu_custom_call.1} parent=67 // pred_region
          %s1490 = ssub.s32 128, 128
          %1491 = vsyncadd %s1469, %s1490
          %s1492 = smul.addr %s36, 128
          %s1493 = scalar_lea.hbm %s13, %s1492
          %s1495 = sshll.u32 %s1472, 4
          %s1496 = int_to_ptr.vmem [resolvable:$true] %s1495
          %1498 = dma.vmem_to_hbm [thread:$0]  %s1496, 128, %s1493, %s1469
        $region92: #{tpu_custom_call.1} parent=67 // pred_fallthru
          _
      $region68: #{tpu_custom_call.1} parent=5 // pred_fallthru
        _
      %p1499 = scmp.le.s32.totalorder 2, %s31
      // Predicated region
      $region93: #{tpu_custom_call.1} parent=5 // pred_check
        %p1500 = pneg %p1499
      $region94: #{tpu_custom_call.1} parent=5 // pred_check_branch
        %1502 = sbr.rel (%p1500) target = $region96
      $region95: #{tpu_custom_call.1} parent=5 // pred_region
        %s1503 = ssub.s32 %s31, 2
        // Predicated region
        $region97: #{tpu_custom_call.1} parent=95 // pred_check
          %p1504 = pneg %p322
        $region98: #{tpu_custom_call.1} parent=95 // pred_check_branch
          %1506 = sbr.rel (%p1504) target = $region100
        $region99: #{tpu_custom_call.1} parent=95 // pred_region
          %s1507 = sand.u32 %s307, 1
          %s1508 = scalar_lea.sflag [#allocation6], %s1507
          %s1509 = sand.u32 %s307, 1
          %s1510 = smul.addr %s1509, 8
          %s1511 = scalar_lea.vmem [#allocation12], %s1510
          %1512 = dma.done %s1508, 128
        $region100: #{tpu_custom_call.1} parent=95 // pred_fallthru
          _
        // Predicated region
        $region101: #{tpu_custom_call.1} parent=95 // pred_check
          %p1513 = pneg %p348
        $region102: #{tpu_custom_call.1} parent=95 // pred_check_branch
          %1515 = sbr.rel (%p1513) target = $region104
        $region103: #{tpu_custom_call.1} parent=95 // pred_region
          %s1516 = sand.u32 %s333, 1
          %s1517 = scalar_lea.sflag [#allocation14], %s1516
          %s1518 = sand.u32 %s333, 1
          %s1519 = smul.addr %s1518, 8
          %s1520 = scalar_lea.vmem [#allocation13], %s1519
          %1521 = dma.done %s1517, 128
        $region104: #{tpu_custom_call.1} parent=95 // pred_fallthru
          _
      $region96: #{tpu_custom_call.1} parent=5 // pred_fallthru
        _
    $region6: #{tpu_custom_call.1} parent=1 // loop_footer
      %s35 = sadd.s32 1, %s31
    $region7: #{tpu_custom_call.1} parent=1 // loop_footer_branch
      %30 = sbr.rel target = $region3
    $region8: #{tpu_custom_call.1} parent=1 // loop_exit
      _
    %1522 = vsyncpa [#allocation5], 1
    %s1523 = scalar_lea.sflag [#allocation5], 1
    %1524 = vsyncpa %s1523, 1
    %1525 = vsyncpa [#allocation8], 1
    %1526 = vsyncpa [#allocation11], 1
    %1527 = vsyncpa [#allocation6], 1
    %s1528 = scalar_lea.sflag [#allocation6], 1
    %1529 = vsyncpa %s1528, 1
    %1530 = vsyncpa [#allocation14], 1
    %s1531 = scalar_lea.sflag [#allocation14], 1
    %1532 = vsyncpa %s1531, 1

// kernel: tpu_custom_call.1
$region0: #{tpu_custom_call.1}
  #allocation0 [shape = 'u32[]', space=smem, size = 0x4, offset = 0x4, fixed_abs, tag = 'smem constant byte address 0x4 - core index']
  #allocation1 [shape = 'u32[144,128]{1,0:T(1,128)}', space=vmem, size = 0x12000, scoped, tag = 'internal scratch']
  #allocation2 [shape = 'bf16[1,10,16]{2,1,0:T(8,128)(2,1)}', space=vmem, size = 0x1000, scoped, tag = 'scratch operand']
  #allocation3 [shape = 'bf16[1,8,32]{2,1,0:T(8,128)(2,1)}', space=vmem, size = 0x800, scoped, tag = 'scratch operand']
  %s0 = inlined_call_operand.vmem [shape: bf16[2,8,1], index: 0, kind: input, shape index: {}]
  %s1 = inlined_call_operand.hbm [shape: f32[2,8,32], index: 1, kind: input, shape index: {}]
  %s2 = inlined_call_operand.vmem [shape: f32[1,32], index: 2, kind: input, shape index: {}]
  %s3 = inlined_call_operand.hbm [shape: f32[1,32], index: 3, kind: input, shape index: {}]
  %s4 = inlined_call_operand.vmem [shape: bf16[32,16], index: 4, kind: input, shape index: {}]
  %s5 = inlined_call_operand.hbm [shape: f32[1,16], index: 5, kind: input, shape index: {}]
  %s6 = inlined_call_operand.vmem [shape: bf16[2,3,16,16], index: 6, kind: input, shape index: {}]
  %s7 = inlined_call_operand.hbm [shape: bf16[2,3,16,16], index: 7, kind: input, shape index: {}]
  %s8 = inlined_call_operand.vmem [shape: f32[2,1,16], index: 8, kind: input, shape index: {}]
  %s9 = inlined_call_operand.vmem [shape: f32[2,1,16], index: 9, kind: input, shape index: {}]
  %s10 = inlined_call_operand.vmem [shape: bf16[16,32], index: 10, kind: input, shape index: {}]
  %s11 = inlined_call_operand.vmem [shape: f32[1,32], index: 11, kind: input, shape index: {}]
  %s12 = inlined_call_operand.hbm [shape: f32[2,8,32], index: 12, kind: output, shape index: {0}]
  %s13 = inlined_call_operand.hbm [shape: f32[2,8,32], index: 13, kind: output, shape index: {1}]
  %14 = xla_tuple %s12, %s13
  %s15 = sld [smem:[#allocation0]]
  $region105: #{tpu_custom_call.1} parent=0
    _
  %s17 = ssub.s32 1, %s15
  %s18 = scalar_select 0, %s17, %s15
  $region1: #{tpu_custom_call.1} parent=0
    #allocation4 [shape = 'u8[8192]{0}', space=vmem, size = 0x2000, scoped, tag = 'input window, operand 1']
    #allocation5 [shape = 's32[2]{0}', space=sflag, size = 0x8, scoped, tag = 'scoped memory for tpu_custom_call.1']
    #allocation6 [shape = 's32[2]{0}', space=sflag, size = 0x8, scoped, tag = 'scoped memory for tpu_custom_call.1']
    #allocation7 [shape = 'u8[512]{0}', space=vmem, size = 0x400, scoped, tag = 'input window, operand 3, single buffered']
    #allocation8 [shape = 's32[1]{0}', space=sflag, size = 0x4, scoped, tag = 'scoped memory for tpu_custom_call.1']
    #allocation9 [shape = 'u8[512]{0}', space=vmem, size = 0x400, scoped, tag = 'input window, operand 5, single buffered']
    #allocation10 [shape = 'u8[24576]{0}', space=vmem, size = 0x6000, scoped, tag = 'input window, operand 7, single buffered']
    #allocation11 [shape = 's32[1]{0}', space=sflag, size = 0x4, scoped, tag = 'scoped memory for tpu_custom_call.1']
    #allocation12 [shape = 'u8[8192]{0}', space=vmem, size = 0x2000, scoped, tag = 'output window, operand 0']
    #allocation13 [shape = 'u8[8192]{0}', space=vmem, size = 0x2000, scoped, tag = 'output window, operand 1']
    #allocation14 [shape = 's32[2]{0}', space=sflag, size = 0x8, scoped, tag = 'scoped memory for tpu_custom_call.1']
    %19 = vsyncpa [#allocation5], 0
    %s20 = scalar_lea.sflag [#allocation5], 1
    %21 = vsyncpa %s20, 0
    %22 = vsyncpa [#allocation8], 0
    %23 = vsyncpa [#allocation11], 0
    %24 = vsyncpa [#allocation6], 0
    %s25 = scalar_lea.sflag [#allocation6], 1
    %26 = vsyncpa %s25, 0
    %27 = vsyncpa [#allocation14], 0
    %s28 = scalar_lea.sflag [#allocation14], 1
    %29 = vsyncpa %s28, 0
    loop: start=0, step=1, limit=4
    $region2: #{tpu_custom_call.1} parent=1 // loop_pre_header
      _
    $region3: #{tpu_custom_call.1} parent=1 // loop_header
      %s31 = sphi 0, %s35
      %p32 = scmp.ge.s32.totalorder %s31, 4
      %s41 = sphi 0, %s43
      %s44 = sphi 0, %s41
      %s45 = sphi 0, %s44
      %s61 = sphi 0, %s45
      %s67 = sphi 0, %s69
      %s70 = sphi 0, %s67
      %s71 = sphi 0, %s70
      %s87 = sphi 0, %s71
      %s91 = sphi 0, %s91
      %s93 = sphi 0, %s91
      %s94 = sphi 0, %s93
      %s108 = sphi 0, %s94
      %s112 = sphi 0, %s112
      %s114 = sphi 0, %s112
      %s115 = sphi 0, %s114
      %s129 = sphi 0, %s115
      %s133 = sphi 0, %s133
      %s135 = sphi 0, %s133
      %s136 = sphi 0, %s135
      %s150 = sphi 0, %s136
      %s154 = sphi 0, %s154
      %s156 = sphi 0, %s154
      %s157 = sphi 0, %s156
      %s171 = sphi 0, %s157
      %s175 = sphi 0, %s175
      %s177 = sphi 0, %s175
      %s178 = sphi 0, %s177
      %s192 = sphi 0, %s178
      %s196 = sphi 0, %s196
      %s198 = sphi 0, %s196
      %s199 = sphi 0, %s198
      %s213 = sphi 0, %s199
      %s217 = sphi 0, %s217
      %s219 = sphi 0, %s217
      %s220 = sphi 0, %s219
      %s234 = sphi 0, %s220
      %s238 = sphi 0, %s238
      %s240 = sphi 0, %s238
      %s241 = sphi 0, %s240
      %s255 = sphi 0, %s241
      %s259 = sphi 0, %s259
      %s261 = sphi 0, %s259
      %s262 = sphi 0, %s261
      %s276 = sphi 0, %s262
      %s280 = sphi 0, %s280
      %s282 = sphi 0, %s280
      %s283 = sphi 0, %s282
      %s297 = sphi 0, %s283
      %s303 = sphi 0, %s305
      %s306 = sphi 0, %s303
      %s307 = sphi 0, %s306
      %s323 = sphi 0, %s307
      %s329 = sphi 0, %s331
      %s332 = sphi 0, %s329
      %s333 = sphi 0, %s332
      %s349 = sphi 0, %s333
    $region4: #{tpu_custom_call.1} parent=1 // loop_header_branch
      %34 = sbr.rel (%p32) target = $region8
    $region5: #{tpu_custom_call.1} parent=1 // loop_body
      %s36 = ssub.s32 %s31, 1
      %s37 = ssub.s32 %s31, 2
      %s38 = sadd.s32 %s31, 1
      %s39 = ssub.s32 %s31, %s38
      %p40 = scmp.eq.s32.totalorder %s39, 0
      %s42 = sadd.s32 %s41, 1
      %s43 = scalar_select %p40, %s41, %s42
      %p46 = pneg %p40
      %p47 = scmp.eq.s32.totalorder %s31, 1
      %p48 = por %p46, %p47
      %p49 = scmp.ne.s32.totalorder %s41, %s44
      %p50 = scmp.eq.s32.totalorder %s31, 0
      %p51 = por %p49, %p50
      %p52 = scmp.ne.s32.totalorder %s41, %s44
      %p53 = scmp.eq.s32.totalorder %s36, 1
      %p54 = por %p52, %p53
      %p55 = scmp.ne.s32.totalorder %s44, %s45
      %p56 = scmp.eq.s32.totalorder %s36, 0
      %p57 = por %p55, %p56
      %p58 = scmp.ne.s32.totalorder %s44, %s45
      %p59 = scmp.eq.s32.totalorder %s37, 1
      %p60 = por %p58, %p59
      %p62 = scmp.ne.s32.totalorder %s45, %s61
      %p63 = scmp.eq.s32.totalorder %s37, 0
      %p64 = por %p62, %p63
      %s65 = ssub.s32 %s31, %s38
      %p66 = scmp.eq.s32.totalorder %s65, 0
      %s68 = sadd.s32 %s67, 1
      %s69 = scalar_select %p66, %s67, %s68
      %p72 = pneg %p66
      %p73 = scmp.eq.s32.totalorder %s31, 1
      %p74 = por %p72, %p73
      %p75 = scmp.ne.s32.totalorder %s67, %s70
      %p76 = scmp.eq.s32.totalorder %s31, 0
      %p77 = por %p75, %p76
      %p78 = scmp.ne.s32.totalorder %s67, %s70
      %p79 = scmp.eq.s32.totalorder %s36, 1
      %p80 = por %p78, %p79
      %p81 = scmp.ne.s32.totalorder %s70, %s71
      %p82 = scmp.eq.s32.totalorder %s36, 0
      %p83 = por %p81, %p82
      %p84 = scmp.ne.s32.totalorder %s70, %s71
      %p85 = scmp.eq.s32.totalorder %s37, 1
      %p86 = por %p84, %p85
      %p88 = scmp.ne.s32.totalorder %s71, %s87
      %p89 = scmp.eq.s32.totalorder %s37, 0
      %p90 = por %p88, %p89
      %s92 = sadd.s32 %s91, 1
      %p95 = scmp.eq.s32.totalorder %s31, 1
      %p96 = scmp.ne.s32.totalorder %s91, %s93
      %p97 = scmp.eq.s32.totalorder %s31, 0
      %p98 = por %p96, %p97
      %p99 = scmp.ne.s32.totalorder %s91, %s93
      %p100 = scmp.eq.s32.totalorder %s36, 1
      %p101 = por %p99, %p100
      %p102 = scmp.ne.s32.totalorder %s93, %s94
      %p103 = scmp.eq.s32.totalorder %s36, 0
      %p104 = por %p102, %p103
      %p105 = scmp.ne.s32.totalorder %s93, %s94
      %p106 = scmp.eq.s32.totalorder %s37, 1
      %p107 = por %p105, %p106
      %p109 = scmp.ne.s32.totalorder %s94, %s108
      %p110 = scmp.eq.s32.totalorder %s37, 0
      %p111 = por %p109, %p110
      %s113 = sadd.s32 %s112, 1
      %p116 = scmp.eq.s32.totalorder %s31, 1
      %p117 = scmp.ne.s32.totalorder %s112, %s114
      %p118 = scmp.eq.s32.totalorder %s31, 0
      %p119 = por %p117, %p118
      %p120 = scmp.ne.s32.totalorder %s112, %s114
      %p121 = scmp.eq.s32.totalorder %s36, 1
      %p122 = por %p120, %p121
      %p123 = scmp.ne.s32.totalorder %s114, %s115
      %p124 = scmp.eq.s32.totalorder %s36, 0
      %p125 = por %p123, %p124
      %p126 = scmp.ne.s32.totalorder %s114, %s115
      %p127 = scmp.eq.s32.totalorder %s37, 1
      %p128 = por %p126, %p127
      %p130 = scmp.ne.s32.totalorder %s115, %s129
      %p131 = scmp.eq.s32.totalorder %s37, 0
      %p132 = por %p130, %p131
      %s134 = sadd.s32 %s133, 1
      %p137 = scmp.eq.s32.totalorder %s31, 1
      %p138 = scmp.ne.s32.totalorder %s133, %s135
      %p139 = scmp.eq.s32.totalorder %s31, 0
      %p140 = por %p138, %p139
      %p141 = scmp.ne.s32.totalorder %s133, %s135
      %p142 = scmp.eq.s32.totalorder %s36, 1
      %p143 = por %p141, %p142
      %p144 = scmp.ne.s32.totalorder %s135, %s136
      %p145 = scmp.eq.s32.totalorder %s36, 0
      %p146 = por %p144, %p145
      %p147 = scmp.ne.s32.totalorder %s135, %s136
      %p148 = scmp.eq.s32.totalorder %s37, 1
      %p149 = por %p147, %p148
      %p151 = scmp.ne.s32.totalorder %s136, %s150
      %p152 = scmp.eq.s32.totalorder %s37, 0
      %p153 = por %p151, %p152
      %s155 = sadd.s32 %s154, 1
      %p158 = scmp.eq.s32.totalorder %s31, 1
      %p159 = scmp.ne.s32.totalorder %s154, %s156
      %p160 = scmp.eq.s32.totalorder %s31, 0
      %p161 = por %p159, %p160
      %p162 = scmp.ne.s32.totalorder %s154, %s156
      %p163 = scmp.eq.s32.totalorder %s36, 1
      %p164 = por %p162, %p163
      %p165 = scmp.ne.s32.totalorder %s156, %s157
      %p166 = scmp.eq.s32.totalorder %s36, 0
      %p167 = por %p165, %p166
      %p168 = scmp.ne.s32.totalorder %s156, %s157
      %p169 = scmp.eq.s32.totalorder %s37, 1
      %p170 = por %p168, %p169
      %p172 = scmp.ne.s32.totalorder %s157, %s171
      %p173 = scmp.eq.s32.totalorder %s37, 0
      %p174 = por %p172, %p173
      %s176 = sadd.s32 %s175, 1
      %p179 = scmp.eq.s32.totalorder %s31, 1
      %p180 = scmp.ne.s32.totalorder %s175, %s177
      %p181 = scmp.eq.s32.totalorder %s31, 0
      %p182 = por %p180, %p181
      %p183 = scmp.ne.s32.totalorder %s175, %s177
      %p184 = scmp.eq.s32.totalorder %s36, 1
      %p185 = por %p183, %p184
      %p186 = scmp.ne.s32.totalorder %s177, %s178
      %p187 = scmp.eq.s32.totalorder %s36, 0
      %p188 = por %p186, %p187
      %p189 = scmp.ne.s32.totalorder %s177, %s178
      %p190 = scmp.eq.s32.totalorder %s37, 1
      %p191 = por %p189, %p190
      %p193 = scmp.ne.s32.totalorder %s178, %s192
      %p194 = scmp.eq.s32.totalorder %s37, 0
      %p195 = por %p193, %p194
      %s197 = sadd.s32 %s196, 1
      %p200 = scmp.eq.s32.totalorder %s31, 1
      %p201 = scmp.ne.s32.totalorder %s196, %s198
      %p202 = scmp.eq.s32.totalorder %s31, 0
      %p203 = por %p201, %p202
      %p204 = scmp.ne.s32.totalorder %s196, %s198
      %p205 = scmp.eq.s32.totalorder %s36, 1
      %p206 = por %p204, %p205
      %p207 = scmp.ne.s32.totalorder %s198, %s199
      %p208 = scmp.eq.s32.totalorder %s36, 0
      %p209 = por %p207, %p208
      %p210 = scmp.ne.s32.totalorder %s198, %s199
      %p211 = scmp.eq.s32.totalorder %s37, 1
      %p212 = por %p210, %p211
      %p214 = scmp.ne.s32.totalorder %s199, %s213
      %p215 = scmp.eq.s32.totalorder %s37, 0
      %p216 = por %p214, %p215
      %s218 = sadd.s32 %s217, 1
      %p221 = scmp.eq.s32.totalorder %s31, 1
      %p222 = scmp.ne.s32.totalorder %s217, %s219
      %p223 = scmp.eq.s32.totalorder %s31, 0
      %p224 = por %p222, %p223
      %p225 = scmp.ne.s32.totalorder %s217, %s219
      %p226 = scmp.eq.s32.totalorder %s36, 1
      %p227 = por %p225, %p226
      %p228 = scmp.ne.s32.totalorder %s219, %s220
      %p229 = scmp.eq.s32.totalorder %s36, 0
      %p230 = por %p228, %p229
      %p231 = scmp.ne.s32.totalorder %s219, %s220
      %p232 = scmp.eq.s32.totalorder %s37, 1
      %p233 = por %p231, %p232
      %p235 = scmp.ne.s32.totalorder %s220, %s234
      %p236 = scmp.eq.s32.totalorder %s37, 0
      %p237 = por %p235, %p236
      %s239 = sadd.s32 %s238, 1
      %p242 = scmp.eq.s32.totalorder %s31, 1
      %p243 = scmp.ne.s32.totalorder %s238, %s240
      %p244 = scmp.eq.s32.totalorder %s31, 0
      %p245 = por %p243, %p244
      %p246 = scmp.ne.s32.totalorder %s238, %s240
      %p247 = scmp.eq.s32.totalorder %s36, 1
      %p248 = por %p246, %p247
      %p249 = scmp.ne.s32.totalorder %s240, %s241
      %p250 = scmp.eq.s32.totalorder %s36, 0
      %p251 = por %p249, %p250
      %p252 = scmp.ne.s32.totalorder %s240, %s241
      %p253 = scmp.eq.s32.totalorder %s37, 1
      %p254 = por %p252, %p253
      %p256 = scmp.ne.s32.totalorder %s241, %s255
      %p257 = scmp.eq.s32.totalorder %s37, 0
      %p258 = por %p256, %p257
      %s260 = sadd.s32 %s259, 1
      %p263 = scmp.eq.s32.totalorder %s31, 1
      %p264 = scmp.ne.s32.totalorder %s259, %s261
      %p265 = scmp.eq.s32.totalorder %s31, 0
      %p266 = por %p264, %p265
      %p267 = scmp.ne.s32.totalorder %s259, %s261
      %p268 = scmp.eq.s32.totalorder %s36, 1
      %p269 = por %p267, %p268
      %p270 = scmp.ne.s32.totalorder %s261, %s262
      %p271 = scmp.eq.s32.totalorder %s36, 0
      %p272 = por %p270, %p271
      %p273 = scmp.ne.s32.totalorder %s261, %s262
      %p274 = scmp.eq.s32.totalorder %s37, 1
      %p275 = por %p273, %p274
      %p277 = scmp.ne.s32.totalorder %s262, %s276
      %p278 = scmp.eq.s32.totalorder %s37, 0
      %p279 = por %p277, %p278
      %s281 = sadd.s32 %s280, 1
      %p284 = scmp.eq.s32.totalorder %s31, 1
      %p285 = scmp.ne.s32.totalorder %s280, %s282
      %p286 = scmp.eq.s32.totalorder %s31, 0
      %p287 = por %p285, %p286
      %p288 = scmp.ne.s32.totalorder %s280, %s282
      %p289 = scmp.eq.s32.totalorder %s36, 1
      %p290 = por %p288, %p289
      %p291 = scmp.ne.s32.totalorder %s282, %s283
      %p292 = scmp.eq.s32.totalorder %s36, 0
      %p293 = por %p291, %p292
      %p294 = scmp.ne.s32.totalorder %s282, %s283
      %p295 = scmp.eq.s32.totalorder %s37, 1
      %p296 = por %p294, %p295
      %p298 = scmp.ne.s32.totalorder %s283, %s297
      %p299 = scmp.eq.s32.totalorder %s37, 0
      %p300 = por %p298, %p299
      %s301 = ssub.s32 %s31, %s38
      %p302 = scmp.eq.s32.totalorder %s301, 0
      %s304 = sadd.s32 %s303, 1
      %s305 = scalar_select %p302, %s303, %s304
      %p308 = pneg %p302
      %p309 = scmp.eq.s32.totalorder %s31, 1
      %p310 = por %p308, %p309
      %p311 = scmp.ne.s32.totalorder %s303, %s306
      %p312 = scmp.eq.s32.totalorder %s31, 0
      %p313 = por %p311, %p312
      %p314 = scmp.ne.s32.totalorder %s303, %s306
      %p315 = scmp.eq.s32.totalorder %s36, 1
      %p316 = por %p314, %p315
      %p317 = scmp.ne.s32.totalorder %s306, %s307
      %p318 = scmp.eq.s32.totalorder %s36, 0
      %p319 = por %p317, %p318
      %p320 = scmp.ne.s32.totalorder %s306, %s307
      %p321 = scmp.eq.s32.totalorder %s37, 1
      %p322 = por %p320, %p321
      %p324 = scmp.ne.s32.totalorder %s307, %s323
      %p325 = scmp.eq.s32.totalorder %s37, 0
      %p326 = por %p324, %p325
      %s327 = ssub.s32 %s31, %s38
      %p328 = scmp.eq.s32.totalorder %s327, 0
      %s330 = sadd.s32 %s329, 1
      %s331 = scalar_select %p328, %s329, %s330
      %p334 = pneg %p328
      %p335 = scmp.eq.s32.totalorder %s31, 1
      %p336 = por %p334, %p335
      %p337 = scmp.ne.s32.totalorder %s329, %s332
      %p338 = scmp.eq.s32.totalorder %s31, 0
      %p339 = por %p337, %p338
      %p340 = scmp.ne.s32.totalorder %s329, %s332
      %p341 = scmp.eq.s32.totalorder %s36, 1
      %p342 = por %p340, %p341
      %p343 = scmp.ne.s32.totalorder %s332, %s333
      %p344 = scmp.eq.s32.totalorder %s36, 0
      %p345 = por %p343, %p344
      %p346 = scmp.ne.s32.totalorder %s332, %s333
      %p347 = scmp.eq.s32.totalorder %s37, 1
      %p348 = por %p346, %p347
      %p350 = scmp.ne.s32.totalorder %s333, %s349
      %p351 = scmp.eq.s32.totalorder %s37, 0
      %p352 = por %p350, %p351
      %p353 = scmp.le.s32.totalorder 1, %s31
      %p354 = scmp.lt.s32.totalorder %s31, 3
      %p355 = pnand %p353, %p354
      %p356 = pneg %p355
      // Predicated region
      $region9: #{tpu_custom_call.1} parent=5 // pred_check
        _
      $region10: #{tpu_custom_call.1} parent=5 // pred_check_branch
        %358 = sbr.rel (%p355) target = $region12
      $region11: #{tpu_custom_call.1} parent=5 // pred_region
        %s359 = ssub.s32 %s31, 1
        // Predicated region
        $region13: #{tpu_custom_call.1} parent=11 // pred_check
          %p360 = pneg %p104
        $region14: #{tpu_custom_call.1} parent=11 // pred_check_branch
          %362 = sbr.rel (%p360) target = $region16
        $region15: #{tpu_custom_call.1} parent=11 // pred_region
          _
        $region16: #{tpu_custom_call.1} parent=11 // pred_fallthru
          _
        // Predicated region
        $region17: #{tpu_custom_call.1} parent=11 // pred_check
          %p363 = pneg %p125
        $region18: #{tpu_custom_call.1} parent=11 // pred_check_branch
          %365 = sbr.rel (%p363) target = $region20
        $region19: #{tpu_custom_call.1} parent=11 // pred_region
          %s367 = ssub.s32 16, 16
          %368 = vsyncadd [#allocation8], %s367
          %s370 = sshll.u32 [#allocation7], 4
          %s371 = int_to_ptr.vmem [resolvable:$true] %s370
          %373 = dma.hbm_to_vmem [thread:$0]  %s3, 16, %s371, [#allocation8]
        $region20: #{tpu_custom_call.1} parent=11 // pred_fallthru
          _
        // Predicated region
        $region21: #{tpu_custom_call.1} parent=11 // pred_check
          %p374 = pneg %p146
        $region22: #{tpu_custom_call.1} parent=11 // pred_check_branch
          %376 = sbr.rel (%p374) target = $region24
        $region23: #{tpu_custom_call.1} parent=11 // pred_region
          _
        $region24: #{tpu_custom_call.1} parent=11 // pred_fallthru
          _
        // Predicated region
        $region25: #{tpu_custom_call.1} parent=11 // pred_check
          %p377 = pneg %p167
        $region26: #{tpu_custom_call.1} parent=11 // pred_check_branch
          %379 = sbr.rel (%p377) target = $region28
        $region27: #{tpu_custom_call.1} parent=11 // pred_region
          %s381 = ssub.s32 16, 16
          %382 = vsyncadd [#allocation8], %s381
          %s384 = sshll.u32 [#allocation9], 4
          %s385 = int_to_ptr.vmem [resolvable:$true] %s384
          %387 = dma.hbm_to_vmem [thread:$0]  %s5, 16, %s385, [#allocation8]
        $region28: #{tpu_custom_call.1} parent=11 // pred_fallthru
          _
        // Predicated region
        $region29: #{tpu_custom_call.1} parent=11 // pred_check
          %p388 = pneg %p188
        $region30: #{tpu_custom_call.1} parent=11 // pred_check_branch
          %390 = sbr.rel (%p388) target = $region32
        $region31: #{tpu_custom_call.1} parent=11 // pred_region
          _
        $region32: #{tpu_custom_call.1} parent=11 // pred_fallthru
          _
        // Predicated region
        $region33: #{tpu_custom_call.1} parent=11 // pred_check
          %p391 = pneg %p209
        $region34: #{tpu_custom_call.1} parent=11 // pred_check_branch
          %393 = sbr.rel (%p391) target = $region36
        $region35: #{tpu_custom_call.1} parent=11 // pred_region
          %s395 = ssub.s32 768, 768
          %396 = vsyncadd [#allocation11], %s395
          %s397 = sshll.u32 [#allocation10], 4
          %s398 = int_to_ptr.vmem [resolvable:$true] %s397
          %403 = dma.hbm_to_vmem [thread:$0]  %s7, 768, %s398, [#allocation11], 64, 64, 4
        $region36: #{tpu_custom_call.1} parent=11 // pred_fallthru
          _
        // Predicated region
        $region37: #{tpu_custom_call.1} parent=11 // pred_check
          %p404 = pneg %p230
        $region38: #{tpu_custom_call.1} parent=11 // pred_check_branch
          %406 = sbr.rel (%p404) target = $region40
        $region39: #{tpu_custom_call.1} parent=11 // pred_region
          _
        $region40: #{tpu_custom_call.1} parent=11 // pred_fallthru
          _
        // Predicated region
        $region41: #{tpu_custom_call.1} parent=11 // pred_check
          %p407 = pneg %p251
        $region42: #{tpu_custom_call.1} parent=11 // pred_check_branch
          %409 = sbr.rel (%p407) target = $region44
        $region43: #{tpu_custom_call.1} parent=11 // pred_region
          _
        $region44: #{tpu_custom_call.1} parent=11 // pred_fallthru
          _
        // Predicated region
        $region45: #{tpu_custom_call.1} parent=11 // pred_check
          %p410 = pneg %p272
        $region46: #{tpu_custom_call.1} parent=11 // pred_check_branch
          %412 = sbr.rel (%p410) target = $region48
        $region47: #{tpu_custom_call.1} parent=11 // pred_region
          _
        $region48: #{tpu_custom_call.1} parent=11 // pred_fallthru
          _
        // Predicated region
        $region49: #{tpu_custom_call.1} parent=11 // pred_check
          %p413 = pneg %p293
        $region50: #{tpu_custom_call.1} parent=11 // pred_check_branch
          %415 = sbr.rel (%p413) target = $region52
        $region51: #{tpu_custom_call.1} parent=11 // pred_region
          _
        $region52: #{tpu_custom_call.1} parent=11 // pred_fallthru
          _
      $region12: #{tpu_custom_call.1} parent=5 // pred_fallthru
        _
      %p416 = scmp.lt.s32.totalorder %s31, 2
      // Predicated region
      $region53: #{tpu_custom_call.1} parent=5 // pred_check
        %p417 = pneg %p416
      $region54: #{tpu_custom_call.1} parent=5 // pred_check_branch
        %419 = sbr.rel (%p417) target = $region56
      $region55: #{tpu_custom_call.1} parent=5 // pred_region
        // Predicated region
        $region57: #{tpu_custom_call.1} parent=55 // pred_check
          %p420 = pneg %p51
        $region58: #{tpu_custom_call.1} parent=55 // pred_check_branch
          %422 = sbr.rel (%p420) target = $region60
        $region59: #{tpu_custom_call.1} parent=55 // pred_region
          %p423 = scmp.lt.s32.totalorder %s31, 1
          %s424 = scalar_select %p423, %s31, 1
          %s425 = smul.addr %s424, 4
          %s426 = scalar_lea.vmem %s0, %s425
        $region60: #{tpu_custom_call.1} parent=55 // pred_fallthru
          _
        // Predicated region
        $region61: #{tpu_custom_call.1} parent=55 // pred_check
          %p427 = pneg %p77
        $region62: #{tpu_custom_call.1} parent=55 // pred_check_branch
          %429 = sbr.rel (%p427) target = $region64
        $region63: #{tpu_custom_call.1} parent=55 // pred_region
          %s430 = sand.u32 %s67, 1
          %s431 = scalar_lea.sflag [#allocation5], %s430
          %s432 = sand.u32 %s67, 1
          %s433 = smul.addr %s432, 8
          %s434 = scalar_lea.vmem [#allocation4], %s433
          %s436 = ssub.s32 128, 128
          %437 = vsyncadd %s431, %s436
          %s438 = smul.addr %s31, 128
          %s439 = scalar_lea.hbm %s1, %s438
          %s441 = sshll.u32 %s434, 4
          %s442 = int_to_ptr.vmem [resolvable:$true] %s441
          %444 = dma.hbm_to_vmem [thread:$0]  %s439, 128, %s442, %s431
        $region64: #{tpu_custom_call.1} parent=55 // pred_fallthru
          _
      $region56: #{tpu_custom_call.1} parent=5 // pred_fallthru
        _
      %p445 = scmp.le.s32.totalorder 1, %s31
      %p446 = scmp.lt.s32.totalorder %s31, 3
      %p447 = pnand %p445, %p446
      %p448 = pneg %p447
      // Predicated region
      $region65: #{tpu_custom_call.1} parent=5 // pred_check
        _
      $region66: #{tpu_custom_call.1} parent=5 // pred_check_branch
        %450 = sbr.rel (%p447) target = $region68
      $region67: #{tpu_custom_call.1} parent=5 // pred_region
        %s451 = ssub.s32 %s31, 1
        %s452 = sand.u32 %s70, 1
        %s453 = scalar_lea.sflag [#allocation5], %s452
        %s454 = sand.u32 %s70, 1
        %s455 = smul.addr %s454, 8
        %s456 = scalar_lea.vmem [#allocation4], %s455
        // Predicated region
        $region69: #{tpu_custom_call.1} parent=67 // pred_check
          %p457 = pneg %p83
        $region70: #{tpu_custom_call.1} parent=67 // pred_check_branch
          %459 = sbr.rel (%p457) target = $region72
        $region71: #{tpu_custom_call.1} parent=67 // pred_region
          %460 = dma.done %s453, 128
        $region72: #{tpu_custom_call.1} parent=67 // pred_fallthru
          _
        // Predicated region
        $region73: #{tpu_custom_call.1} parent=67 // pred_check
          %p461 = pneg %p125
        $region74: #{tpu_custom_call.1} parent=67 // pred_check_branch
          %463 = sbr.rel (%p461) target = $region76
        $region75: #{tpu_custom_call.1} parent=67 // pred_region
          %464 = dma.done [#allocation8], 16
        $region76: #{tpu_custom_call.1} parent=67 // pred_fallthru
          _
        // Predicated region
        $region77: #{tpu_custom_call.1} parent=67 // pred_check
          %p465 = pneg %p167
        $region78: #{tpu_custom_call.1} parent=67 // pred_check_branch
          %467 = sbr.rel (%p465) target = $region80
        $region79: #{tpu_custom_call.1} parent=67 // pred_region
          %468 = dma.done [#allocation8], 16
        $region80: #{tpu_custom_call.1} parent=67 // pred_fallthru
          _
        // Predicated region
        $region81: #{tpu_custom_call.1} parent=67 // pred_check
          %p469 = pneg %p209
        $region82: #{tpu_custom_call.1} parent=67 // pred_check_branch
          %471 = sbr.rel (%p469) target = $region84
        $region83: #{tpu_custom_call.1} parent=67 // pred_region
          %472 = dma.done [#allocation11], 768
        $region84: #{tpu_custom_call.1} parent=67 // pred_fallthru
          _
        %p473 = scmp.lt.s32.totalorder %s36, 1
        %s474 = scalar_select %p473, %s36, 1
        %s475 = smul.addr %s474, 4
        %s476 = scalar_lea.vmem %s0, %s475
        %p477 = pneg %p57
        %p478 = pneg %p54
        %s479 = sand.u32 %s70, 1
        %s480 = scalar_lea.sflag [#allocation5], %s479
        %s481 = sand.u32 %s70, 1
        %s482 = smul.addr %s481, 8
        %s483 = scalar_lea.vmem [#allocation4], %s482
        %p484 = pneg %p83
        %p485 = pneg %p80
        %p486 = pneg %p104
        %p487 = pneg %p101
        %p488 = pneg %p125
        %p489 = pneg %p122
        %p490 = pneg %p146
        %p491 = pneg %p143
        %p492 = pneg %p167
        %p493 = pneg %p164
        %p494 = pneg %p188
        %p495 = pneg %p185
        %p496 = pneg %p209
        %p497 = pneg %p206
        %p498 = pneg %p230
        %p499 = pneg %p227
        %p500 = pneg %p251
        %p501 = pneg %p248
        %p502 = pneg %p272
        %p503 = pneg %p269
        %p504 = pneg %p293
        %p505 = pneg %p290
        %p506 = pneg %p319
        %p507 = pneg %p316
        %s508 = sand.u32 %s306, 1
        %s509 = scalar_lea.sflag [#allocation6], %s508
        %s510 = sand.u32 %s306, 1
        %s511 = smul.addr %s510, 8
        %s512 = scalar_lea.vmem [#allocation12], %s511
        %p513 = pneg %p345
        %p514 = pneg %p342
        %s515 = sand.u32 %s332, 1
        %s516 = scalar_lea.sflag [#allocation14], %s515
        %s517 = sand.u32 %s332, 1
        %s518 = smul.addr %s517, 8
        %s519 = scalar_lea.vmem [#allocation13], %s518
        %p520 = scmp.lt.s32.totalorder %s36, 1
        %s521 = scalar_select %p520, %s36, 1
        %s522 = smul.addr %s521, 4
        %s523 = scalar_lea.vmem %s0, %s522
        %v526 = vld [vmem:[%s456] sm:$0xff]
        %v527 = vld [vmem:[%s523] sm:$0xf]
        %vm528 = vcmask 261120
        %v529 = vsel %vm528, %v526, 0.0
        %530 = vadd.xlane.f32.xlu0 %v529
        %v531 = vpop.xlane.xlu0 %530
        %v532 = vrcp.pop 32.0
        %v533 = vmul.f32 %v531, %v532
        %v534 = vsub.f32 %v526, %v533
        %v535 = vmul.f32 %v534, %v534
        %v536 = vsel %vm528, %v535, 0.0
        %537 = vadd.xlane.f32.xlu0 %v536
        %v538 = vpop.xlane.xlu0 %537
        %v539 = vmul.f32 %v538, %v532
        %v540 = vadd.f32 %v539, 1e-05
        %v541 = vrsqrt.pop %v540
        %v542 = vmul.f32 %v534, %v541
        %v543 = vld [vmem:[%s2] sm:$0x1]
        %v545 = vlaneseq
        %v546 = vshrl.u32 %v545, 7
        %v547 = vsub.s32 0, %v546
        %v548 = vrot.slane %v543, %v547
        %v550 = vmul.f32 %v542, %v548
        %v551 = vld [vmem:[#allocation7] sm:$0x1]
        %v553 = vlaneseq
        %v554 = vshrl.u32 %v553, 7
        %v555 = vsub.s32 0, %v554
        %v556 = vrot.slane %v551, %v555
        %v558 = vadd.f32 %v550, %v556
        %v559 = vpack.c.bf16 %v558, %v558
        %vm560 = vcmask 257024
        %561 = vst.msk [vmem:[#allocation3] sm:$0xf] %vm560, %v559
        %v562 = vld [vmem:[%s4] sm:$0xf]
        %v563 = vld [vmem:[%s4 + $0x4] sm:$0xf]
        %v564 = vld [vmem:[%s4 + $0x8] sm:$0xf]
        %v565 = vld [vmem:[%s4 + $0xc] sm:$0xf]
        %v566 = vld [vmem:[#allocation9] sm:$0x1]
        %v568 = vlaneseq
        %v569 = vshrl.u32 %v568, 7
        %v570 = vsub.s32 0, %v569
        %v571 = vrot.slane %v566, %v570
        %v577 = vunpack.c.l.b16 %v562
        %v578 = vunpack.c.l.b16 %v563
        %v579 = vunpack.c.l.b16 %v564
        %v580 = vunpack.c.l.b16 %v565
        %v581 = vpack.c.b16 %v578, %v577
        %v582 = vpack.c.b16 %v580, %v579
        %v586 = vsel %vm528, %v559, 0
        %588 = vmatprep.subr.bf16.mxu0 0
        %589 = vmatpush1.bf16.msra.mxu0 %v581
        %590 = vmatprep.subr.bf16.mxu0 0
        %591 = vmatpush1.bf16.msra.mxu0 %v582
        %592 = vmatprep.subr.bf16.mxu0 0
        %593 = vmatpush1.bf16.msra.mxu0 0
        %594 = vmatprep.subr.bf16.mxu0 0
        %595 = vmatpush1.bf16.msra.mxu0 0
        %596 = vmatprep.subr.bf16.mxu0 0
        %597 = vmatpush1.bf16.msra.mxu0 0
        %598 = vmatprep.subr.bf16.mxu0 0
        %599 = vmatpush1.bf16.msra.mxu0 0
        %600 = vmatprep.subr.bf16.mxu0 0
        %601 = vmatpush1.bf16.msra.mxu0 0
        %602 = vmatprep.subr.bf16.mxu0 0
        %603 = vmatpush1.bf16.msra.mxu0 0
        %604 = vmatprep.subr.bf16.mxu0 0
        %605 = vmatpush1.bf16.msra.mxu0 0
        %606 = vmatprep.subr.bf16.mxu0 0
        %607 = vmatpush1.bf16.msra.mxu0 0
        %608 = vmatprep.subr.bf16.mxu0 0
        %609 = vmatpush1.bf16.msra.mxu0 0
        %610 = vmatprep.subr.bf16.mxu0 0
        %611 = vmatpush1.bf16.msra.mxu0 0
        %612 = vmatprep.subr.bf16.mxu0 0
        %613 = vmatpush1.bf16.msra.mxu0 0
        %614 = vmatprep.subr.bf16.mxu0 0
        %615 = vmatpush1.bf16.msra.mxu0 0
        %616 = vmatprep.subr.bf16.mxu0 0
        %617 = vmatpush1.bf16.msra.mxu0 0
        %618 = vmatprep.subr.bf16.mxu0 0
        %619 = vmatpush1.bf16.msra.mxu0 0
        %620 = vmatprep.mubr.bf16.mxu0 0
        %621 = vmatmul.mubr.bf16.gmra.mrb[0].mxu0 %v586
        %v622 = vpop.f32.mrb[0].mxu0
        %v623 = vadd.f32 %v571, %v622
        %v624 = vpop.f32.mrb[0].mxu0
        %v625 = vpop.f32.mrb[0].mxu0
        %v626 = vpop.f32.mrb[0].mxu0
        %627 = vdwg.mxu0
        %v628 = vpack.c.bf16 %v623, %v623
        %630 = vset.pattern.permute.xlu0 0
        %631 = vperm.xlu0 %630, %v527
        %v632 = vpop.permute.xlu0 %631
        %v635 = vunpack.c.l.s4 839922192
        %v636 = vunpack.c.0.s8 %v635
        %v637 = vlaneseq
        %v638 = vshrl.u32 %v637, 7
        %v639 = vsub.s32 %v636, %v638
        %v640 = vrot.slane %v632, %v639
        %vm641 = vcmask 122880
        %vm642 = vsmask.f32 256
        %vm643 = vmand %vm641, %vm642
        %v644 = vld [vmem:[#allocation2] sm:$0x1]
        %v645 = vsel %vm643, 0, %v644
        %646 = vst [vmem:[#allocation2] sm:$0x1] %v645
        %vm647 = vsmask.f32 7938
        %vm648 = vmand %vm641, %vm647
        %v649 = vld [vmem:[#allocation2 + $0x4] sm:$0x1]
        %v650 = vsel %vm648, 0, %v649
        %651 = vst [vmem:[#allocation2 + $0x4] sm:$0x1] %v650
        %v652 = vmul.bf16 %v628, %v640
        %v654 = vunpack.c.l.b16 %v652
        %v655 = vpack.c.b16 %v654, %v654
        %v657 = vshrl.u32 %v655, 16
        %v659 = vrot.slane %v657, 7
        %v660 = vshll.u32 %v655, 16
        %v662 = vor.u32 %v659, %v660
        %v663 = vrot.slane %v659, 4
        %vm666 = vcmask 125952
        %vm667 = vmand %vm666, %vm647
        %v668 = vld [vmem:[#allocation2] sm:$0xf]
        %v669 = vsel %vm667, %v662, %v668
        %670 = vst [vmem:[#allocation2] sm:$0xf] %v669
        %v671 = vld [vmem:[#allocation2 + $0x4] sm:$0x1]
        %v672 = vsel %vm643, %v663, %v671
        %673 = vst [vmem:[#allocation2 + $0x4] sm:$0x1] %v672
        %v674 = vld [vmem:[%s6] sm:$0xf]
        %v675 = vld [vmem:[%s6 + $0x4] sm:$0xf]
        %v676 = vld [vmem:[%s6 + $0x8] sm:$0xf]
        %v677 = vld [vmem:[%s6 + $0xc] sm:$0xf]
        %v678 = vld [vmem:[%s6 + $0x10] sm:$0xf]
        %v679 = vld [vmem:[%s6 + $0x14] sm:$0xf]
        %v680 = vld [vmem:[#allocation10] sm:$0xf]
        %v681 = vld [vmem:[#allocation10 + $0x4] sm:$0xf]
        %v682 = vld [vmem:[#allocation10 + $0x8] sm:$0xf]
        %v683 = vld [vmem:[#allocation10 + $0xc] sm:$0xf]
        %v684 = vld [vmem:[#allocation10 + $0x10] sm:$0xf]
        %v685 = vld [vmem:[#allocation10 + $0x14] sm:$0xf]
        %v686 = vld [vmem:[%s8] sm:$0x1]
        %v687 = vld [vmem:[%s9] sm:$0x1]
        %v688 = vld [vmem:[#allocation2] sm:$0xf]
        %v691 = vunpack.c.l.b16 %v674
        %v692 = vunpack.c.l.b16 %v675
        %v693 = vpack.c.b16 %v692, %v691
        %vm695 = vcmask 130048
        %v697 = vsel %vm695, %v688, 0
        %699 = vmatprep.subr.bf16.mxu0 0
        %700 = vmatpush1.bf16.msra.mxu0 %v693
        %701 = vmatprep.subr.bf16.mxu0 0
        %702 = vmatpush1.bf16.msra.mxu0 0
        %703 = vmatprep.subr.bf16.mxu0 0
        %704 = vmatpush1.bf16.msra.mxu0 0
        %705 = vmatprep.subr.bf16.mxu0 0
        %706 = vmatpush1.bf16.msra.mxu0 0
        %707 = vmatprep.subr.bf16.mxu0 0
        %708 = vmatpush1.bf16.msra.mxu0 0
        %709 = vmatprep.subr.bf16.mxu0 0
        %710 = vmatpush1.bf16.msra.mxu0 0
        %711 = vmatprep.subr.bf16.mxu0 0
        %712 = vmatpush1.bf16.msra.mxu0 0
        %713 = vmatprep.subr.bf16.mxu0 0
        %714 = vmatpush1.bf16.msra.mxu0 0
        %715 = vmatprep.subr.bf16.mxu0 0
        %716 = vmatpush1.bf16.msra.mxu0 0
        %717 = vmatprep.subr.bf16.mxu0 0
        %718 = vmatpush1.bf16.msra.mxu0 0
        %719 = vmatprep.subr.bf16.mxu0 0
        %720 = vmatpush1.bf16.msra.mxu0 0
        %721 = vmatprep.subr.bf16.mxu0 0
        %722 = vmatpush1.bf16.msra.mxu0 0
        %723 = vmatprep.subr.bf16.mxu0 0
        %724 = vmatpush1.bf16.msra.mxu0 0
        %725 = vmatprep.subr.bf16.mxu0 0
        %726 = vmatpush1.bf16.msra.mxu0 0
        %727 = vmatprep.subr.bf16.mxu0 0
        %728 = vmatpush1.bf16.msra.mxu0 0
        %729 = vmatprep.subr.bf16.mxu0 0
        %730 = vmatpush1.bf16.msra.mxu0 0
        %731 = vmatprep.mubr.bf16.mxu0 0
        %732 = vmatmul.mubr.bf16.gmra.mrb[0].mxu0 %v697
        %v733 = vpop.f32.mrb[0].mxu0
        %v734 = vadd.f32 0.0, %v733
        %v735 = vpop.f32.mrb[0].mxu0
        %v736 = vpop.f32.mrb[0].mxu0
        %v737 = vpop.f32.mrb[0].mxu0
        %738 = vdwg.mxu0
        %v740 = vlaneseq
        %v741 = vshrl.u32 %v740, 7
        %v742 = vsub.s32 0, %v741
        %v743 = vrot.slane %v686, %v742
        %v745 = vadd.f32 %v743, %v734
        %v748 = vunpack.c.l.b16 %v680
        %v749 = vunpack.c.l.b16 %v681
        %v750 = vpack.c.b16 %v749, %v748
        %752 = vmatprep.subr.bf16.mxu0 0
        %753 = vmatpush1.bf16.msra.mxu0 %v750
        %754 = vmatprep.subr.bf16.mxu0 0
        %755 = vmatpush1.bf16.msra.mxu0 0
        %756 = vmatprep.subr.bf16.mxu0 0
        %757 = vmatpush1.bf16.msra.mxu0 0
        %758 = vmatprep.subr.bf16.mxu0 0
        %759 = vmatpush1.bf16.msra.mxu0 0
        %760 = vmatprep.subr.bf16.mxu0 0
        %761 = vmatpush1.bf16.msra.mxu0 0
        %762 = vmatprep.subr.bf16.mxu0 0
        %763 = vmatpush1.bf16.msra.mxu0 0
        %764 = vmatprep.subr.bf16.mxu0 0
        %765 = vmatpush1.bf16.msra.mxu0 0
        %766 = vmatprep.subr.bf16.mxu0 0
        %767 = vmatpush1.bf16.msra.mxu0 0
        %768 = vmatprep.subr.bf16.mxu0 0
        %769 = vmatpush1.bf16.msra.mxu0 0
        %770 = vmatprep.subr.bf16.mxu0 0
        %771 = vmatpush1.bf16.msra.mxu0 0
        %772 = vmatprep.subr.bf16.mxu0 0
        %773 = vmatpush1.bf16.msra.mxu0 0
        %774 = vmatprep.subr.bf16.mxu0 0
        %775 = vmatpush1.bf16.msra.mxu0 0
        %776 = vmatprep.subr.bf16.mxu0 0
        %777 = vmatpush1.bf16.msra.mxu0 0
        %778 = vmatprep.subr.bf16.mxu0 0
        %779 = vmatpush1.bf16.msra.mxu0 0
        %780 = vmatprep.subr.bf16.mxu0 0
        %781 = vmatpush1.bf16.msra.mxu0 0
        %782 = vmatprep.subr.bf16.mxu0 0
        %783 = vmatpush1.bf16.msra.mxu0 0
        %784 = vmatprep.mubr.bf16.mxu0 0
        %785 = vmatmul.mubr.bf16.gmra.mrb[0].mxu0 %v697
        %v786 = vpop.f32.mrb[0].mxu0
        %v787 = vadd.f32 0.0, %v786
        %v788 = vpop.f32.mrb[0].mxu0
        %v789 = vpop.f32.mrb[0].mxu0
        %v790 = vpop.f32.mrb[0].mxu0
        %791 = vdwg.mxu0
        %v793 = vlaneseq
        %v794 = vshrl.u32 %v793, 7
        %v795 = vsub.s32 0, %v794
        %v796 = vrot.slane %v687, %v795
        %v798 = vadd.f32 %v796, %v787
        %v799 = vld [vmem:[#allocation2] sm:$0xf]
        %v800 = vld [vmem:[#allocation2 + $0x4] sm:$0x1]
        %v803 = vunpack.c.l.b16 %v799
        %v804 = vunpack.c.l.b16 %v800
        %v805 = vpack.c.b16 %v804, %v803
        %v807 = vshrl.u32 %v805, 16
        %v809 = vshll.u32 %v805, 16
        %v811 = vrot.slane %v809, 1
        %v812 = vor.u32 %v807, %v811
        %v815 = vunpack.c.l.b16 %v676
        %v816 = vunpack.c.l.b16 %v677
        %v817 = vpack.c.b16 %v816, %v815
        %v820 = vsel %vm695, %v812, 0
        %822 = vmatprep.subr.bf16.mxu0 0
        %823 = vmatpush1.bf16.msra.mxu0 %v817
        %824 = vmatprep.subr.bf16.mxu0 0
        %825 = vmatpush1.bf16.msra.mxu0 0
        %826 = vmatprep.subr.bf16.mxu0 0
        %827 = vmatpush1.bf16.msra.mxu0 0
        %828 = vmatprep.subr.bf16.mxu0 0
        %829 = vmatpush1.bf16.msra.mxu0 0
        %830 = vmatprep.subr.bf16.mxu0 0
        %831 = vmatpush1.bf16.msra.mxu0 0
        %832 = vmatprep.subr.bf16.mxu0 0
        %833 = vmatpush1.bf16.msra.mxu0 0
        %834 = vmatprep.subr.bf16.mxu0 0
        %835 = vmatpush1.bf16.msra.mxu0 0
        %836 = vmatprep.subr.bf16.mxu0 0
        %837 = vmatpush1.bf16.msra.mxu0 0
        %838 = vmatprep.subr.bf16.mxu0 0
        %839 = vmatpush1.bf16.msra.mxu0 0
        %840 = vmatprep.subr.bf16.mxu0 0
        %841 = vmatpush1.bf16.msra.mxu0 0
        %842 = vmatprep.subr.bf16.mxu0 0
        %843 = vmatpush1.bf16.msra.mxu0 0
        %844 = vmatprep.subr.bf16.mxu0 0
        %845 = vmatpush1.bf16.msra.mxu0 0
        %846 = vmatprep.subr.bf16.mxu0 0
        %847 = vmatpush1.bf16.msra.mxu0 0
        %848 = vmatprep.subr.bf16.mxu0 0
        %849 = vmatpush1.bf16.msra.mxu0 0
        %850 = vmatprep.subr.bf16.mxu0 0
        %851 = vmatpush1.bf16.msra.mxu0 0
        %852 = vmatprep.subr.bf16.mxu0 0
        %853 = vmatpush1.bf16.msra.mxu0 0
        %854 = vmatprep.mubr.bf16.mxu0 0
        %855 = vmatmul.mubr.bf16.gmra.mrb[0].mxu0 %v820
        %v856 = vpop.f32.mrb[0].mxu0
        %v857 = vadd.f32 0.0, %v856
        %v858 = vpop.f32.mrb[0].mxu0
        %v859 = vpop.f32.mrb[0].mxu0
        %v860 = vpop.f32.mrb[0].mxu0
        %861 = vdwg.mxu0
        %v862 = vadd.f32 %v745, %v857
        %v865 = vunpack.c.l.b16 %v682
        %v866 = vunpack.c.l.b16 %v683
        %v867 = vpack.c.b16 %v866, %v865
        %869 = vmatprep.subr.bf16.mxu0 0
        %870 = vmatpush1.bf16.msra.mxu0 %v867
        %871 = vmatprep.subr.bf16.mxu0 0
        %872 = vmatpush1.bf16.msra.mxu0 0
        %873 = vmatprep.subr.bf16.mxu0 0
        %874 = vmatpush1.bf16.msra.mxu0 0
        %875 = vmatprep.subr.bf16.mxu0 0
        %876 = vmatpush1.bf16.msra.mxu0 0
        %877 = vmatprep.subr.bf16.mxu0 0
        %878 = vmatpush1.bf16.msra.mxu0 0
        %879 = vmatprep.subr.bf16.mxu0 0
        %880 = vmatpush1.bf16.msra.mxu0 0
        %881 = vmatprep.subr.bf16.mxu0 0
        %882 = vmatpush1.bf16.msra.mxu0 0
        %883 = vmatprep.subr.bf16.mxu0 0
        %884 = vmatpush1.bf16.msra.mxu0 0
        %885 = vmatprep.subr.bf16.mxu0 0
        %886 = vmatpush1.bf16.msra.mxu0 0
        %887 = vmatprep.subr.bf16.mxu0 0
        %888 = vmatpush1.bf16.msra.mxu0 0
        %889 = vmatprep.subr.bf16.mxu0 0
        %890 = vmatpush1.bf16.msra.mxu0 0
        %891 = vmatprep.subr.bf16.mxu0 0
        %892 = vmatpush1.bf16.msra.mxu0 0
        %893 = vmatprep.subr.bf16.mxu0 0
        %894 = vmatpush1.bf16.msra.mxu0 0
        %895 = vmatprep.subr.bf16.mxu0 0
        %896 = vmatpush1.bf16.msra.mxu0 0
        %897 = vmatprep.subr.bf16.mxu0 0
        %898 = vmatpush1.bf16.msra.mxu0 0
        %899 = vmatprep.subr.bf16.mxu0 0
        %900 = vmatpush1.bf16.msra.mxu0 0
        %901 = vmatprep.mubr.bf16.mxu0 0
        %902 = vmatmul.mubr.bf16.gmra.mrb[0].mxu0 %v820
        %v903 = vpop.f32.mrb[0].mxu0
        %v904 = vadd.f32 0.0, %v903
        %v905 = vpop.f32.mrb[0].mxu0
        %v906 = vpop.f32.mrb[0].mxu0
        %v907 = vpop.f32.mrb[0].mxu0
        %908 = vdwg.mxu0
        %v909 = vadd.f32 %v798, %v904
        %v910 = vld [vmem:[#allocation2] sm:$0xe]
        %v912 = vunpack.c.l.b16 %v910
        %v913 = vpack.c.b16 %v804, %v912
        %v914 = vrot.slane %v913, 1
        %v917 = vunpack.c.l.b16 %v678
        %v918 = vunpack.c.l.b16 %v679
        %v919 = vpack.c.b16 %v918, %v917
        %v922 = vsel %vm695, %v914, 0
        %924 = vmatprep.subr.bf16.mxu0 0
        %925 = vmatpush1.bf16.msra.mxu0 %v919
        %926 = vmatprep.subr.bf16.mxu0 0
        %927 = vmatpush1.bf16.msra.mxu0 0
        %928 = vmatprep.subr.bf16.mxu0 0
        %929 = vmatpush1.bf16.msra.mxu0 0
        %930 = vmatprep.subr.bf16.mxu0 0
        %931 = vmatpush1.bf16.msra.mxu0 0
        %932 = vmatprep.subr.bf16.mxu0 0
        %933 = vmatpush1.bf16.msra.mxu0 0
        %934 = vmatprep.subr.bf16.mxu0 0
        %935 = vmatpush1.bf16.msra.mxu0 0
        %936 = vmatprep.subr.bf16.mxu0 0
        %937 = vmatpush1.bf16.msra.mxu0 0
        %938 = vmatprep.subr.bf16.mxu0 0
        %939 = vmatpush1.bf16.msra.mxu0 0
        %940 = vmatprep.subr.bf16.mxu0 0
        %941 = vmatpush1.bf16.msra.mxu0 0
        %942 = vmatprep.subr.bf16.mxu0 0
        %943 = vmatpush1.bf16.msra.mxu0 0
        %944 = vmatprep.subr.bf16.mxu0 0
        %945 = vmatpush1.bf16.msra.mxu0 0
        %946 = vmatprep.subr.bf16.mxu0 0
        %947 = vmatpush1.bf16.msra.mxu0 0
        %948 = vmatprep.subr.bf16.mxu0 0
        %949 = vmatpush1.bf16.msra.mxu0 0
        %950 = vmatprep.subr.bf16.mxu0 0
        %951 = vmatpush1.bf16.msra.mxu0 0
        %952 = vmatprep.subr.bf16.mxu0 0
        %953 = vmatpush1.bf16.msra.mxu0 0
        %954 = vmatprep.subr.bf16.mxu0 0
        %955 = vmatpush1.bf16.msra.mxu0 0
        %956 = vmatprep.mubr.bf16.mxu0 0
        %957 = vmatmul.mubr.bf16.gmra.mrb[0].mxu0 %v922
        %v958 = vpop.f32.mrb[0].mxu0
        %v959 = vadd.f32 0.0, %v958
        %v960 = vpop.f32.mrb[0].mxu0
        %v961 = vpop.f32.mrb[0].mxu0
        %v962 = vpop.f32.mrb[0].mxu0
        %963 = vdwg.mxu0
        %v964 = vadd.f32 %v862, %v959
        %v967 = vunpack.c.l.b16 %v684
        %v968 = vunpack.c.l.b16 %v685
        %v969 = vpack.c.b16 %v968, %v967
        %971 = vmatprep.subr.bf16.mxu0 0
        %972 = vmatpush1.bf16.msra.mxu0 %v969
        %973 = vmatprep.subr.bf16.mxu0 0
        %974 = vmatpush1.bf16.msra.mxu0 0
        %975 = vmatprep.subr.bf16.mxu0 0
        %976 = vmatpush1.bf16.msra.mxu0 0
        %977 = vmatprep.subr.bf16.mxu0 0
        %978 = vmatpush1.bf16.msra.mxu0 0
        %979 = vmatprep.subr.bf16.mxu0 0
        %980 = vmatpush1.bf16.msra.mxu0 0
        %981 = vmatprep.subr.bf16.mxu0 0
        %982 = vmatpush1.bf16.msra.mxu0 0
        %983 = vmatprep.subr.bf16.mxu0 0
        %984 = vmatpush1.bf16.msra.mxu0 0
        %985 = vmatprep.subr.bf16.mxu0 0
        %986 = vmatpush1.bf16.msra.mxu0 0
        %987 = vmatprep.subr.bf16.mxu0 0
        %988 = vmatpush1.bf16.msra.mxu0 0
        %989 = vmatprep.subr.bf16.mxu0 0
        %990 = vmatpush1.bf16.msra.mxu0 0
        %991 = vmatprep.subr.bf16.mxu0 0
        %992 = vmatpush1.bf16.msra.mxu0 0
        %993 = vmatprep.subr.bf16.mxu0 0
        %994 = vmatpush1.bf16.msra.mxu0 0
        %995 = vmatprep.subr.bf16.mxu0 0
        %996 = vmatpush1.bf16.msra.mxu0 0
        %997 = vmatprep.subr.bf16.mxu0 0
        %998 = vmatpush1.bf16.msra.mxu0 0
        %999 = vmatprep.subr.bf16.mxu0 0
        %1000 = vmatpush1.bf16.msra.mxu0 0
        %1001 = vmatprep.subr.bf16.mxu0 0
        %1002 = vmatpush1.bf16.msra.mxu0 0
        %1003 = vmatprep.mubr.bf16.mxu0 0
        %1004 = vmatmul.mubr.bf16.gmra.mrb[0].mxu0 %v922
        %v1005 = vpop.f32.mrb[0].mxu0
        %v1006 = vadd.f32 0.0, %v1005
        %v1007 = vpop.f32.mrb[0].mxu0
        %v1008 = vpop.f32.mrb[0].mxu0
        %v1009 = vpop.f32.mrb[0].mxu0
        %1010 = vdwg.mxu0
        %v1011 = vadd.f32 %v909, %v1006
        %v1012 = vpack.c.bf16 %v964, %v964
        %v1013 = vpack.c.bf16 %v1011, %v1011
        %v1014 = vxor.u32 %v1013, 2147516416
        %v1016 = vmul.bf16 %v1014, 1069105081
        %v1017 = vpow.bf16.pop %v1016
        %v1018 = vadd.bf16 %v1017, 1065369472
        %v1019 = vrcp.bf16.pop %v1018
        %v1020 = vmul.bf16 1065369472, %v1019
        %v1021 = vmul.bf16 %v1012, %v1020
        %v1022 = vmul.bf16 %v1021, %v640
        %v1024 = vunpack.c.l.b16 %v1022
        %v1025 = vpack.c.b16 %v1024, %v1024
        %v1027 = vshrl.u32 %v1025, 16
        %v1029 = vrot.slane %v1027, 7
        %v1030 = vshll.u32 %v1025, 16
        %v1032 = vor.u32 %v1029, %v1030
        %v1033 = vrot.slane %v1029, 4
        %v1036 = vsel %vm667, %v1032, %v799
        %1037 = vst [vmem:[#allocation2] sm:$0xf] %v1036
        %v1038 = vld [vmem:[#allocation2 + $0x4] sm:$0x1]
        %v1039 = vsel %vm643, %v1033, %v1038
        %1040 = vst [vmem:[#allocation2 + $0x4] sm:$0x1] %v1039
        %s1041 = scalar_lea.vmem %s6, 24
        %v1042 = vld [vmem:[%s1041] sm:$0xf]
        %v1043 = vld [vmem:[%s1041 + $0x4] sm:$0xf]
        %v1044 = vld [vmem:[%s1041 + $0x8] sm:$0xf]
        %v1045 = vld [vmem:[%s1041 + $0xc] sm:$0xf]
        %v1046 = vld [vmem:[%s1041 + $0x10] sm:$0xf]
        %v1047 = vld [vmem:[%s1041 + $0x14] sm:$0xf]
        %s1048 = scalar_lea.vmem [#allocation10], 24
        %v1049 = vld [vmem:[%s1048] sm:$0xf]
        %v1050 = vld [vmem:[%s1048 + $0x4] sm:$0xf]
        %v1051 = vld [vmem:[%s1048 + $0x8] sm:$0xf]
        %v1052 = vld [vmem:[%s1048 + $0xc] sm:$0xf]
        %v1053 = vld [vmem:[%s1048 + $0x10] sm:$0xf]
        %v1054 = vld [vmem:[%s1048 + $0x14] sm:$0xf]
        %s1055 = scalar_lea.vmem %s8, 1
        %v1056 = vld [vmem:[%s1055] sm:$0x1]
        %s1057 = scalar_lea.vmem %s9, 1
        %v1058 = vld [vmem:[%s1057] sm:$0x1]
        %v1059 = vld [vmem:[#allocation2] sm:$0xf]
        %v1062 = vunpack.c.l.b16 %v1042
        %v1063 = vunpack.c.l.b16 %v1043
        %v1064 = vpack.c.b16 %v1063, %v1062
        %v1067 = vsel %vm695, %v1059, 0
        %1069 = vmatprep.subr.bf16.mxu0 0
        %1070 = vmatpush1.bf16.msra.mxu0 %v1064
        %1071 = vmatprep.subr.bf16.mxu0 0
        %1072 = vmatpush1.bf16.msra.mxu0 0
        %1073 = vmatprep.subr.bf16.mxu0 0
        %1074 = vmatpush1.bf16.msra.mxu0 0
        %1075 = vmatprep.subr.bf16.mxu0 0
        %1076 = vmatpush1.bf16.msra.mxu0 0
        %1077 = vmatprep.subr.bf16.mxu0 0
        %1078 = vmatpush1.bf16.msra.mxu0 0
        %1079 = vmatprep.subr.bf16.mxu0 0
        %1080 = vmatpush1.bf16.msra.mxu0 0
        %1081 = vmatprep.subr.bf16.mxu0 0
        %1082 = vmatpush1.bf16.msra.mxu0 0
        %1083 = vmatprep.subr.bf16.mxu0 0
        %1084 = vmatpush1.bf16.msra.mxu0 0
        %1085 = vmatprep.subr.bf16.mxu0 0
        %1086 = vmatpush1.bf16.msra.mxu0 0
        %1087 = vmatprep.subr.bf16.mxu0 0
        %1088 = vmatpush1.bf16.msra.mxu0 0
        %1089 = vmatprep.subr.bf16.mxu0 0
        %1090 = vmatpush1.bf16.msra.mxu0 0
        %1091 = vmatprep.subr.bf16.mxu0 0
        %1092 = vmatpush1.bf16.msra.mxu0 0
        %1093 = vmatprep.subr.bf16.mxu0 0
        %1094 = vmatpush1.bf16.msra.mxu0 0
        %1095 = vmatprep.subr.bf16.mxu0 0
        %1096 = vmatpush1.bf16.msra.mxu0 0
        %1097 = vmatprep.subr.bf16.mxu0 0
        %1098 = vmatpush1.bf16.msra.mxu0 0
        %1099 = vmatprep.subr.bf16.mxu0 0
        %1100 = vmatpush1.bf16.msra.mxu0 0
        %1101 = vmatprep.mubr.bf16.mxu0 0
        %1102 = vmatmul.mubr.bf16.gmra.mrb[0].mxu0 %v1067
        %v1103 = vpop.f32.mrb[0].mxu0
        %v1104 = vadd.f32 0.0, %v1103
        %v1105 = vpop.f32.mrb[0].mxu0
        %v1106 = vpop.f32.mrb[0].mxu0
        %v1107 = vpop.f32.mrb[0].mxu0
        %1108 = vdwg.mxu0
        %v1110 = vlaneseq
        %v1111 = vshrl.u32 %v1110, 7
        %v1112 = vsub.s32 0, %v1111
        %v1113 = vrot.slane %v1056, %v1112
        %v1115 = vadd.f32 %v1113, %v1104
        %v1118 = vunpack.c.l.b16 %v1049
        %v1119 = vunpack.c.l.b16 %v1050
        %v1120 = vpack.c.b16 %v1119, %v1118
        %1122 = vmatprep.subr.bf16.mxu0 0
        %1123 = vmatpush1.bf16.msra.mxu0 %v1120
        %1124 = vmatprep.subr.bf16.mxu0 0
        %1125 = vmatpush1.bf16.msra.mxu0 0
        %1126 = vmatprep.subr.bf16.mxu0 0
        %1127 = vmatpush1.bf16.msra.mxu0 0
        %1128 = vmatprep.subr.bf16.mxu0 0
        %1129 = vmatpush1.bf16.msra.mxu0 0
        %1130 = vmatprep.subr.bf16.mxu0 0
        %1131 = vmatpush1.bf16.msra.mxu0 0
        %1132 = vmatprep.subr.bf16.mxu0 0
        %1133 = vmatpush1.bf16.msra.mxu0 0
        %1134 = vmatprep.subr.bf16.mxu0 0
        %1135 = vmatpush1.bf16.msra.mxu0 0
        %1136 = vmatprep.subr.bf16.mxu0 0
        %1137 = vmatpush1.bf16.msra.mxu0 0
        %1138 = vmatprep.subr.bf16.mxu0 0
        %1139 = vmatpush1.bf16.msra.mxu0 0
        %1140 = vmatprep.subr.bf16.mxu0 0
        %1141 = vmatpush1.bf16.msra.mxu0 0
        %1142 = vmatprep.subr.bf16.mxu0 0
        %1143 = vmatpush1.bf16.msra.mxu0 0
        %1144 = vmatprep.subr.bf16.mxu0 0
        %1145 = vmatpush1.bf16.msra.mxu0 0
        %1146 = vmatprep.subr.bf16.mxu0 0
        %1147 = vmatpush1.bf16.msra.mxu0 0
        %1148 = vmatprep.subr.bf16.mxu0 0
        %1149 = vmatpush1.bf16.msra.mxu0 0
        %1150 = vmatprep.subr.bf16.mxu0 0
        %1151 = vmatpush1.bf16.msra.mxu0 0
        %1152 = vmatprep.subr.bf16.mxu0 0
        %1153 = vmatpush1.bf16.msra.mxu0 0
        %1154 = vmatprep.mubr.bf16.mxu0 0
        %1155 = vmatmul.mubr.bf16.gmra.mrb[0].mxu0 %v1067
        %v1156 = vpop.f32.mrb[0].mxu0
        %v1157 = vadd.f32 0.0, %v1156
        %v1158 = vpop.f32.mrb[0].mxu0
        %v1159 = vpop.f32.mrb[0].mxu0
        %v1160 = vpop.f32.mrb[0].mxu0
        %1161 = vdwg.mxu0
        %v1163 = vlaneseq
        %v1164 = vshrl.u32 %v1163, 7
        %v1165 = vsub.s32 0, %v1164
        %v1166 = vrot.slane %v1058, %v1165
        %v1168 = vadd.f32 %v1166, %v1157
        %v1169 = vld [vmem:[#allocation2] sm:$0xf]
        %v1170 = vld [vmem:[#allocation2 + $0x4] sm:$0x1]
        %v1173 = vunpack.c.l.b16 %v1169
        %v1174 = vunpack.c.l.b16 %v1170
        %v1175 = vpack.c.b16 %v1174, %v1173
        %v1177 = vshrl.u32 %v1175, 16
        %v1179 = vshll.u32 %v1175, 16
        %v1181 = vrot.slane %v1179, 1
        %v1182 = vor.u32 %v1177, %v1181
        %v1185 = vunpack.c.l.b16 %v1044
        %v1186 = vunpack.c.l.b16 %v1045
        %v1187 = vpack.c.b16 %v1186, %v1185
        %v1190 = vsel %vm695, %v1182, 0
        %1192 = vmatprep.subr.bf16.mxu0 0
        %1193 = vmatpush1.bf16.msra.mxu0 %v1187
        %1194 = vmatprep.subr.bf16.mxu0 0
        %1195 = vmatpush1.bf16.msra.mxu0 0
        %1196 = vmatprep.subr.bf16.mxu0 0
        %1197 = vmatpush1.bf16.msra.mxu0 0
        %1198 = vmatprep.subr.bf16.mxu0 0
        %1199 = vmatpush1.bf16.msra.mxu0 0
        %1200 = vmatprep.subr.bf16.mxu0 0
        %1201 = vmatpush1.bf16.msra.mxu0 0
        %1202 = vmatprep.subr.bf16.mxu0 0
        %1203 = vmatpush1.bf16.msra.mxu0 0
        %1204 = vmatprep.subr.bf16.mxu0 0
        %1205 = vmatpush1.bf16.msra.mxu0 0
        %1206 = vmatprep.subr.bf16.mxu0 0
        %1207 = vmatpush1.bf16.msra.mxu0 0
        %1208 = vmatprep.subr.bf16.mxu0 0
        %1209 = vmatpush1.bf16.msra.mxu0 0
        %1210 = vmatprep.subr.bf16.mxu0 0
        %1211 = vmatpush1.bf16.msra.mxu0 0
        %1212 = vmatprep.subr.bf16.mxu0 0
        %1213 = vmatpush1.bf16.msra.mxu0 0
        %1214 = vmatprep.subr.bf16.mxu0 0
        %1215 = vmatpush1.bf16.msra.mxu0 0
        %1216 = vmatprep.subr.bf16.mxu0 0
        %1217 = vmatpush1.bf16.msra.mxu0 0
        %1218 = vmatprep.subr.bf16.mxu0 0
        %1219 = vmatpush1.bf16.msra.mxu0 0
        %1220 = vmatprep.subr.bf16.mxu0 0
        %1221 = vmatpush1.bf16.msra.mxu0 0
        %1222 = vmatprep.subr.bf16.mxu0 0
        %1223 = vmatpush1.bf16.msra.mxu0 0
        %1224 = vmatprep.mubr.bf16.mxu0 0
        %1225 = vmatmul.mubr.bf16.gmra.mrb[0].mxu0 %v1190
        %v1226 = vpop.f32.mrb[0].mxu0
        %v1227 = vadd.f32 0.0, %v1226
        %v1228 = vpop.f32.mrb[0].mxu0
        %v1229 = vpop.f32.mrb[0].mxu0
        %v1230 = vpop.f32.mrb[0].mxu0
        %1231 = vdwg.mxu0
        %v1232 = vadd.f32 %v1115, %v1227
        %v1235 = vunpack.c.l.b16 %v1051
        %v1236 = vunpack.c.l.b16 %v1052
        %v1237 = vpack.c.b16 %v1236, %v1235
        %1239 = vmatprep.subr.bf16.mxu0 0
        %1240 = vmatpush1.bf16.msra.mxu0 %v1237
        %1241 = vmatprep.subr.bf16.mxu0 0
        %1242 = vmatpush1.bf16.msra.mxu0 0
        %1243 = vmatprep.subr.bf16.mxu0 0
        %1244 = vmatpush1.bf16.msra.mxu0 0
        %1245 = vmatprep.subr.bf16.mxu0 0
        %1246 = vmatpush1.bf16.msra.mxu0 0
        %1247 = vmatprep.subr.bf16.mxu0 0
        %1248 = vmatpush1.bf16.msra.mxu0 0
        %1249 = vmatprep.subr.bf16.mxu0 0
        %1250 = vmatpush1.bf16.msra.mxu0 0
        %1251 = vmatprep.subr.bf16.mxu0 0
        %1252 = vmatpush1.bf16.msra.mxu0 0
        %1253 = vmatprep.subr.bf16.mxu0 0
        %1254 = vmatpush1.bf16.msra.mxu0 0
        %1255 = vmatprep.subr.bf16.mxu0 0
        %1256 = vmatpush1.bf16.msra.mxu0 0
        %1257 = vmatprep.subr.bf16.mxu0 0
        %1258 = vmatpush1.bf16.msra.mxu0 0
        %1259 = vmatprep.subr.bf16.mxu0 0
        %1260 = vmatpush1.bf16.msra.mxu0 0
        %1261 = vmatprep.subr.bf16.mxu0 0
        %1262 = vmatpush1.bf16.msra.mxu0 0
        %1263 = vmatprep.subr.bf16.mxu0 0
        %1264 = vmatpush1.bf16.msra.mxu0 0
        %1265 = vmatprep.subr.bf16.mxu0 0
        %1266 = vmatpush1.bf16.msra.mxu0 0
        %1267 = vmatprep.subr.bf16.mxu0 0
        %1268 = vmatpush1.bf16.msra.mxu0 0
        %1269 = vmatprep.subr.bf16.mxu0 0
        %1270 = vmatpush1.bf16.msra.mxu0 0
        %1271 = vmatprep.mubr.bf16.mxu0 0
        %1272 = vmatmul.mubr.bf16.gmra.mrb[0].mxu0 %v1190
        %v1273 = vpop.f32.mrb[0].mxu0
        %v1274 = vadd.f32 0.0, %v1273
        %v1275 = vpop.f32.mrb[0].mxu0
        %v1276 = vpop.f32.mrb[0].mxu0
        %v1277 = vpop.f32.mrb[0].mxu0
        %1278 = vdwg.mxu0
        %v1279 = vadd.f32 %v1168, %v1274
        %v1280 = vld [vmem:[#allocation2] sm:$0xe]
        %v1282 = vunpack.c.l.b16 %v1280
        %v1283 = vpack.c.b16 %v1174, %v1282
        %v1284 = vrot.slane %v1283, 1
        %v1287 = vunpack.c.l.b16 %v1046
        %v1288 = vunpack.c.l.b16 %v1047
        %v1289 = vpack.c.b16 %v1288, %v1287
        %v1292 = vsel %vm695, %v1284, 0
        %1294 = vmatprep.subr.bf16.mxu0 0
        %1295 = vmatpush1.bf16.msra.mxu0 %v1289
        %1296 = vmatprep.subr.bf16.mxu0 0
        %1297 = vmatpush1.bf16.msra.mxu0 0
        %1298 = vmatprep.subr.bf16.mxu0 0
        %1299 = vmatpush1.bf16.msra.mxu0 0
        %1300 = vmatprep.subr.bf16.mxu0 0
        %1301 = vmatpush1.bf16.msra.mxu0 0
        %1302 = vmatprep.subr.bf16.mxu0 0
        %1303 = vmatpush1.bf16.msra.mxu0 0
        %1304 = vmatprep.subr.bf16.mxu0 0
        %1305 = vmatpush1.bf16.msra.mxu0 0
        %1306 = vmatprep.subr.bf16.mxu0 0
        %1307 = vmatpush1.bf16.msra.mxu0 0
        %1308 = vmatprep.subr.bf16.mxu0 0
        %1309 = vmatpush1.bf16.msra.mxu0 0
        %1310 = vmatprep.subr.bf16.mxu0 0
        %1311 = vmatpush1.bf16.msra.mxu0 0
        %1312 = vmatprep.subr.bf16.mxu0 0
        %1313 = vmatpush1.bf16.msra.mxu0 0
        %1314 = vmatprep.subr.bf16.mxu0 0
        %1315 = vmatpush1.bf16.msra.mxu0 0
        %1316 = vmatprep.subr.bf16.mxu0 0
        %1317 = vmatpush1.bf16.msra.mxu0 0
        %1318 = vmatprep.subr.bf16.mxu0 0
        %1319 = vmatpush1.bf16.msra.mxu0 0
        %1320 = vmatprep.subr.bf16.mxu0 0
        %1321 = vmatpush1.bf16.msra.mxu0 0
        %1322 = vmatprep.subr.bf16.mxu0 0
        %1323 = vmatpush1.bf16.msra.mxu0 0
        %1324 = vmatprep.subr.bf16.mxu0 0
        %1325 = vmatpush1.bf16.msra.mxu0 0
        %1326 = vmatprep.mubr.bf16.mxu0 0
        %1327 = vmatmul.mubr.bf16.gmra.mrb[0].mxu0 %v1292
        %v1328 = vpop.f32.mrb[0].mxu0
        %v1329 = vadd.f32 0.0, %v1328
        %v1330 = vpop.f32.mrb[0].mxu0
        %v1331 = vpop.f32.mrb[0].mxu0
        %v1332 = vpop.f32.mrb[0].mxu0
        %1333 = vdwg.mxu0
        %v1334 = vadd.f32 %v1232, %v1329
        %v1337 = vunpack.c.l.b16 %v1053
        %v1338 = vunpack.c.l.b16 %v1054
        %v1339 = vpack.c.b16 %v1338, %v1337
        %1341 = vmatprep.subr.bf16.mxu0 0
        %1342 = vmatpush1.bf16.msra.mxu0 %v1339
        %1343 = vmatprep.subr.bf16.mxu0 0
        %1344 = vmatpush1.bf16.msra.mxu0 0
        %1345 = vmatprep.subr.bf16.mxu0 0
        %1346 = vmatpush1.bf16.msra.mxu0 0
        %1347 = vmatprep.subr.bf16.mxu0 0
        %1348 = vmatpush1.bf16.msra.mxu0 0
        %1349 = vmatprep.subr.bf16.mxu0 0
        %1350 = vmatpush1.bf16.msra.mxu0 0
        %1351 = vmatprep.subr.bf16.mxu0 0
        %1352 = vmatpush1.bf16.msra.mxu0 0
        %1353 = vmatprep.subr.bf16.mxu0 0
        %1354 = vmatpush1.bf16.msra.mxu0 0
        %1355 = vmatprep.subr.bf16.mxu0 0
        %1356 = vmatpush1.bf16.msra.mxu0 0
        %1357 = vmatprep.subr.bf16.mxu0 0
        %1358 = vmatpush1.bf16.msra.mxu0 0
        %1359 = vmatprep.subr.bf16.mxu0 0
        %1360 = vmatpush1.bf16.msra.mxu0 0
        %1361 = vmatprep.subr.bf16.mxu0 0
        %1362 = vmatpush1.bf16.msra.mxu0 0
        %1363 = vmatprep.subr.bf16.mxu0 0
        %1364 = vmatpush1.bf16.msra.mxu0 0
        %1365 = vmatprep.subr.bf16.mxu0 0
        %1366 = vmatpush1.bf16.msra.mxu0 0
        %1367 = vmatprep.subr.bf16.mxu0 0
        %1368 = vmatpush1.bf16.msra.mxu0 0
        %1369 = vmatprep.subr.bf16.mxu0 0
        %1370 = vmatpush1.bf16.msra.mxu0 0
        %1371 = vmatprep.subr.bf16.mxu0 0
        %1372 = vmatpush1.bf16.msra.mxu0 0
        %1373 = vmatprep.mubr.bf16.mxu0 0
        %1374 = vmatmul.mubr.bf16.gmra.mrb[0].mxu0 %v1292
        %v1375 = vpop.f32.mrb[0].mxu0
        %v1376 = vadd.f32 0.0, %v1375
        %v1377 = vpop.f32.mrb[0].mxu0
        %v1378 = vpop.f32.mrb[0].mxu0
        %v1379 = vpop.f32.mrb[0].mxu0
        %1380 = vdwg.mxu0
        %v1381 = vadd.f32 %v1279, %v1376
        %v1382 = vpack.c.bf16 %v1334, %v1334
        %v1383 = vpack.c.bf16 %v1381, %v1381
        %v1384 = vxor.u32 %v1383, 2147516416
        %v1386 = vmul.bf16 %v1384, 1069105081
        %v1387 = vpow.bf16.pop %v1386
        %v1388 = vadd.bf16 %v1387, 1065369472
        %v1389 = vrcp.bf16.pop %v1388
        %v1390 = vmul.bf16 1065369472, %v1389
        %v1391 = vmul.bf16 %v1382, %v1390
        %v1392 = vld [vmem:[%s10] sm:$0xf]
        %v1393 = vld [vmem:[%s10 + $0x4] sm:$0xf]
        %v1394 = vld [vmem:[%s11] sm:$0x1]
        %v1396 = vlaneseq
        %v1397 = vshrl.u32 %v1396, 7
        %v1398 = vsub.s32 0, %v1397
        %v1399 = vrot.slane %v1394, %v1398
        %v1403 = vunpack.c.l.b16 %v1392
        %v1404 = vunpack.c.l.b16 %v1393
        %v1405 = vpack.c.b16 %v1404, %v1403
        %v1408 = vsel %vm695, %v1391, 0
        %1410 = vmatprep.subr.bf16.mxu0 0
        %1411 = vmatpush1.bf16.msra.mxu0 %v1405
        %1412 = vmatprep.subr.bf16.mxu0 0
        %1413 = vmatpush1.bf16.msra.mxu0 0
        %1414 = vmatprep.subr.bf16.mxu0 0
        %1415 = vmatpush1.bf16.msra.mxu0 0
        %1416 = vmatprep.subr.bf16.mxu0 0
        %1417 = vmatpush1.bf16.msra.mxu0 0
        %1418 = vmatprep.subr.bf16.mxu0 0
        %1419 = vmatpush1.bf16.msra.mxu0 0
        %1420 = vmatprep.subr.bf16.mxu0 0
        %1421 = vmatpush1.bf16.msra.mxu0 0
        %1422 = vmatprep.subr.bf16.mxu0 0
        %1423 = vmatpush1.bf16.msra.mxu0 0
        %1424 = vmatprep.subr.bf16.mxu0 0
        %1425 = vmatpush1.bf16.msra.mxu0 0
        %1426 = vmatprep.subr.bf16.mxu0 0
        %1427 = vmatpush1.bf16.msra.mxu0 0
        %1428 = vmatprep.subr.bf16.mxu0 0
        %1429 = vmatpush1.bf16.msra.mxu0 0
        %1430 = vmatprep.subr.bf16.mxu0 0
        %1431 = vmatpush1.bf16.msra.mxu0 0
        %1432 = vmatprep.subr.bf16.mxu0 0
        %1433 = vmatpush1.bf16.msra.mxu0 0
        %1434 = vmatprep.subr.bf16.mxu0 0
        %1435 = vmatpush1.bf16.msra.mxu0 0
        %1436 = vmatprep.subr.bf16.mxu0 0
        %1437 = vmatpush1.bf16.msra.mxu0 0
        %1438 = vmatprep.subr.bf16.mxu0 0
        %1439 = vmatpush1.bf16.msra.mxu0 0
        %1440 = vmatprep.subr.bf16.mxu0 0
        %1441 = vmatpush1.bf16.msra.mxu0 0
        %1442 = vmatprep.mubr.bf16.mxu0 0
        %1443 = vmatmul.mubr.bf16.gmra.mrb[0].mxu0 %v1408
        %v1444 = vpop.f32.mrb[0].mxu0
        %v1445 = vadd.f32 %v1399, %v1444
        %v1446 = vpop.f32.mrb[0].mxu0
        %v1447 = vpop.f32.mrb[0].mxu0
        %v1448 = vpop.f32.mrb[0].mxu0
        %1449 = vdwg.mxu0
        %v1450 = vunpack.c.l.bf16 %v527
        %1452 = vset.pattern.permute.xlu0 0
        %1453 = vperm.xlu0 %1452, %v1450
        %v1454 = vpop.permute.xlu0 %1453
        %v1456 = vmul.f32 %v1445, %v1454
        %v1457 = vld [vmem:[#allocation3] sm:$0xf]
        %v1458 = vunpack.c.l.bf16 %v1457
        %v1459 = vadd.f32 %v1456, %v1458
        %v1460 = vmul.f32 %v1459, 0.70710677
        %1461 = vst.msk [vmem:[%s512] sm:$0xff] %vm528, %v1456
        %1462 = vst.msk [vmem:[%s519] sm:$0xff] %vm528, %v1460
        %s1463 = sand.u32 %s306, 1
        %s1464 = scalar_lea.sflag [#allocation6], %s1463
        %s1465 = sand.u32 %s306, 1
        %s1466 = smul.addr %s1465, 8
        %s1467 = scalar_lea.vmem [#allocation12], %s1466
        %s1468 = sand.u32 %s332, 1
        %s1469 = scalar_lea.sflag [#allocation14], %s1468
        %s1470 = sand.u32 %s332, 1
        %s1471 = smul.addr %s1470, 8
        %s1472 = scalar_lea.vmem [#allocation13], %s1471
        // Predicated region
        $region85: #{tpu_custom_call.1} parent=67 // pred_check
          %p1473 = pneg %p316
        $region86: #{tpu_custom_call.1} parent=67 // pred_check_branch
          %1475 = sbr.rel (%p1473) target = $region88
        $region87: #{tpu_custom_call.1} parent=67 // pred_region
          %s1477 = ssub.s32 128, 128
          %1478 = vsyncadd %s1464, %s1477
          %s1479 = smul.addr %s36, 128
          %s1480 = scalar_lea.hbm %s12, %s1479
          %s1482 = sshll.u32 %s1467, 4
          %s1483 = int_to_ptr.vmem [resolvable:$true] %s1482
          %1485 = dma.vmem_to_hbm [thread:$0]  %s1483, 128, %s1480, %s1464
        $region88: #{tpu_custom_call.1} parent=67 // pred_fallthru
          _
        // Predicated region
        $region89: #{tpu_custom_call.1} parent=67 // pred_check
          %p1486 = pneg %p342
        $region90: #{tpu_custom_call.1} parent=67 // pred_check_branch
          %1488 = sbr.rel (%p1486) target = $region92
        $region91: #{tpu_custom_call.1} parent=67 // pred_region
          %s1490 = ssub.s32 128, 128
          %1491 = vsyncadd %s1469, %s1490
          %s1492 = smul.addr %s36, 128
          %s1493 = scalar_lea.hbm %s13, %s1492
          %s1495 = sshll.u32 %s1472, 4
          %s1496 = int_to_ptr.vmem [resolvable:$true] %s1495
          %1498 = dma.vmem_to_hbm [thread:$0]  %s1496, 128, %s1493, %s1469
        $region92: #{tpu_custom_call.1} parent=67 // pred_fallthru
          _
      $region68: #{tpu_custom_call.1} parent=5 // pred_fallthru
        _
      %p1499 = scmp.le.s32.totalorder 2, %s31
      // Predicated region
      $region93: #{tpu_custom_call.1} parent=5 // pred_check
        %p1500 = pneg %p1499
      $region94: #{tpu_custom_call.1} parent=5 // pred_check_branch
        %1502 = sbr.rel (%p1500) target = $region96
      $region95: #{tpu_custom_call.1} parent=5 // pred_region
        %s1503 = ssub.s32 %s31, 2
        // Predicated region
        $region97: #{tpu_custom_call.1} parent=95 // pred_check
          %p1504 = pneg %p322
        $region98: #{tpu_custom_call.1} parent=95 // pred_check_branch
          %1506 = sbr.rel (%p1504) target = $region100
        $region99: #{tpu_custom_call.1} parent=95 // pred_region
          %s1507 = sand.u32 %s307, 1
          %s1508 = scalar_lea.sflag [#allocation6], %s1507
          %s1509 = sand.u32 %s307, 1
          %s1510 = smul.addr %s1509, 8
          %s1511 = scalar_lea.vmem [#allocation12], %s1510
          %1512 = dma.done %s1508, 128
        $region100: #{tpu_custom_call.1} parent=95 // pred_fallthru
          _
        // Predicated region
        $region101: #{tpu_custom_call.1} parent=95 // pred_check
          %p1513 = pneg %p348
        $region102: #{tpu_custom_call.1} parent=95 // pred_check_branch
          %1515 = sbr.rel (%p1513) target = $region104
        $region103: #{tpu_custom_call.1} parent=95 // pred_region
          %s1516 = sand.u32 %s333, 1
          %s1517 = scalar_lea.sflag [#allocation14], %s1516
          %s1518 = sand.u32 %s333, 1
          %s1519 = smul.addr %s1518, 8
          %s1520 = scalar_lea.vmem [#allocation13], %s1519
          %1521 = dma.done %s1517, 128
        $region104: #{tpu_custom_call.1} parent=95 // pred_fallthru
          _
      $region96: #{tpu_custom_call.1} parent=5 // pred_fallthru
        _
    $region6: #{tpu_custom_call.1} parent=1 // loop_footer
      %s35 = sadd.s32 1, %s31
    $region7: #{tpu_custom_call.1} parent=1 // loop_footer_branch
      %30 = sbr.rel target = $region3
    $region8: #{tpu_custom_call.1} parent=1 // loop_exit
      _
    %1522 = vsyncpa [#allocation5], 1
    %s1523 = scalar_lea.sflag [#allocation5], 1
    %1524 = vsyncpa %s1523, 1
    %1525 = vsyncpa [#allocation8], 1
    %1526 = vsyncpa [#allocation11], 1
    %1527 = vsyncpa [#allocation6], 1
    %s1528 = scalar_lea.sflag [#allocation6], 1
    %1529 = vsyncpa %s1528, 1
    %1530 = vsyncpa [#allocation14], 1
    %s1531 = scalar_lea.sflag [#allocation14], 1
    %1532 = vsyncpa %s1531, 1

</llo_original>
